<compile_context>
chip_gen: v7x
topology: tpu7x:2x2x1
jax: 0.10.0
libtpu: 0.0.40
codegen_flags: <defaults>
</compile_context>

<pallas_src>
import functools

import numpy as np
import jax
import jax.numpy as jnp
from jax import lax
from jax.experimental import pallas as pl
from jax.experimental.pallas import tpu as pltpu


# ------------------------------ fused kernel --------------------------------

def tcpcn_fused_kernel(x_ref, selp_ref, selt_ref,
                       w0_ref, w1_ref, w2_ref, w3_ref, w4_ref, pcb_ref,
                       tc1_ref, tc2_ref, tc3_ref, wfc_ref,
                       out_ref, *, F):
    # ---- stage 1: SharedMLP (pointwise conv + bias + ReLU), M = B*P*F rows ----
    h = x_ref[...]                                         # (B*P*F, 5)
    for i, w_ref in enumerate((w0_ref, w1_ref, w2_ref, w3_ref, w4_ref)):
        c_out = w_ref.shape[1]
        h = jnp.dot(h, w_ref[...], preferred_element_type=jnp.float32)
        h = jnp.maximum(h + pcb_ref[i:i + 1, :c_out], 0.0)

    # ---- mean over points per (batch, frame): constant selection matmul ----
    h = jnp.dot(selp_ref[...], h, preferred_element_type=jnp.float32)  # (B*F, 192)

    # ---- stage 2: temporal convs on flattened (B*F, C) rows ----
    R = h.shape[0]
    row_f = lax.broadcasted_iota(jnp.int32, (R, 1), 0) % F  # frame index per row

    def shift_rows(x, s):
        # x[t - s] within each length-F segment; rows with no valid source get 0
        # (left causal pad for s > 0, right "same" pad for s < 0).
        if s == 0:
            return x
        rolled = pltpu.roll(x, shift=s % R, axis=0)
        if s > 0:
            return jnp.where(row_f >= s, rolled, 0.0)
        return jnp.where(row_f < F + s, rolled, 0.0)

    def tap_conv(x, w_ref, shifts):
        # K-concatenated form: ONE MXU matmul per conv layer instead of 3.
        xcat = jnp.concatenate([shift_rows(x, s) for s in shifts], axis=1)
        return jnp.dot(xcat, w_ref[...], preferred_element_type=jnp.float32)

    h = tap_conv(h, tc1_ref, (2, 1, 0))    # CausalDilConv(192->32),  dilation=1
    h = tap_conv(h, tc2_ref, (4, 2, 0))    # CausalDilConv(32->64),   dilation=2
    h = tap_conv(h, tc3_ref, (4, 2, 0))    # CausalDilConv(64->128),  dilation=2
    h = tap_conv(h, wfc_ref, (1, 0, -1))   # conv_fc: k=3, padding=1 ("same")

    # ---- mean over time per batch: constant selection matmul ----
    out_ref[...] = jnp.dot(selt_ref[...], h, preferred_element_type=jnp.float32)


# --------------------------------- wrapper ----------------------------------

def init_params(key, num_classes, pc_layers=(96, 96, 96, 192, 192),
                tc_layers=(32, 64, 128)):
    keys = jax.random.split(key, 16)
    ki = iter(keys)
    params = {"pc_w": [], "pc_b": []}
    c_in = 5
    for c_out in pc_layers:
        params["pc_w"].append(0.1 * jax.random.normal(next(ki), (c_in, c_out), jnp.float32))
        params["pc_b"].append(0.1 * jax.random.normal(next(ki), (1, c_out), jnp.float32))
        c_in = c_out
    params["tc_w"] = []
    c_in = pc_layers[-1]
    for c_out in tc_layers:
        # stored as (K, C_in, C_out)  (PyTorch Conv1d weight is (C_out, C_in, K))
        params["tc_w"].append(0.1 * jax.random.normal(next(ki), (3, c_in, c_out), jnp.float32))
        c_in = c_out
    params["fc_w"] = 0.1 * jax.random.normal(next(ki), (3, tc_layers[-1], num_classes),
                                             jnp.float32)
    return params


def tcpcn_forward(x, params, num_classes):
    B, C, P, F = x.shape
    assert C == 5
    Cpc = params["pc_w"][-1].shape[1]

    # channels-last slab; row index q = b*P*F + p*F + f (matches torch reshape order)
    x_flat = (x.reshape(B, C, P * F).transpose(0, 2, 1)
               .reshape(B * P * F, C).astype(jnp.float32))

    # constant selection matrices (hoisted to host, passed as kernel inputs)
    q = np.arange(B * P * F)
    r = np.arange(B * F)
    sel_p = jnp.asarray(
        ((r[:, None] // F == q[None, :] // (P * F))
         & (r[:, None] % F == q[None, :] % F)).astype(np.float32) / P)       # (B*F, B*P*F)
    sel_t = jnp.asarray(
        (np.arange(B)[:, None] == r[None, :] // F).astype(np.float32) / F)   # (B, B*F)

    # pack the 5 SharedMLP biases into one (8, Cpc) slab (fewer tiny DMAs)
    pc_bias = jnp.zeros((8, Cpc), jnp.float32)
    for i, b in enumerate(params["pc_b"]):
        pc_bias = pc_bias.at[i, :b.shape[1]].set(b[0])

    # temporal conv weights in K-concatenated (3*C_in, C_out) form
    tc_ws = [w.reshape(3 * w.shape[1], w.shape[2]) for w in params["tc_w"]]
    fc_w = params["fc_w"].reshape(3 * params["fc_w"].shape[1], num_classes)

    # single fused call, no grid: every operand is a whole-array VMEM block
    # (< 1 MiB total), so one launch, one set of weight DMAs, no HBM round trip.
    out = pl.pallas_call(
        functools.partial(tcpcn_fused_kernel, F=F),
        out_shape=jax.ShapeDtypeStruct((B, num_classes), jnp.float32),
    )(x_flat, sel_p, sel_t, *params["pc_w"], pc_bias, *tc_ws, fc_w)
    return out


# -------------------------- pure-JAX reference (checking) -------------------

def tcpcn_reference(x, params):
    B, C, P, F = x.shape
    h = x.reshape(B, C, P * F).transpose(0, 2, 1).astype(jnp.float32)
    for w, bvec in zip(params["pc_w"], params["pc_b"]):
        h = jnp.maximum(h @ w + bvec, 0.0)
    h = h.reshape(B, P, F, -1).mean(axis=1)  # (B, F, Cpc)
    for w, d in zip(params["tc_w"], (1, 2, 2)):
        pad = d * 2
        xp = jnp.pad(h, ((0, 0), (pad, 0), (0, 0)))
        h = sum(xp[:, k * d:k * d + F] @ w[k] for k in range(3))
    xp = jnp.pad(h, ((0, 0), (1, 1), (0, 0)))
    y = sum(xp[:, k:k + F] @ params["fc_w"][k] for k in range(3))
    return y.mean(axis=1)


if __name__ == "__main__":
    key = jax.random.PRNGKey(0)
    k_param, k_x = jax.random.split(key)

    B, C, P, F = 2, 5, 16, 8      # batch, channel, pts_num, frame_num
    num_classes = 10

    params = init_params(k_param, num_classes)
    x = jax.random.normal(k_x, (B, C, P, F), jnp.float32)

    out = tcpcn_forward(x, params, num_classes)
    out = jax.block_until_ready(out)

    ref = jax.block_until_ready(tcpcn_reference(x, params))
    assert out.shape == (B, num_classes)
    np.testing.assert_allclose(np.asarray(out), np.asarray(ref), rtol=1e-3, atol=1e-4)

    print("KERNEL_OK")
</pallas_src>

<mosaic_0001>
module attributes {stable_mosaic.version = 11 : i64} {
  func.func @tcpcn_fused_kernel(%arg0: memref<256x5xf32, #tpu.memory_space<vmem>>, %arg1: memref<16x256xf32, #tpu.memory_space<vmem>>, %arg2: memref<2x16xf32, #tpu.memory_space<vmem>>, %arg3: memref<5x96xf32, #tpu.memory_space<vmem>>, %arg4: memref<96x96xf32, #tpu.memory_space<vmem>>, %arg5: memref<96x96xf32, #tpu.memory_space<vmem>>, %arg6: memref<96x192xf32, #tpu.memory_space<vmem>>, %arg7: memref<192x192xf32, #tpu.memory_space<vmem>>, %arg8: memref<8x192xf32, #tpu.memory_space<vmem>>, %arg9: memref<576x32xf32, #tpu.memory_space<vmem>>, %arg10: memref<96x64xf32, #tpu.memory_space<vmem>>, %arg11: memref<192x128xf32, #tpu.memory_space<vmem>>, %arg12: memref<384x10xf32, #tpu.memory_space<vmem>>, %arg13: memref<2x10xf32, #tpu.memory_space<vmem>>) attributes {dimension_semantics = [], scalar_prefetch = 0 : i64, scratch_operands = 0 : i64, tpu.core_type = #tpu.core_type<tc>} {
    %c0 = arith.constant 0 : index
    %c0_0 = arith.constant 0 : index
    %0 = vector.load %arg0[%c0, %c0_0] : memref<256x5xf32, #tpu.memory_space<vmem>>, vector<256x5xf32>
    %c0_1 = arith.constant 0 : index
    %c0_2 = arith.constant 0 : index
    %1 = vector.load %arg3[%c0_1, %c0_2] : memref<5x96xf32, #tpu.memory_space<vmem>>, vector<5x96xf32>
    %cst = arith.constant dense<0.000000e+00> : vector<256x96xf32>
    %2 = tpu.matmul %0, %1, %cst {dimension_numbers = #tpu.dot_dimension_numbers<[1], [0], [0], [1], [0, 0, 1, 1], [], []>} : vector<256x5xf32>, vector<5x96xf32>, vector<256x96xf32> -> vector<256x96xf32>
    %c0_3 = arith.constant 0 : index
    %c0_4 = arith.constant 0 : index
    %3 = vector.load %arg8[%c0_3, %c0_4] : memref<8x192xf32, #tpu.memory_space<vmem>>, vector<1x96xf32>
    %4 = vector.broadcast %3 : vector<1x96xf32> to vector<256x96xf32>
    %5 = arith.addf %2, %4 : vector<256x96xf32>
    %cst_5 = arith.constant 0.000000e+00 : f32
    %6 = vector.broadcast %cst_5 : f32 to vector<256x96xf32>
    %7 = arith.maximumf %5, %6 : vector<256x96xf32>
    %c0_6 = arith.constant 0 : index
    %c0_7 = arith.constant 0 : index
    %8 = vector.load %arg4[%c0_6, %c0_7] : memref<96x96xf32, #tpu.memory_space<vmem>>, vector<96x96xf32>
    %cst_8 = arith.constant dense<0.000000e+00> : vector<256x96xf32>
    %9 = tpu.matmul %7, %8, %cst_8 {dimension_numbers = #tpu.dot_dimension_numbers<[1], [0], [0], [1], [0, 0, 1, 1], [], []>} : vector<256x96xf32>, vector<96x96xf32>, vector<256x96xf32> -> vector<256x96xf32>
    %c1 = arith.constant 1 : index
    %c0_9 = arith.constant 0 : index
    %10 = vector.load %arg8[%c1, %c0_9] : memref<8x192xf32, #tpu.memory_space<vmem>>, vector<1x96xf32>
    %11 = vector.broadcast %10 : vector<1x96xf32> to vector<256x96xf32>
    %12 = arith.addf %9, %11 : vector<256x96xf32>
    %cst_10 = arith.constant 0.000000e+00 : f32
    %13 = vector.broadcast %cst_10 : f32 to vector<256x96xf32>
    %14 = arith.maximumf %12, %13 : vector<256x96xf32>
    %c0_11 = arith.constant 0 : index
    %c0_12 = arith.constant 0 : index
    %15 = vector.load %arg5[%c0_11, %c0_12] : memref<96x96xf32, #tpu.memory_space<vmem>>, vector<96x96xf32>
    %cst_13 = arith.constant dense<0.000000e+00> : vector<256x96xf32>
    %16 = tpu.matmul %14, %15, %cst_13 {dimension_numbers = #tpu.dot_dimension_numbers<[1], [0], [0], [1], [0, 0, 1, 1], [], []>} : vector<256x96xf32>, vector<96x96xf32>, vector<256x96xf32> -> vector<256x96xf32>
    %c2 = arith.constant 2 : index
    %c0_14 = arith.constant 0 : index
    %17 = vector.load %arg8[%c2, %c0_14] : memref<8x192xf32, #tpu.memory_space<vmem>>, vector<1x96xf32>
    %18 = vector.broadcast %17 : vector<1x96xf32> to vector<256x96xf32>
    %19 = arith.addf %16, %18 : vector<256x96xf32>
    %cst_15 = arith.constant 0.000000e+00 : f32
    %20 = vector.broadcast %cst_15 : f32 to vector<256x96xf32>
    %21 = arith.maximumf %19, %20 : vector<256x96xf32>
    %c0_16 = arith.constant 0 : index
    %c0_17 = arith.constant 0 : index
    %22 = vector.load %arg6[%c0_16, %c0_17] : memref<96x192xf32, #tpu.memory_space<vmem>>, vector<96x192xf32>
    %cst_18 = arith.constant dense<0.000000e+00> : vector<256x192xf32>
    %23 = tpu.matmul %21, %22, %cst_18 {dimension_numbers = #tpu.dot_dimension_numbers<[1], [0], [0], [1], [0, 0, 1, 1], [], []>} : vector<256x96xf32>, vector<96x192xf32>, vector<256x192xf32> -> vector<256x192xf32>
    %c3 = arith.constant 3 : index
    %c0_19 = arith.constant 0 : index
    %24 = vector.load %arg8[%c3, %c0_19] : memref<8x192xf32, #tpu.memory_space<vmem>>, vector<1x192xf32>
    %25 = vector.broadcast %24 : vector<1x192xf32> to vector<256x192xf32>
    %26 = arith.addf %23, %25 : vector<256x192xf32>
    %cst_20 = arith.constant 0.000000e+00 : f32
    %27 = vector.broadcast %cst_20 : f32 to vector<256x192xf32>
    %28 = arith.maximumf %26, %27 : vector<256x192xf32>
    %c0_21 = arith.constant 0 : index
    %c0_22 = arith.constant 0 : index
    %29 = vector.load %arg7[%c0_21, %c0_22] : memref<192x192xf32, #tpu.memory_space<vmem>>, vector<192x192xf32>
    %cst_23 = arith.constant dense<0.000000e+00> : vector<256x192xf32>
    %30 = tpu.matmul %28, %29, %cst_23 {dimension_numbers = #tpu.dot_dimension_numbers<[1], [0], [0], [1], [0, 0, 1, 1], [], []>} : vector<256x192xf32>, vector<192x192xf32>, vector<256x192xf32> -> vector<256x192xf32>
    %c4 = arith.constant 4 : index
    %c0_24 = arith.constant 0 : index
    %31 = vector.load %arg8[%c4, %c0_24] : memref<8x192xf32, #tpu.memory_space<vmem>>, vector<1x192xf32>
    %32 = vector.broadcast %31 : vector<1x192xf32> to vector<256x192xf32>
    %33 = arith.addf %30, %32 : vector<256x192xf32>
    %cst_25 = arith.constant 0.000000e+00 : f32
    %34 = vector.broadcast %cst_25 : f32 to vector<256x192xf32>
    %35 = arith.maximumf %33, %34 : vector<256x192xf32>
    %c0_26 = arith.constant 0 : index
    %c0_27 = arith.constant 0 : index
    %36 = vector.load %arg1[%c0_26, %c0_27] : memref<16x256xf32, #tpu.memory_space<vmem>>, vector<16x256xf32>
    %cst_28 = arith.constant dense<0.000000e+00> : vector<16x192xf32>
    %37 = tpu.matmul %36, %35, %cst_28 {dimension_numbers = #tpu.dot_dimension_numbers<[1], [0], [0], [1], [0, 0, 1, 1], [], []>} : vector<16x256xf32>, vector<256x192xf32>, vector<16x192xf32> -> vector<16x192xf32>
    %38 = tpu.iota {dimensions = array<i32: 0>} : vector<16x1xi32>
    %c8_i32 = arith.constant 8 : i32
    %c0_i32 = arith.constant 0 : i32
    %39 = arith.cmpi eq, %c8_i32, %c0_i32 : i32
    %c1_i32 = arith.constant 1 : i32
    %40 = arith.select %39, %c1_i32, %c8_i32 : i32
    %41 = vector.broadcast %40 : i32 to vector<16x1xi32>
    %42 = arith.remsi %38, %41 : vector<16x1xi32>
    %c0_i32_29 = arith.constant 0 : i32
    %43 = vector.broadcast %c0_i32_29 : i32 to vector<16x1xi32>
    %44 = arith.cmpi ne, %42, %43 : vector<16x1xi32>
    %c0_i32_30 = arith.constant 0 : i32
    %45 = vector.broadcast %c0_i32_30 : i32 to vector<16x1xi32>
    %46 = arith.cmpi slt, %42, %45 : vector<16x1xi32>
    %c0_i32_31 = arith.constant 0 : i32
    %47 = arith.cmpi slt, %40, %c0_i32_31 : i32
    %48 = vector.broadcast %47 : i1 to vector<16x1xi1>
    %49 = vector.broadcast %48 : vector<16x1xi1> to vector<16x1xi1>
    %50 = arith.xori %46, %49 : vector<16x1xi1>
    %51 = arith.andi %50, %44 : vector<16x1xi1>
    %52 = vector.broadcast %40 : i32 to vector<16x1xi32>
    %53 = arith.addi %42, %52 : vector<16x1xi32>
    %54 = arith.select %51, %53, %42 : vector<16x1xi1>, vector<16x1xi32>
    %c2_i32 = arith.constant 2 : i32
    %55 = tpu.dynamic_rotate %37 by %c2_i32 dim 0 : vector<16x192xf32>, i32 -> vector<16x192xf32>
    %c2_i32_32 = arith.constant 2 : i32
    %56 = vector.broadcast %c2_i32_32 : i32 to vector<16x1xi32>
    %57 = arith.cmpi sge, %54, %56 : vector<16x1xi32>
    %cst_33 = arith.constant 0.000000e+00 : f32
    %58 = vector.shape_cast %57 : vector<16x1xi1> to vector<16x1xi1>
    %59 = vector.broadcast %58 : vector<16x1xi1> to vector<16x192xi1>
    %60 = vector.broadcast %cst_33 : f32 to vector<16x192xf32>
    %61 = arith.select %59, %55, %60 : vector<16x192xi1>, vector<16x192xf32>
    %c1_i32_34 = arith.constant 1 : i32
    %62 = tpu.dynamic_rotate %37 by %c1_i32_34 dim 0 : vector<16x192xf32>, i32 -> vector<16x192xf32>
    %c1_i32_35 = arith.constant 1 : i32
    %63 = vector.broadcast %c1_i32_35 : i32 to vector<16x1xi32>
    %64 = arith.cmpi sge, %54, %63 : vector<16x1xi32>
    %cst_36 = arith.constant 0.000000e+00 : f32
    %65 = vector.shape_cast %64 : vector<16x1xi1> to vector<16x1xi1>
    %66 = vector.broadcast %65 : vector<16x1xi1> to vector<16x192xi1>
    %67 = vector.broadcast %cst_36 : f32 to vector<16x192xf32>
    %68 = arith.select %66, %62, %67 : vector<16x192xi1>, vector<16x192xf32>
    %69 = tpu.concatenate %61, %68, %37 in 1 : vector<16x192xf32>, vector<16x192xf32>, vector<16x192xf32> -> vector<16x576xf32>
    %c0_37 = arith.constant 0 : index
    %c0_38 = arith.constant 0 : index
    %70 = vector.load %arg9[%c0_37, %c0_38] : memref<576x32xf32, #tpu.memory_space<vmem>>, vector<576x32xf32>
    %cst_39 = arith.constant dense<0.000000e+00> : vector<16x32xf32>
    %71 = tpu.matmul %69, %70, %cst_39 {dimension_numbers = #tpu.dot_dimension_numbers<[1], [0], [0], [1], [0, 0, 1, 1], [], []>} : vector<16x576xf32>, vector<576x32xf32>, vector<16x32xf32> -> vector<16x32xf32>
    %c4_i32 = arith.constant 4 : i32
    %72 = tpu.dynamic_rotate %71 by %c4_i32 dim 0 : vector<16x32xf32>, i32 -> vector<16x32xf32>
    %c4_i32_40 = arith.constant 4 : i32
    %73 = vector.broadcast %c4_i32_40 : i32 to vector<16x1xi32>
    %74 = arith.cmpi sge, %54, %73 : vector<16x1xi32>
    %cst_41 = arith.constant 0.000000e+00 : f32
    %75 = vector.shape_cast %74 : vector<16x1xi1> to vector<16x1xi1>
    %76 = vector.broadcast %75 : vector<16x1xi1> to vector<16x32xi1>
    %77 = vector.broadcast %cst_41 : f32 to vector<16x32xf32>
    %78 = arith.select %76, %72, %77 : vector<16x32xi1>, vector<16x32xf32>
    %c2_i32_42 = arith.constant 2 : i32
    %79 = tpu.dynamic_rotate %71 by %c2_i32_42 dim 0 : vector<16x32xf32>, i32 -> vector<16x32xf32>
    %c2_i32_43 = arith.constant 2 : i32
    %80 = vector.broadcast %c2_i32_43 : i32 to vector<16x1xi32>
    %81 = arith.cmpi sge, %54, %80 : vector<16x1xi32>
    %cst_44 = arith.constant 0.000000e+00 : f32
    %82 = vector.shape_cast %81 : vector<16x1xi1> to vector<16x1xi1>
    %83 = vector.broadcast %82 : vector<16x1xi1> to vector<16x32xi1>
    %84 = vector.broadcast %cst_44 : f32 to vector<16x32xf32>
    %85 = arith.select %83, %79, %84 : vector<16x32xi1>, vector<16x32xf32>
    %86 = tpu.concatenate %78, %85, %71 in 1 : vector<16x32xf32>, vector<16x32xf32>, vector<16x32xf32> -> vector<16x96xf32>
    %c0_45 = arith.constant 0 : index
    %c0_46 = arith.constant 0 : index
    %87 = vector.load %arg10[%c0_45, %c0_46] : memref<96x64xf32, #tpu.memory_space<vmem>>, vector<96x64xf32>
    %cst_47 = arith.constant dense<0.000000e+00> : vector<16x64xf32>
    %88 = tpu.matmul %86, %87, %cst_47 {dimension_numbers = #tpu.dot_dimension_numbers<[1], [0], [0], [1], [0, 0, 1, 1], [], []>} : vector<16x96xf32>, vector<96x64xf32>, vector<16x64xf32> -> vector<16x64xf32>
    %c4_i32_48 = arith.constant 4 : i32
    %89 = tpu.dynamic_rotate %88 by %c4_i32_48 dim 0 : vector<16x64xf32>, i32 -> vector<16x64xf32>
    %c4_i32_49 = arith.constant 4 : i32
    %90 = vector.broadcast %c4_i32_49 : i32 to vector<16x1xi32>
    %91 = arith.cmpi sge, %54, %90 : vector<16x1xi32>
    %cst_50 = arith.constant 0.000000e+00 : f32
    %92 = vector.shape_cast %91 : vector<16x1xi1> to vector<16x1xi1>
    %93 = vector.broadcast %92 : vector<16x1xi1> to vector<16x64xi1>
    %94 = vector.broadcast %cst_50 : f32 to vector<16x64xf32>
    %95 = arith.select %93, %89, %94 : vector<16x64xi1>, vector<16x64xf32>
    %c2_i32_51 = arith.constant 2 : i32
    %96 = tpu.dynamic_rotate %88 by %c2_i32_51 dim 0 : vector<16x64xf32>, i32 -> vector<16x64xf32>
    %c2_i32_52 = arith.constant 2 : i32
    %97 = vector.broadcast %c2_i32_52 : i32 to vector<16x1xi32>
    %98 = arith.cmpi sge, %54, %97 : vector<16x1xi32>
    %cst_53 = arith.constant 0.000000e+00 : f32
    %99 = vector.shape_cast %98 : vector<16x1xi1> to vector<16x1xi1>
    %100 = vector.broadcast %99 : vector<16x1xi1> to vector<16x64xi1>
    %101 = vector.broadcast %cst_53 : f32 to vector<16x64xf32>
    %102 = arith.select %100, %96, %101 : vector<16x64xi1>, vector<16x64xf32>
    %103 = tpu.concatenate %95, %102, %88 in 1 : vector<16x64xf32>, vector<16x64xf32>, vector<16x64xf32> -> vector<16x192xf32>
    %c0_54 = arith.constant 0 : index
    %c0_55 = arith.constant 0 : index
    %104 = vector.load %arg11[%c0_54, %c0_55] : memref<192x128xf32, #tpu.memory_space<vmem>>, vector<192x128xf32>
    %cst_56 = arith.constant dense<0.000000e+00> : vector<16x128xf32>
    %105 = tpu.matmul %103, %104, %cst_56 {dimension_numbers = #tpu.dot_dimension_numbers<[1], [0], [0], [1], [0, 0, 1, 1], [], []>} : vector<16x192xf32>, vector<192x128xf32>, vector<16x128xf32> -> vector<16x128xf32>
    %c1_i32_57 = arith.constant 1 : i32
    %106 = tpu.dynamic_rotate %105 by %c1_i32_57 dim 0 : vector<16x128xf32>, i32 -> vector<16x128xf32>
    %c1_i32_58 = arith.constant 1 : i32
    %107 = vector.broadcast %c1_i32_58 : i32 to vector<16x1xi32>
    %108 = arith.cmpi sge, %54, %107 : vector<16x1xi32>
    %cst_59 = arith.constant 0.000000e+00 : f32
    %109 = vector.shape_cast %108 : vector<16x1xi1> to vector<16x1xi1>
    %110 = vector.broadcast %109 : vector<16x1xi1> to vector<16x128xi1>
    %111 = vector.broadcast %cst_59 : f32 to vector<16x128xf32>
    %112 = arith.select %110, %106, %111 : vector<16x128xi1>, vector<16x128xf32>
    %c15_i32 = arith.constant 15 : i32
    %113 = tpu.dynamic_rotate %105 by %c15_i32 dim 0 : vector<16x128xf32>, i32 -> vector<16x128xf32>
    %c7_i32 = arith.constant 7 : i32
    %114 = vector.broadcast %c7_i32 : i32 to vector<16x1xi32>
    %115 = arith.cmpi slt, %54, %114 : vector<16x1xi32>
    %cst_60 = arith.constant 0.000000e+00 : f32
    %116 = vector.shape_cast %115 : vector<16x1xi1> to vector<16x1xi1>
    %117 = vector.broadcast %116 : vector<16x1xi1> to vector<16x128xi1>
    %118 = vector.broadcast %cst_60 : f32 to vector<16x128xf32>
    %119 = arith.select %117, %113, %118 : vector<16x128xi1>, vector<16x128xf32>
    %120 = tpu.concatenate %112, %105, %119 in 1 : vector<16x128xf32>, vector<16x128xf32>, vector<16x128xf32> -> vector<16x384xf32>
    %c0_61 = arith.constant 0 : index
    %c0_62 = arith.constant 0 : index
    %121 = vector.load %arg12[%c0_61, %c0_62] : memref<384x10xf32, #tpu.memory_space<vmem>>, vector<384x10xf32>
    %cst_63 = arith.constant dense<0.000000e+00> : vector<16x10xf32>
    %122 = tpu.matmul %120, %121, %cst_63 {dimension_numbers = #tpu.dot_dimension_numbers<[1], [0], [0], [1], [0, 0, 1, 1], [], []>} : vector<16x384xf32>, vector<384x10xf32>, vector<16x10xf32> -> vector<16x10xf32>
    %c0_64 = arith.constant 0 : index
    %c0_65 = arith.constant 0 : index
    %123 = vector.load %arg2[%c0_64, %c0_65] : memref<2x16xf32, #tpu.memory_space<vmem>>, vector<2x16xf32>
    %cst_66 = arith.constant dense<0.000000e+00> : vector<2x10xf32>
    %124 = tpu.matmul %123, %122, %cst_66 {dimension_numbers = #tpu.dot_dimension_numbers<[1], [0], [0], [1], [0, 0, 1, 1], [], []>} : vector<2x16xf32>, vector<16x10xf32>, vector<2x10xf32> -> vector<2x10xf32>
    %c0_67 = arith.constant 0 : index
    %c0_68 = arith.constant 0 : index
    %125 = vector.load %arg13[%c0_67, %c0_68] : memref<2x10xf32, #tpu.memory_space<vmem>>, vector<2x10xf32>
    tpu.vector_store %arg13[%c0_67, %c0_68], %124 {strides = array<i32>} : memref<2x10xf32, #tpu.memory_space<vmem>>, vector<2x10xf32>,
    return
  }
}

</mosaic_0001>

<llo_original>
// kernel: tpu_custom_call.1
$region0: #{tpu_custom_call.1}
  #allocation0 [shape = 'u32[]', space=smem, size = 0x4, offset = 0x4, fixed_abs, tag = 'smem constant byte address 0x4 - core index']
  #allocation1 [shape = 'u32[144,128]{1,0:T(1,128)}', space=vmem, size = 0x12000, scoped, tag = 'internal scratch']
  %s0 = inlined_call_operand.vmem [shape: f32[256,5], index: 0, kind: input, shape index: {}]
  %s1 = inlined_call_operand.vmem [shape: f32[16,256], index: 1, kind: input, shape index: {}]
  %s2 = inlined_call_operand.vmem [shape: f32[2,16], index: 2, kind: input, shape index: {}]
  %s3 = inlined_call_operand.vmem [shape: f32[5,96], index: 3, kind: input, shape index: {}]
  %s4 = inlined_call_operand.vmem [shape: f32[96,96], index: 4, kind: input, shape index: {}]
  %s5 = inlined_call_operand.vmem [shape: f32[96,96], index: 5, kind: input, shape index: {}]
  %s6 = inlined_call_operand.vmem [shape: f32[96,192], index: 6, kind: input, shape index: {}]
  %s7 = inlined_call_operand.vmem [shape: f32[192,192], index: 7, kind: input, shape index: {}]
  %s8 = inlined_call_operand.vmem [shape: f32[8,192], index: 8, kind: input, shape index: {}]
  %s9 = inlined_call_operand.vmem [shape: f32[576,32], index: 9, kind: input, shape index: {}]
  %s10 = inlined_call_operand.vmem [shape: f32[96,64], index: 10, kind: input, shape index: {}]
  %s11 = inlined_call_operand.vmem [shape: f32[192,128], index: 11, kind: input, shape index: {}]
  %s12 = inlined_call_operand.vmem [shape: f32[384,10], index: 12, kind: input, shape index: {}]
  %s13 = inlined_call_operand.hbm [shape: f32[2,10], index: 13, kind: output, shape index: {}]
  %s14 = sld [smem:[#allocation0]]
  $region62: #{tpu_custom_call.1} parent=0
    _
  %s16 = ssub.s32 1, %s14
  %s17 = scalar_select 0, %s16, %s14
  $region1: #{tpu_custom_call.1} parent=0
    #allocation2 [shape = 'u8[1024]{0}', space=vmem, size = 0x400, scoped, tag = 'output window, operand 0, single buffered']
    #allocation3 [shape = 's32[1]{0}', space=sflag, size = 0x4, scoped, tag = 'scoped memory for tpu_custom_call.1']
    %18 = vsyncpa [#allocation3], 0
    // Predicated region
    $region2: #{tpu_custom_call.1} parent=1 // pred_check
      _
    $region3: #{tpu_custom_call.1} parent=1 // pred_check_branch
      %20 = sbr.rel (0) target = $region5
    $region4: #{tpu_custom_call.1} parent=1 // pred_region
      _
    $region5: #{tpu_custom_call.1} parent=1 // pred_fallthru
      _
    // Predicated region
    $region6: #{tpu_custom_call.1} parent=1 // pred_check
      _
    $region7: #{tpu_custom_call.1} parent=1 // pred_check_branch
      %22 = sbr.rel (0) target = $region9
    $region8: #{tpu_custom_call.1} parent=1 // pred_region
      _
    $region9: #{tpu_custom_call.1} parent=1 // pred_fallthru
      _
    // Predicated region
    $region10: #{tpu_custom_call.1} parent=1 // pred_check
      _
    $region11: #{tpu_custom_call.1} parent=1 // pred_check_branch
      %24 = sbr.rel (0) target = $region13
    $region12: #{tpu_custom_call.1} parent=1 // pred_region
      _
    $region13: #{tpu_custom_call.1} parent=1 // pred_fallthru
      _
    // Predicated region
    $region14: #{tpu_custom_call.1} parent=1 // pred_check
      _
    $region15: #{tpu_custom_call.1} parent=1 // pred_check_branch
      %26 = sbr.rel (0) target = $region17
    $region16: #{tpu_custom_call.1} parent=1 // pred_region
      _
    $region17: #{tpu_custom_call.1} parent=1 // pred_fallthru
      _
    // Predicated region
    $region18: #{tpu_custom_call.1} parent=1 // pred_check
      _
    $region19: #{tpu_custom_call.1} parent=1 // pred_check_branch
      %28 = sbr.rel (0) target = $region21
    $region20: #{tpu_custom_call.1} parent=1 // pred_region
      _
    $region21: #{tpu_custom_call.1} parent=1 // pred_fallthru
      _
    // Predicated region
    $region22: #{tpu_custom_call.1} parent=1 // pred_check
      _
    $region23: #{tpu_custom_call.1} parent=1 // pred_check_branch
      %30 = sbr.rel (0) target = $region25
    $region24: #{tpu_custom_call.1} parent=1 // pred_region
      _
    $region25: #{tpu_custom_call.1} parent=1 // pred_fallthru
      _
    // Predicated region
    $region26: #{tpu_custom_call.1} parent=1 // pred_check
      _
    $region27: #{tpu_custom_call.1} parent=1 // pred_check_branch
      %32 = sbr.rel (0) target = $region29
    $region28: #{tpu_custom_call.1} parent=1 // pred_region
      _
    $region29: #{tpu_custom_call.1} parent=1 // pred_fallthru
      _
    // Predicated region
    $region30: #{tpu_custom_call.1} parent=1 // pred_check
      _
    $region31: #{tpu_custom_call.1} parent=1 // pred_check_branch
      %34 = sbr.rel (0) target = $region33
    $region32: #{tpu_custom_call.1} parent=1 // pred_region
      _
    $region33: #{tpu_custom_call.1} parent=1 // pred_fallthru
      _
    // Predicated region
    $region34: #{tpu_custom_call.1} parent=1 // pred_check
      _
    $region35: #{tpu_custom_call.1} parent=1 // pred_check_branch
      %36 = sbr.rel (0) target = $region37
    $region36: #{tpu_custom_call.1} parent=1 // pred_region
      _
    $region37: #{tpu_custom_call.1} parent=1 // pred_fallthru
      _
    // Predicated region
    $region38: #{tpu_custom_call.1} parent=1 // pred_check
      _
    $region39: #{tpu_custom_call.1} parent=1 // pred_check_branch
      %38 = sbr.rel (0) target = $region41
    $region40: #{tpu_custom_call.1} parent=1 // pred_region
      _
    $region41: #{tpu_custom_call.1} parent=1 // pred_fallthru
      _
    // Predicated region
    $region42: #{tpu_custom_call.1} parent=1 // pred_check
      _
    $region43: #{tpu_custom_call.1} parent=1 // pred_check_branch
      %40 = sbr.rel (0) target = $region45
    $region44: #{tpu_custom_call.1} parent=1 // pred_region
      _
    $region45: #{tpu_custom_call.1} parent=1 // pred_fallthru
      _
    // Predicated region
    $region46: #{tpu_custom_call.1} parent=1 // pred_check
      _
    $region47: #{tpu_custom_call.1} parent=1 // pred_check_branch
      %42 = sbr.rel (0) target = $region49
    $region48: #{tpu_custom_call.1} parent=1 // pred_region
      _
    $region49: #{tpu_custom_call.1} parent=1 // pred_fallthru
      _
    // Predicated region
    $region50: #{tpu_custom_call.1} parent=1 // pred_check
      _
    $region51: #{tpu_custom_call.1} parent=1 // pred_check_branch
      %44 = sbr.rel (0) target = $region53
    $region52: #{tpu_custom_call.1} parent=1 // pred_region
      _
    $region53: #{tpu_custom_call.1} parent=1 // pred_fallthru
      _
    %v45 = vld [vmem:[%s0] sm:$0xff]
    %v46 = vld [vmem:[%s0 + $0x8] sm:$0xff]
    %v47 = vld [vmem:[%s0 + $0x10] sm:$0xff]
    %v48 = vld [vmem:[%s0 + $0x18] sm:$0xff]
    %v49 = vld [vmem:[%s0 + $0x20] sm:$0xff]
    %v50 = vld [vmem:[%s0 + $0x28] sm:$0xff]
    %v51 = vld [vmem:[%s0 + $0x30] sm:$0xff]
    %v52 = vld [vmem:[%s0 + $0x38] sm:$0xff]
    %v53 = vld [vmem:[%s0 + $0x40] sm:$0xff]
    %v54 = vld [vmem:[%s0 + $0x48] sm:$0xff]
    %v55 = vld [vmem:[%s0 + $0x50] sm:$0xff]
    %v56 = vld [vmem:[%s0 + $0x58] sm:$0xff]
    %v57 = vld [vmem:[%s0 + $0x60] sm:$0xff]
    %v58 = vld [vmem:[%s0 + $0x68] sm:$0xff]
    %v59 = vld [vmem:[%s0 + $0x70] sm:$0xff]
    %v60 = vld [vmem:[%s0 + $0x78] sm:$0xff]
    %v61 = vld [vmem:[%s0 + $0x80] sm:$0xff]
    %v62 = vld [vmem:[%s0 + $0x88] sm:$0xff]
    %v63 = vld [vmem:[%s0 + $0x90] sm:$0xff]
    %v64 = vld [vmem:[%s0 + $0x98] sm:$0xff]
    %v65 = vld [vmem:[%s0 + $0xa0] sm:$0xff]
    %v66 = vld [vmem:[%s0 + $0xa8] sm:$0xff]
    %v67 = vld [vmem:[%s0 + $0xb0] sm:$0xff]
    %v68 = vld [vmem:[%s0 + $0xb8] sm:$0xff]
    %v69 = vld [vmem:[%s0 + $0xc0] sm:$0xff]
    %v70 = vld [vmem:[%s0 + $0xc8] sm:$0xff]
    %v71 = vld [vmem:[%s0 + $0xd0] sm:$0xff]
    %v72 = vld [vmem:[%s0 + $0xd8] sm:$0xff]
    %v73 = vld [vmem:[%s0 + $0xe0] sm:$0xff]
    %v74 = vld [vmem:[%s0 + $0xe8] sm:$0xff]
    %v75 = vld [vmem:[%s0 + $0xf0] sm:$0xff]
    %v76 = vld [vmem:[%s0 + $0xf8] sm:$0xff]
    %v77 = vld [vmem:[%s3] sm:$0x1f]
    %v78 = vld [vmem:[%s8] ss:$0 sm:$0xff]
    %vm79 = vcmask 39936
    %v81 = vsel %vm79, %v45, 0
    %v84 = vsel %vm79, %v46, 0
    %v87 = vsel %vm79, %v47, 0
    %v90 = vsel %vm79, %v48, 0
    %v93 = vsel %vm79, %v49, 0
    %v96 = vsel %vm79, %v50, 0
    %v99 = vsel %vm79, %v51, 0
    %v102 = vsel %vm79, %v52, 0
    %v105 = vsel %vm79, %v53, 0
    %v108 = vsel %vm79, %v54, 0
    %v111 = vsel %vm79, %v55, 0
    %v114 = vsel %vm79, %v56, 0
    %v117 = vsel %vm79, %v57, 0
    %v120 = vsel %vm79, %v58, 0
    %v123 = vsel %vm79, %v59, 0
    %v126 = vsel %vm79, %v60, 0
    %v129 = vsel %vm79, %v61, 0
    %v132 = vsel %vm79, %v62, 0
    %v135 = vsel %vm79, %v63, 0
    %v138 = vsel %vm79, %v64, 0
    %v141 = vsel %vm79, %v65, 0
    %v144 = vsel %vm79, %v66, 0
    %v147 = vsel %vm79, %v67, 0
    %v150 = vsel %vm79, %v68, 0
    %v153 = vsel %vm79, %v69, 0
    %v156 = vsel %vm79, %v70, 0
    %v159 = vsel %vm79, %v71, 0
    %v162 = vsel %vm79, %v72, 0
    %v165 = vsel %vm79, %v73, 0
    %v168 = vsel %vm79, %v74, 0
    %v171 = vsel %vm79, %v75, 0
    %v174 = vsel %vm79, %v76, 0
    %vm176 = vcmask 1044480
    %v178 = vsel %vm176, %v77, 0
    %180 = vmatprep.subr.mxu0 0.0
    %181 = vmatpush1.msra.mxu0 %v178
    %182 = vmatprep.subr.mxu0 0.0
    %183 = vmatpush1.msra.mxu0 0.0
    %184 = vmatprep.subr.mxu0 0.0
    %185 = vmatpush1.msra.mxu0 0.0
    %186 = vmatprep.subr.mxu0 0.0
    %187 = vmatpush1.msra.mxu0 0.0
    %188 = vmatprep.subr.mxu0 0.0
    %189 = vmatpush1.msra.mxu0 0.0
    %190 = vmatprep.subr.mxu0 0.0
    %191 = vmatpush1.msra.mxu0 0.0
    %192 = vmatprep.subr.mxu0 0.0
    %193 = vmatpush1.msra.mxu0 0.0
    %194 = vmatprep.subr.mxu0 0.0
    %195 = vmatpush1.msra.mxu0 0.0
    %196 = vmatprep.subr.mxu0 0.0
    %197 = vmatpush1.msra.mxu0 0.0
    %198 = vmatprep.subr.mxu0 0.0
    %199 = vmatpush1.msra.mxu0 0.0
    %200 = vmatprep.subr.mxu0 0.0
    %201 = vmatpush1.msra.mxu0 0.0
    %202 = vmatprep.subr.mxu0 0.0
    %203 = vmatpush1.msra.mxu0 0.0
    %204 = vmatprep.subr.mxu0 0.0
    %205 = vmatpush1.msra.mxu0 0.0
    %206 = vmatprep.subr.mxu0 0.0
    %207 = vmatpush1.msra.mxu0 0.0
    %208 = vmatprep.subr.mxu0 0.0
    %209 = vmatpush1.msra.mxu0 0.0
    %210 = vmatprep.subr.mxu0 0.0
    %211 = vmatpush1.msra.mxu0 0.0
    %212 = vmatprep.subr.mxu0 0.0
    %213 = vmatpush1.msra.mxu0 0.0
    %214 = vmatprep.subr.mxu0 0.0
    %215 = vmatpush1.msra.mxu0 0.0
    %216 = vmatprep.subr.mxu0 0.0
    %217 = vmatpush1.msra.mxu0 0.0
    %218 = vmatprep.subr.mxu0 0.0
    %219 = vmatpush1.msra.mxu0 0.0
    %220 = vmatprep.subr.mxu0 0.0
    %221 = vmatpush1.msra.mxu0 0.0
    %222 = vmatprep.subr.mxu0 0.0
    %223 = vmatpush1.msra.mxu0 0.0
    %224 = vmatprep.subr.mxu0 0.0
    %225 = vmatpush1.msra.mxu0 0.0
    %226 = vmatprep.subr.mxu0 0.0
    %227 = vmatpush1.msra.mxu0 0.0
    %228 = vmatprep.subr.mxu0 0.0
    %229 = vmatpush1.msra.mxu0 0.0
    %230 = vmatprep.subr.mxu0 0.0
    %231 = vmatpush1.msra.mxu0 0.0
    %232 = vmatprep.subr.mxu0 0.0
    %233 = vmatpush1.msra.mxu0 0.0
    %234 = vmatprep.subr.mxu0 0.0
    %235 = vmatpush1.msra.mxu0 0.0
    %236 = vmatprep.subr.mxu0 0.0
    %237 = vmatpush1.msra.mxu0 0.0
    %238 = vmatprep.subr.mxu0 0.0
    %239 = vmatpush1.msra.mxu0 0.0
    %240 = vmatprep.subr.mxu0 0.0
    %241 = vmatpush1.msra.mxu0 0.0
    %242 = vmatprep.subr.mxu0 0.0
    %243 = vmatpush1.msra.mxu0 0.0
    %244 = vmatprep.mubr.f32.mxu0 0.0
    %245 = vmatmul.mubr.f32.gmra.mrb[0].mxu0 %v81
    %v246 = vpop.f32.mrb[0].mxu0
    %v247 = vadd.f32 %v78, %v246
    %v248 = vpop.f32.mrb[0].mxu0
    %249 = vmatprep.mubr.f32.mxu0 0.0
    %250 = vmatmul.mubr.f32.gmra.mrb[0].mxu0 %v84
    %v251 = vpop.f32.mrb[0].mxu0
    %v252 = vadd.f32 %v78, %v251
    %v253 = vpop.f32.mrb[0].mxu0
    %254 = vmatprep.mubr.f32.mxu0 0.0
    %255 = vmatmul.mubr.f32.gmra.mrb[0].mxu0 %v87
    %v256 = vpop.f32.mrb[0].mxu0
    %v257 = vadd.f32 %v78, %v256
    %v258 = vpop.f32.mrb[0].mxu0
    %259 = vmatprep.mubr.f32.mxu0 0.0
    %260 = vmatmul.mubr.f32.gmra.mrb[0].mxu0 %v90
    %v261 = vpop.f32.mrb[0].mxu0
    %v262 = vadd.f32 %v78, %v261
    %v263 = vpop.f32.mrb[0].mxu0
    %264 = vmatprep.mubr.f32.mxu0 0.0
    %265 = vmatmul.mubr.f32.gmra.mrb[0].mxu0 %v93
    %v266 = vpop.f32.mrb[0].mxu0
    %v267 = vadd.f32 %v78, %v266
    %v268 = vpop.f32.mrb[0].mxu0
    %269 = vmatprep.mubr.f32.mxu0 0.0
    %270 = vmatmul.mubr.f32.gmra.mrb[0].mxu0 %v96
    %v271 = vpop.f32.mrb[0].mxu0
    %v272 = vadd.f32 %v78, %v271
    %v273 = vpop.f32.mrb[0].mxu0
    %274 = vmatprep.mubr.f32.mxu0 0.0
    %275 = vmatmul.mubr.f32.gmra.mrb[0].mxu0 %v99
    %v276 = vpop.f32.mrb[0].mxu0
    %v277 = vadd.f32 %v78, %v276
    %v278 = vpop.f32.mrb[0].mxu0
    %279 = vmatprep.mubr.f32.mxu0 0.0
    %280 = vmatmul.mubr.f32.gmra.mrb[0].mxu0 %v102
    %v281 = vpop.f32.mrb[0].mxu0
    %v282 = vadd.f32 %v78, %v281
    %v283 = vpop.f32.mrb[0].mxu0
    %284 = vmatprep.mubr.f32.mxu0 0.0
    %285 = vmatmul.mubr.f32.gmra.mrb[0].mxu0 %v105
    %v286 = vpop.f32.mrb[0].mxu0
    %v287 = vadd.f32 %v78, %v286
    %v288 = vpop.f32.mrb[0].mxu0
    %289 = vmatprep.mubr.f32.mxu0 0.0
    %290 = vmatmul.mubr.f32.gmra.mrb[0].mxu0 %v108
    %v291 = vpop.f32.mrb[0].mxu0
    %v292 = vadd.f32 %v78, %v291
    %v293 = vpop.f32.mrb[0].mxu0
    %294 = vmatprep.mubr.f32.mxu0 0.0
    %295 = vmatmul.mubr.f32.gmra.mrb[0].mxu0 %v111
    %v296 = vpop.f32.mrb[0].mxu0
    %v297 = vadd.f32 %v78, %v296
    %v298 = vpop.f32.mrb[0].mxu0
    %299 = vmatprep.mubr.f32.mxu0 0.0
    %300 = vmatmul.mubr.f32.gmra.mrb[0].mxu0 %v114
    %v301 = vpop.f32.mrb[0].mxu0
    %v302 = vadd.f32 %v78, %v301
    %v303 = vpop.f32.mrb[0].mxu0
    %304 = vmatprep.mubr.f32.mxu0 0.0
    %305 = vmatmul.mubr.f32.gmra.mrb[0].mxu0 %v117
    %v306 = vpop.f32.mrb[0].mxu0
    %v307 = vadd.f32 %v78, %v306
    %v308 = vpop.f32.mrb[0].mxu0
    %309 = vmatprep.mubr.f32.mxu0 0.0
    %310 = vmatmul.mubr.f32.gmra.mrb[0].mxu0 %v120
    %v311 = vpop.f32.mrb[0].mxu0
    %v312 = vadd.f32 %v78, %v311
    %v313 = vpop.f32.mrb[0].mxu0
    %314 = vmatprep.mubr.f32.mxu0 0.0
    %315 = vmatmul.mubr.f32.gmra.mrb[0].mxu0 %v123
    %v316 = vpop.f32.mrb[0].mxu0
    %v317 = vadd.f32 %v78, %v316
    %v318 = vpop.f32.mrb[0].mxu0
    %319 = vmatprep.mubr.f32.mxu0 0.0
    %320 = vmatmul.mubr.f32.gmra.mrb[0].mxu0 %v126
    %v321 = vpop.f32.mrb[0].mxu0
    %v322 = vadd.f32 %v78, %v321
    %v323 = vpop.f32.mrb[0].mxu0
    %324 = vmatprep.mubr.f32.mxu0 0.0
    %325 = vmatmul.mubr.f32.gmra.mrb[0].mxu0 %v129
    %v326 = vpop.f32.mrb[0].mxu0
    %v327 = vadd.f32 %v78, %v326
    %v328 = vpop.f32.mrb[0].mxu0
    %329 = vmatprep.mubr.f32.mxu0 0.0
    %330 = vmatmul.mubr.f32.gmra.mrb[0].mxu0 %v132
    %v331 = vpop.f32.mrb[0].mxu0
    %v332 = vadd.f32 %v78, %v331
    %v333 = vpop.f32.mrb[0].mxu0
    %334 = vmatprep.mubr.f32.mxu0 0.0
    %335 = vmatmul.mubr.f32.gmra.mrb[0].mxu0 %v135
    %v336 = vpop.f32.mrb[0].mxu0
    %v337 = vadd.f32 %v78, %v336
    %v338 = vpop.f32.mrb[0].mxu0
    %339 = vmatprep.mubr.f32.mxu0 0.0
    %340 = vmatmul.mubr.f32.gmra.mrb[0].mxu0 %v138
    %v341 = vpop.f32.mrb[0].mxu0
    %v342 = vadd.f32 %v78, %v341
    %v343 = vpop.f32.mrb[0].mxu0
    %344 = vmatprep.mubr.f32.mxu0 0.0
    %345 = vmatmul.mubr.f32.gmra.mrb[0].mxu0 %v141
    %v346 = vpop.f32.mrb[0].mxu0
    %v347 = vadd.f32 %v78, %v346
    %v348 = vpop.f32.mrb[0].mxu0
    %349 = vmatprep.mubr.f32.mxu0 0.0
    %350 = vmatmul.mubr.f32.gmra.mrb[0].mxu0 %v144
    %v351 = vpop.f32.mrb[0].mxu0
    %v352 = vadd.f32 %v78, %v351
    %v353 = vpop.f32.mrb[0].mxu0
    %354 = vmatprep.mubr.f32.mxu0 0.0
    %355 = vmatmul.mubr.f32.gmra.mrb[0].mxu0 %v147
    %v356 = vpop.f32.mrb[0].mxu0
    %v357 = vadd.f32 %v78, %v356
    %v358 = vpop.f32.mrb[0].mxu0
    %359 = vmatprep.mubr.f32.mxu0 0.0
    %360 = vmatmul.mubr.f32.gmra.mrb[0].mxu0 %v150
    %v361 = vpop.f32.mrb[0].mxu0
    %v362 = vadd.f32 %v78, %v361
    %v363 = vpop.f32.mrb[0].mxu0
    %364 = vmatprep.mubr.f32.mxu0 0.0
    %365 = vmatmul.mubr.f32.gmra.mrb[0].mxu0 %v153
    %v366 = vpop.f32.mrb[0].mxu0
    %v367 = vadd.f32 %v78, %v366
    %v368 = vpop.f32.mrb[0].mxu0
    %369 = vmatprep.mubr.f32.mxu0 0.0
    %370 = vmatmul.mubr.f32.gmra.mrb[0].mxu0 %v156
    %v371 = vpop.f32.mrb[0].mxu0
    %v372 = vadd.f32 %v78, %v371
    %v373 = vpop.f32.mrb[0].mxu0
    %374 = vmatprep.mubr.f32.mxu0 0.0
    %375 = vmatmul.mubr.f32.gmra.mrb[0].mxu0 %v159
    %v376 = vpop.f32.mrb[0].mxu0
    %v377 = vadd.f32 %v78, %v376
    %v378 = vpop.f32.mrb[0].mxu0
    %379 = vmatprep.mubr.f32.mxu0 0.0
    %380 = vmatmul.mubr.f32.gmra.mrb[0].mxu0 %v162
    %v381 = vpop.f32.mrb[0].mxu0
    %v382 = vadd.f32 %v78, %v381
    %v383 = vpop.f32.mrb[0].mxu0
    %384 = vmatprep.mubr.f32.mxu0 0.0
    %385 = vmatmul.mubr.f32.gmra.mrb[0].mxu0 %v165
    %v386 = vpop.f32.mrb[0].mxu0
    %v387 = vadd.f32 %v78, %v386
    %v388 = vpop.f32.mrb[0].mxu0
    %389 = vmatprep.mubr.f32.mxu0 0.0
    %390 = vmatmul.mubr.f32.gmra.mrb[0].mxu0 %v168
    %v391 = vpop.f32.mrb[0].mxu0
    %v392 = vadd.f32 %v78, %v391
    %v393 = vpop.f32.mrb[0].mxu0
    %394 = vmatprep.mubr.f32.mxu0 0.0
    %395 = vmatmul.mubr.f32.gmra.mrb[0].mxu0 %v171
    %v396 = vpop.f32.mrb[0].mxu0
    %v397 = vadd.f32 %v78, %v396
    %v398 = vpop.f32.mrb[0].mxu0
    %399 = vmatprep.mubr.f32.mxu0 0.0
    %400 = vmatmul.mubr.f32.gmra.mrb[0].mxu0 %v174
    %v401 = vpop.f32.mrb[0].mxu0
    %v402 = vadd.f32 %v78, %v401
    %v403 = vpop.f32.mrb[0].mxu0
    %404 = vdwg.mxu0
    %v405 = vmax.f32 %v247, 0.0
    %v406 = vmax.f32 %v252, 0.0
    %v407 = vmax.f32 %v257, 0.0
    %v408 = vmax.f32 %v262, 0.0
    %v409 = vmax.f32 %v267, 0.0
    %v410 = vmax.f32 %v272, 0.0
    %v411 = vmax.f32 %v277, 0.0
    %v412 = vmax.f32 %v282, 0.0
    %v413 = vmax.f32 %v287, 0.0
    %v414 = vmax.f32 %v292, 0.0
    %v415 = vmax.f32 %v297, 0.0
    %v416 = vmax.f32 %v302, 0.0
    %v417 = vmax.f32 %v307, 0.0
    %v418 = vmax.f32 %v312, 0.0
    %v419 = vmax.f32 %v317, 0.0
    %v420 = vmax.f32 %v322, 0.0
    %v421 = vmax.f32 %v327, 0.0
    %v422 = vmax.f32 %v332, 0.0
    %v423 = vmax.f32 %v337, 0.0
    %v424 = vmax.f32 %v342, 0.0
    %v425 = vmax.f32 %v347, 0.0
    %v426 = vmax.f32 %v352, 0.0
    %v427 = vmax.f32 %v357, 0.0
    %v428 = vmax.f32 %v362, 0.0
    %v429 = vmax.f32 %v367, 0.0
    %v430 = vmax.f32 %v372, 0.0
    %v431 = vmax.f32 %v377, 0.0
    %v432 = vmax.f32 %v382, 0.0
    %v433 = vmax.f32 %v387, 0.0
    %v434 = vmax.f32 %v392, 0.0
    %v435 = vmax.f32 %v397, 0.0
    %v436 = vmax.f32 %v402, 0.0
    %v437 = vld [vmem:[%s4] sm:$0xff]
    %v438 = vld [vmem:[%s4 + $0x8] sm:$0xff]
    %v439 = vld [vmem:[%s4 + $0x10] sm:$0xff]
    %v440 = vld [vmem:[%s4 + $0x18] sm:$0xff]
    %v441 = vld [vmem:[%s4 + $0x20] sm:$0xff]
    %v442 = vld [vmem:[%s4 + $0x28] sm:$0xff]
    %v443 = vld [vmem:[%s4 + $0x30] sm:$0xff]
    %v444 = vld [vmem:[%s4 + $0x38] sm:$0xff]
    %v445 = vld [vmem:[%s4 + $0x40] sm:$0xff]
    %v446 = vld [vmem:[%s4 + $0x48] sm:$0xff]
    %v447 = vld [vmem:[%s4 + $0x50] sm:$0xff]
    %v448 = vld [vmem:[%s4 + $0x58] sm:$0xff]
    %v449 = vld [vmem:[%s8 + $0x1] ss:$0 sm:$0xff]
    %vm450 = vcmask 785408
    %v452 = vsel %vm450, %v405, 0
    %v455 = vsel %vm450, %v406, 0
    %v458 = vsel %vm450, %v407, 0
    %v461 = vsel %vm450, %v408, 0
    %v464 = vsel %vm450, %v409, 0
    %v467 = vsel %vm450, %v410, 0
    %v470 = vsel %vm450, %v411, 0
    %v473 = vsel %vm450, %v412, 0
    %v476 = vsel %vm450, %v413, 0
    %v479 = vsel %vm450, %v414, 0
    %v482 = vsel %vm450, %v415, 0
    %v485 = vsel %vm450, %v416, 0
    %v488 = vsel %vm450, %v417, 0
    %v491 = vsel %vm450, %v418, 0
    %v494 = vsel %vm450, %v419, 0
    %v497 = vsel %vm450, %v420, 0
    %v500 = vsel %vm450, %v421, 0
    %v503 = vsel %vm450, %v422, 0
    %v506 = vsel %vm450, %v423, 0
    %v509 = vsel %vm450, %v424, 0
    %v512 = vsel %vm450, %v425, 0
    %v515 = vsel %vm450, %v426, 0
    %v518 = vsel %vm450, %v427, 0
    %v521 = vsel %vm450, %v428, 0
    %v524 = vsel %vm450, %v429, 0
    %v527 = vsel %vm450, %v430, 0
    %v530 = vsel %vm450, %v431, 0
    %v533 = vsel %vm450, %v432, 0
    %v536 = vsel %vm450, %v433, 0
    %v539 = vsel %vm450, %v434, 0
    %v542 = vsel %vm450, %v435, 0
    %v545 = vsel %vm450, %v436, 0
    %547 = vmatprep.subr.mxu0 0.0
    %548 = vmatpush1.msra.mxu0 %v437
    %549 = vmatprep.subr.mxu0 0.0
    %550 = vmatpush1.msra.mxu0 %v438
    %551 = vmatprep.subr.mxu0 0.0
    %552 = vmatpush1.msra.mxu0 %v439
    %553 = vmatprep.subr.mxu0 0.0
    %554 = vmatpush1.msra.mxu0 %v440
    %555 = vmatprep.subr.mxu0 0.0
    %556 = vmatpush1.msra.mxu0 %v441
    %557 = vmatprep.subr.mxu0 0.0
    %558 = vmatpush1.msra.mxu0 %v442
    %559 = vmatprep.subr.mxu0 0.0
    %560 = vmatpush1.msra.mxu0 %v443
    %561 = vmatprep.subr.mxu0 0.0
    %562 = vmatpush1.msra.mxu0 %v444
    %563 = vmatprep.subr.mxu0 0.0
    %564 = vmatpush1.msra.mxu0 %v445
    %565 = vmatprep.subr.mxu0 0.0
    %566 = vmatpush1.msra.mxu0 %v446
    %567 = vmatprep.subr.mxu0 0.0
    %568 = vmatpush1.msra.mxu0 %v447
    %569 = vmatprep.subr.mxu0 0.0
    %570 = vmatpush1.msra.mxu0 %v448
    %571 = vmatprep.subr.mxu0 0.0
    %572 = vmatpush1.msra.mxu0 0.0
    %573 = vmatprep.subr.mxu0 0.0
    %574 = vmatpush1.msra.mxu0 0.0
    %575 = vmatprep.subr.mxu0 0.0
    %576 = vmatpush1.msra.mxu0 0.0
    %577 = vmatprep.subr.mxu0 0.0
    %578 = vmatpush1.msra.mxu0 0.0
    %579 = vmatprep.subr.mxu0 0.0
    %580 = vmatpush1.msra.mxu0 0.0
    %581 = vmatprep.subr.mxu0 0.0
    %582 = vmatpush1.msra.mxu0 0.0
    %583 = vmatprep.subr.mxu0 0.0
    %584 = vmatpush1.msra.mxu0 0.0
    %585 = vmatprep.subr.mxu0 0.0
    %586 = vmatpush1.msra.mxu0 0.0
    %587 = vmatprep.subr.mxu0 0.0
    %588 = vmatpush1.msra.mxu0 0.0
    %589 = vmatprep.subr.mxu0 0.0
    %590 = vmatpush1.msra.mxu0 0.0
    %591 = vmatprep.subr.mxu0 0.0
    %592 = vmatpush1.msra.mxu0 0.0
    %593 = vmatprep.subr.mxu0 0.0
    %594 = vmatpush1.msra.mxu0 0.0
    %595 = vmatprep.subr.mxu0 0.0
    %596 = vmatpush1.msra.mxu0 0.0
    %597 = vmatprep.subr.mxu0 0.0
    %598 = vmatpush1.msra.mxu0 0.0
    %599 = vmatprep.subr.mxu0 0.0
    %600 = vmatpush1.msra.mxu0 0.0
    %601 = vmatprep.subr.mxu0 0.0
    %602 = vmatpush1.msra.mxu0 0.0
    %603 = vmatprep.subr.mxu0 0.0
    %604 = vmatpush1.msra.mxu0 0.0
    %605 = vmatprep.subr.mxu0 0.0
    %606 = vmatpush1.msra.mxu0 0.0
    %607 = vmatprep.subr.mxu0 0.0
    %608 = vmatpush1.msra.mxu0 0.0
    %609 = vmatprep.subr.mxu0 0.0
    %610 = vmatpush1.msra.mxu0 0.0
    %611 = vmatprep.mubr.f32.mxu0 0.0
    %612 = vmatmul.mubr.f32.gmra.mrb[0].mxu0 %v452
    %v613 = vpop.f32.mrb[0].mxu0
    %v614 = vadd.f32 %v449, %v613
    %v615 = vpop.f32.mrb[0].mxu0
    %616 = vmatprep.mubr.f32.mxu0 0.0
    %617 = vmatmul.mubr.f32.gmra.mrb[0].mxu0 %v455
    %v618 = vpop.f32.mrb[0].mxu0
    %v619 = vadd.f32 %v449, %v618
    %v620 = vpop.f32.mrb[0].mxu0
    %621 = vmatprep.mubr.f32.mxu0 0.0
    %622 = vmatmul.mubr.f32.gmra.mrb[0].mxu0 %v458
    %v623 = vpop.f32.mrb[0].mxu0
    %v624 = vadd.f32 %v449, %v623
    %v625 = vpop.f32.mrb[0].mxu0
    %626 = vmatprep.mubr.f32.mxu0 0.0
    %627 = vmatmul.mubr.f32.gmra.mrb[0].mxu0 %v461
    %v628 = vpop.f32.mrb[0].mxu0
    %v629 = vadd.f32 %v449, %v628
    %v630 = vpop.f32.mrb[0].mxu0
    %631 = vmatprep.mubr.f32.mxu0 0.0
    %632 = vmatmul.mubr.f32.gmra.mrb[0].mxu0 %v464
    %v633 = vpop.f32.mrb[0].mxu0
    %v634 = vadd.f32 %v449, %v633
    %v635 = vpop.f32.mrb[0].mxu0
    %636 = vmatprep.mubr.f32.mxu0 0.0
    %637 = vmatmul.mubr.f32.gmra.mrb[0].mxu0 %v467
    %v638 = vpop.f32.mrb[0].mxu0
    %v639 = vadd.f32 %v449, %v638
    %v640 = vpop.f32.mrb[0].mxu0
    %641 = vmatprep.mubr.f32.mxu0 0.0
    %642 = vmatmul.mubr.f32.gmra.mrb[0].mxu0 %v470
    %v643 = vpop.f32.mrb[0].mxu0
    %v644 = vadd.f32 %v449, %v643
    %v645 = vpop.f32.mrb[0].mxu0
    %646 = vmatprep.mubr.f32.mxu0 0.0
    %647 = vmatmul.mubr.f32.gmra.mrb[0].mxu0 %v473
    %v648 = vpop.f32.mrb[0].mxu0
    %v649 = vadd.f32 %v449, %v648
    %v650 = vpop.f32.mrb[0].mxu0
    %651 = vmatprep.mubr.f32.mxu0 0.0
    %652 = vmatmul.mubr.f32.gmra.mrb[0].mxu0 %v476
    %v653 = vpop.f32.mrb[0].mxu0
    %v654 = vadd.f32 %v449, %v653
    %v655 = vpop.f32.mrb[0].mxu0
    %656 = vmatprep.mubr.f32.mxu0 0.0
    %657 = vmatmul.mubr.f32.gmra.mrb[0].mxu0 %v479
    %v658 = vpop.f32.mrb[0].mxu0
    %v659 = vadd.f32 %v449, %v658
    %v660 = vpop.f32.mrb[0].mxu0
    %661 = vmatprep.mubr.f32.mxu0 0.0
    %662 = vmatmul.mubr.f32.gmra.mrb[0].mxu0 %v482
    %v663 = vpop.f32.mrb[0].mxu0
    %v664 = vadd.f32 %v449, %v663
    %v665 = vpop.f32.mrb[0].mxu0
    %666 = vmatprep.mubr.f32.mxu0 0.0
    %667 = vmatmul.mubr.f32.gmra.mrb[0].mxu0 %v485
    %v668 = vpop.f32.mrb[0].mxu0
    %v669 = vadd.f32 %v449, %v668
    %v670 = vpop.f32.mrb[0].mxu0
    %671 = vmatprep.mubr.f32.mxu0 0.0
    %672 = vmatmul.mubr.f32.gmra.mrb[0].mxu0 %v488
    %v673 = vpop.f32.mrb[0].mxu0
    %v674 = vadd.f32 %v449, %v673
    %v675 = vpop.f32.mrb[0].mxu0
    %676 = vmatprep.mubr.f32.mxu0 0.0
    %677 = vmatmul.mubr.f32.gmra.mrb[0].mxu0 %v491
    %v678 = vpop.f32.mrb[0].mxu0
    %v679 = vadd.f32 %v449, %v678
    %v680 = vpop.f32.mrb[0].mxu0
    %681 = vmatprep.mubr.f32.mxu0 0.0
    %682 = vmatmul.mubr.f32.gmra.mrb[0].mxu0 %v494
    %v683 = vpop.f32.mrb[0].mxu0
    %v684 = vadd.f32 %v449, %v683
    %v685 = vpop.f32.mrb[0].mxu0
    %686 = vmatprep.mubr.f32.mxu0 0.0
    %687 = vmatmul.mubr.f32.gmra.mrb[0].mxu0 %v497
    %v688 = vpop.f32.mrb[0].mxu0
    %v689 = vadd.f32 %v449, %v688
    %v690 = vpop.f32.mrb[0].mxu0
    %691 = vmatprep.mubr.f32.mxu0 0.0
    %692 = vmatmul.mubr.f32.gmra.mrb[0].mxu0 %v500
    %v693 = vpop.f32.mrb[0].mxu0
    %v694 = vadd.f32 %v449, %v693
    %v695 = vpop.f32.mrb[0].mxu0
    %696 = vmatprep.mubr.f32.mxu0 0.0
    %697 = vmatmul.mubr.f32.gmra.mrb[0].mxu0 %v503
    %v698 = vpop.f32.mrb[0].mxu0
    %v699 = vadd.f32 %v449, %v698
    %v700 = vpop.f32.mrb[0].mxu0
    %701 = vmatprep.mubr.f32.mxu0 0.0
    %702 = vmatmul.mubr.f32.gmra.mrb[0].mxu0 %v506
    %v703 = vpop.f32.mrb[0].mxu0
    %v704 = vadd.f32 %v449, %v703
    %v705 = vpop.f32.mrb[0].mxu0
    %706 = vmatprep.mubr.f32.mxu0 0.0
    %707 = vmatmul.mubr.f32.gmra.mrb[0].mxu0 %v509
    %v708 = vpop.f32.mrb[0].mxu0
    %v709 = vadd.f32 %v449, %v708
    %v710 = vpop.f32.mrb[0].mxu0
    %711 = vmatprep.mubr.f32.mxu0 0.0
    %712 = vmatmul.mubr.f32.gmra.mrb[0].mxu0 %v512
    %v713 = vpop.f32.mrb[0].mxu0
    %v714 = vadd.f32 %v449, %v713
    %v715 = vpop.f32.mrb[0].mxu0
    %716 = vmatprep.mubr.f32.mxu0 0.0
    %717 = vmatmul.mubr.f32.gmra.mrb[0].mxu0 %v515
    %v718 = vpop.f32.mrb[0].mxu0
    %v719 = vadd.f32 %v449, %v718
    %v720 = vpop.f32.mrb[0].mxu0
    %721 = vmatprep.mubr.f32.mxu0 0.0
    %722 = vmatmul.mubr.f32.gmra.mrb[0].mxu0 %v518
    %v723 = vpop.f32.mrb[0].mxu0
    %v724 = vadd.f32 %v449, %v723
    %v725 = vpop.f32.mrb[0].mxu0
    %726 = vmatprep.mubr.f32.mxu0 0.0
    %727 = vmatmul.mubr.f32.gmra.mrb[0].mxu0 %v521
    %v728 = vpop.f32.mrb[0].mxu0
    %v729 = vadd.f32 %v449, %v728
    %v730 = vpop.f32.mrb[0].mxu0
    %731 = vmatprep.mubr.f32.mxu0 0.0
    %732 = vmatmul.mubr.f32.gmra.mrb[0].mxu0 %v524
    %v733 = vpop.f32.mrb[0].mxu0
    %v734 = vadd.f32 %v449, %v733
    %v735 = vpop.f32.mrb[0].mxu0
    %736 = vmatprep.mubr.f32.mxu0 0.0
    %737 = vmatmul.mubr.f32.gmra.mrb[0].mxu0 %v527
    %v738 = vpop.f32.mrb[0].mxu0
    %v739 = vadd.f32 %v449, %v738
    %v740 = vpop.f32.mrb[0].mxu0
    %741 = vmatprep.mubr.f32.mxu0 0.0
    %742 = vmatmul.mubr.f32.gmra.mrb[0].mxu0 %v530
    %v743 = vpop.f32.mrb[0].mxu0
    %v744 = vadd.f32 %v449, %v743
    %v745 = vpop.f32.mrb[0].mxu0
    %746 = vmatprep.mubr.f32.mxu0 0.0
    %747 = vmatmul.mubr.f32.gmra.mrb[0].mxu0 %v533
    %v748 = vpop.f32.mrb[0].mxu0
    %v749 = vadd.f32 %v449, %v748
    %v750 = vpop.f32.mrb[0].mxu0
    %751 = vmatprep.mubr.f32.mxu0 0.0
    %752 = vmatmul.mubr.f32.gmra.mrb[0].mxu0 %v536
    %v753 = vpop.f32.mrb[0].mxu0
    %v754 = vadd.f32 %v449, %v753
    %v755 = vpop.f32.mrb[0].mxu0
    %756 = vmatprep.mubr.f32.mxu0 0.0
    %757 = vmatmul.mubr.f32.gmra.mrb[0].mxu0 %v539
    %v758 = vpop.f32.mrb[0].mxu0
    %v759 = vadd.f32 %v449, %v758
    %v760 = vpop.f32.mrb[0].mxu0
    %761 = vmatprep.mubr.f32.mxu0 0.0
    %762 = vmatmul.mubr.f32.gmra.mrb[0].mxu0 %v542
    %v763 = vpop.f32.mrb[0].mxu0
    %v764 = vadd.f32 %v449, %v763
    %v765 = vpop.f32.mrb[0].mxu0
    %766 = vmatprep.mubr.f32.mxu0 0.0
    %767 = vmatmul.mubr.f32.gmra.mrb[0].mxu0 %v545
    %v768 = vpop.f32.mrb[0].mxu0
    %v769 = vadd.f32 %v449, %v768
    %v770 = vpop.f32.mrb[0].mxu0
    %771 = vdwg.mxu0
    %v772 = vmax.f32 %v614, 0.0
    %v773 = vmax.f32 %v619, 0.0
    %v774 = vmax.f32 %v624, 0.0
    %v775 = vmax.f32 %v629, 0.0
    %v776 = vmax.f32 %v634, 0.0
    %v777 = vmax.f32 %v639, 0.0
    %v778 = vmax.f32 %v644, 0.0
    %v779 = vmax.f32 %v649, 0.0
    %v780 = vmax.f32 %v654, 0.0
    %v781 = vmax.f32 %v659, 0.0
    %v782 = vmax.f32 %v664, 0.0
    %v783 = vmax.f32 %v669, 0.0
    %v784 = vmax.f32 %v674, 0.0
    %v785 = vmax.f32 %v679, 0.0
    %v786 = vmax.f32 %v684, 0.0
    %v787 = vmax.f32 %v689, 0.0
    %v788 = vmax.f32 %v694, 0.0
    %v789 = vmax.f32 %v699, 0.0
    %v790 = vmax.f32 %v704, 0.0
    %v791 = vmax.f32 %v709, 0.0
    %v792 = vmax.f32 %v714, 0.0
    %v793 = vmax.f32 %v719, 0.0
    %v794 = vmax.f32 %v724, 0.0
    %v795 = vmax.f32 %v729, 0.0
    %v796 = vmax.f32 %v734, 0.0
    %v797 = vmax.f32 %v739, 0.0
    %v798 = vmax.f32 %v744, 0.0
    %v799 = vmax.f32 %v749, 0.0
    %v800 = vmax.f32 %v754, 0.0
    %v801 = vmax.f32 %v759, 0.0
    %v802 = vmax.f32 %v764, 0.0
    %v803 = vmax.f32 %v769, 0.0
    %v804 = vld [vmem:[%s5] sm:$0xff]
    %v805 = vld [vmem:[%s5 + $0x8] sm:$0xff]
    %v806 = vld [vmem:[%s5 + $0x10] sm:$0xff]
    %v807 = vld [vmem:[%s5 + $0x18] sm:$0xff]
    %v808 = vld [vmem:[%s5 + $0x20] sm:$0xff]
    %v809 = vld [vmem:[%s5 + $0x28] sm:$0xff]
    %v810 = vld [vmem:[%s5 + $0x30] sm:$0xff]
    %v811 = vld [vmem:[%s5 + $0x38] sm:$0xff]
    %v812 = vld [vmem:[%s5 + $0x40] sm:$0xff]
    %v813 = vld [vmem:[%s5 + $0x48] sm:$0xff]
    %v814 = vld [vmem:[%s5 + $0x50] sm:$0xff]
    %v815 = vld [vmem:[%s5 + $0x58] sm:$0xff]
    %v816 = vld [vmem:[%s8 + $0x2] ss:$0 sm:$0xff]
    %v818 = vsel %vm450, %v772, 0
    %v821 = vsel %vm450, %v773, 0
    %v824 = vsel %vm450, %v774, 0
    %v827 = vsel %vm450, %v775, 0
    %v830 = vsel %vm450, %v776, 0
    %v833 = vsel %vm450, %v777, 0
    %v836 = vsel %vm450, %v778, 0
    %v839 = vsel %vm450, %v779, 0
    %v842 = vsel %vm450, %v780, 0
    %v845 = vsel %vm450, %v781, 0
    %v848 = vsel %vm450, %v782, 0
    %v851 = vsel %vm450, %v783, 0
    %v854 = vsel %vm450, %v784, 0
    %v857 = vsel %vm450, %v785, 0
    %v860 = vsel %vm450, %v786, 0
    %v863 = vsel %vm450, %v787, 0
    %v866 = vsel %vm450, %v788, 0
    %v869 = vsel %vm450, %v789, 0
    %v872 = vsel %vm450, %v790, 0
    %v875 = vsel %vm450, %v791, 0
    %v878 = vsel %vm450, %v792, 0
    %v881 = vsel %vm450, %v793, 0
    %v884 = vsel %vm450, %v794, 0
    %v887 = vsel %vm450, %v795, 0
    %v890 = vsel %vm450, %v796, 0
    %v893 = vsel %vm450, %v797, 0
    %v896 = vsel %vm450, %v798, 0
    %v899 = vsel %vm450, %v799, 0
    %v902 = vsel %vm450, %v800, 0
    %v905 = vsel %vm450, %v801, 0
    %v908 = vsel %vm450, %v802, 0
    %v911 = vsel %vm450, %v803, 0
    %913 = vmatprep.subr.mxu0 0.0
    %914 = vmatpush1.msra.mxu0 %v804
    %915 = vmatprep.subr.mxu0 0.0
    %916 = vmatpush1.msra.mxu0 %v805
    %917 = vmatprep.subr.mxu0 0.0
    %918 = vmatpush1.msra.mxu0 %v806
    %919 = vmatprep.subr.mxu0 0.0
    %920 = vmatpush1.msra.mxu0 %v807
    %921 = vmatprep.subr.mxu0 0.0
    %922 = vmatpush1.msra.mxu0 %v808
    %923 = vmatprep.subr.mxu0 0.0
    %924 = vmatpush1.msra.mxu0 %v809
    %925 = vmatprep.subr.mxu0 0.0
    %926 = vmatpush1.msra.mxu0 %v810
    %927 = vmatprep.subr.mxu0 0.0
    %928 = vmatpush1.msra.mxu0 %v811
    %929 = vmatprep.subr.mxu0 0.0
    %930 = vmatpush1.msra.mxu0 %v812
    %931 = vmatprep.subr.mxu0 0.0
    %932 = vmatpush1.msra.mxu0 %v813
    %933 = vmatprep.subr.mxu0 0.0
    %934 = vmatpush1.msra.mxu0 %v814
    %935 = vmatprep.subr.mxu0 0.0
    %936 = vmatpush1.msra.mxu0 %v815
    %937 = vmatprep.subr.mxu0 0.0
    %938 = vmatpush1.msra.mxu0 0.0
    %939 = vmatprep.subr.mxu0 0.0
    %940 = vmatpush1.msra.mxu0 0.0
    %941 = vmatprep.subr.mxu0 0.0
    %942 = vmatpush1.msra.mxu0 0.0
    %943 = vmatprep.subr.mxu0 0.0
    %944 = vmatpush1.msra.mxu0 0.0
    %945 = vmatprep.subr.mxu0 0.0
    %946 = vmatpush1.msra.mxu0 0.0
    %947 = vmatprep.subr.mxu0 0.0
    %948 = vmatpush1.msra.mxu0 0.0
    %949 = vmatprep.subr.mxu0 0.0
    %950 = vmatpush1.msra.mxu0 0.0
    %951 = vmatprep.subr.mxu0 0.0
    %952 = vmatpush1.msra.mxu0 0.0
    %953 = vmatprep.subr.mxu0 0.0
    %954 = vmatpush1.msra.mxu0 0.0
    %955 = vmatprep.subr.mxu0 0.0
    %956 = vmatpush1.msra.mxu0 0.0
    %957 = vmatprep.subr.mxu0 0.0
    %958 = vmatpush1.msra.mxu0 0.0
    %959 = vmatprep.subr.mxu0 0.0
    %960 = vmatpush1.msra.mxu0 0.0
    %961 = vmatprep.subr.mxu0 0.0
    %962 = vmatpush1.msra.mxu0 0.0
    %963 = vmatprep.subr.mxu0 0.0
    %964 = vmatpush1.msra.mxu0 0.0
    %965 = vmatprep.subr.mxu0 0.0
    %966 = vmatpush1.msra.mxu0 0.0
    %967 = vmatprep.subr.mxu0 0.0
    %968 = vmatpush1.msra.mxu0 0.0
    %969 = vmatprep.subr.mxu0 0.0
    %970 = vmatpush1.msra.mxu0 0.0
    %971 = vmatprep.subr.mxu0 0.0
    %972 = vmatpush1.msra.mxu0 0.0
    %973 = vmatprep.subr.mxu0 0.0
    %974 = vmatpush1.msra.mxu0 0.0
    %975 = vmatprep.subr.mxu0 0.0
    %976 = vmatpush1.msra.mxu0 0.0
    %977 = vmatprep.mubr.f32.mxu0 0.0
    %978 = vmatmul.mubr.f32.gmra.mrb[0].mxu0 %v818
    %v979 = vpop.f32.mrb[0].mxu0
    %v980 = vadd.f32 %v816, %v979
    %v981 = vpop.f32.mrb[0].mxu0
    %982 = vmatprep.mubr.f32.mxu0 0.0
    %983 = vmatmul.mubr.f32.gmra.mrb[0].mxu0 %v821
    %v984 = vpop.f32.mrb[0].mxu0
    %v985 = vadd.f32 %v816, %v984
    %v986 = vpop.f32.mrb[0].mxu0
    %987 = vmatprep.mubr.f32.mxu0 0.0
    %988 = vmatmul.mubr.f32.gmra.mrb[0].mxu0 %v824
    %v989 = vpop.f32.mrb[0].mxu0
    %v990 = vadd.f32 %v816, %v989
    %v991 = vpop.f32.mrb[0].mxu0
    %992 = vmatprep.mubr.f32.mxu0 0.0
    %993 = vmatmul.mubr.f32.gmra.mrb[0].mxu0 %v827
    %v994 = vpop.f32.mrb[0].mxu0
    %v995 = vadd.f32 %v816, %v994
    %v996 = vpop.f32.mrb[0].mxu0
    %997 = vmatprep.mubr.f32.mxu0 0.0
    %998 = vmatmul.mubr.f32.gmra.mrb[0].mxu0 %v830
    %v999 = vpop.f32.mrb[0].mxu0
    %v1000 = vadd.f32 %v816, %v999
    %v1001 = vpop.f32.mrb[0].mxu0
    %1002 = vmatprep.mubr.f32.mxu0 0.0
    %1003 = vmatmul.mubr.f32.gmra.mrb[0].mxu0 %v833
    %v1004 = vpop.f32.mrb[0].mxu0
    %v1005 = vadd.f32 %v816, %v1004
    %v1006 = vpop.f32.mrb[0].mxu0
    %1007 = vmatprep.mubr.f32.mxu0 0.0
    %1008 = vmatmul.mubr.f32.gmra.mrb[0].mxu0 %v836
    %v1009 = vpop.f32.mrb[0].mxu0
    %v1010 = vadd.f32 %v816, %v1009
    %v1011 = vpop.f32.mrb[0].mxu0
    %1012 = vmatprep.mubr.f32.mxu0 0.0
    %1013 = vmatmul.mubr.f32.gmra.mrb[0].mxu0 %v839
    %v1014 = vpop.f32.mrb[0].mxu0
    %v1015 = vadd.f32 %v816, %v1014
    %v1016 = vpop.f32.mrb[0].mxu0
    %1017 = vmatprep.mubr.f32.mxu0 0.0
    %1018 = vmatmul.mubr.f32.gmra.mrb[0].mxu0 %v842
    %v1019 = vpop.f32.mrb[0].mxu0
    %v1020 = vadd.f32 %v816, %v1019
    %v1021 = vpop.f32.mrb[0].mxu0
    %1022 = vmatprep.mubr.f32.mxu0 0.0
    %1023 = vmatmul.mubr.f32.gmra.mrb[0].mxu0 %v845
    %v1024 = vpop.f32.mrb[0].mxu0
    %v1025 = vadd.f32 %v816, %v1024
    %v1026 = vpop.f32.mrb[0].mxu0
    %1027 = vmatprep.mubr.f32.mxu0 0.0
    %1028 = vmatmul.mubr.f32.gmra.mrb[0].mxu0 %v848
    %v1029 = vpop.f32.mrb[0].mxu0
    %v1030 = vadd.f32 %v816, %v1029
    %v1031 = vpop.f32.mrb[0].mxu0
    %1032 = vmatprep.mubr.f32.mxu0 0.0
    %1033 = vmatmul.mubr.f32.gmra.mrb[0].mxu0 %v851
    %v1034 = vpop.f32.mrb[0].mxu0
    %v1035 = vadd.f32 %v816, %v1034
    %v1036 = vpop.f32.mrb[0].mxu0
    %1037 = vmatprep.mubr.f32.mxu0 0.0
    %1038 = vmatmul.mubr.f32.gmra.mrb[0].mxu0 %v854
    %v1039 = vpop.f32.mrb[0].mxu0
    %v1040 = vadd.f32 %v816, %v1039
    %v1041 = vpop.f32.mrb[0].mxu0
    %1042 = vmatprep.mubr.f32.mxu0 0.0
    %1043 = vmatmul.mubr.f32.gmra.mrb[0].mxu0 %v857
    %v1044 = vpop.f32.mrb[0].mxu0
    %v1045 = vadd.f32 %v816, %v1044
    %v1046 = vpop.f32.mrb[0].mxu0
    %1047 = vmatprep.mubr.f32.mxu0 0.0
    %1048 = vmatmul.mubr.f32.gmra.mrb[0].mxu0 %v860
    %v1049 = vpop.f32.mrb[0].mxu0
    %v1050 = vadd.f32 %v816, %v1049
    %v1051 = vpop.f32.mrb[0].mxu0
    %1052 = vmatprep.mubr.f32.mxu0 0.0
    %1053 = vmatmul.mubr.f32.gmra.mrb[0].mxu0 %v863
    %v1054 = vpop.f32.mrb[0].mxu0
    %v1055 = vadd.f32 %v816, %v1054
    %v1056 = vpop.f32.mrb[0].mxu0
    %1057 = vmatprep.mubr.f32.mxu0 0.0
    %1058 = vmatmul.mubr.f32.gmra.mrb[0].mxu0 %v866
    %v1059 = vpop.f32.mrb[0].mxu0
    %v1060 = vadd.f32 %v816, %v1059
    %v1061 = vpop.f32.mrb[0].mxu0
    %1062 = vmatprep.mubr.f32.mxu0 0.0
    %1063 = vmatmul.mubr.f32.gmra.mrb[0].mxu0 %v869
    %v1064 = vpop.f32.mrb[0].mxu0
    %v1065 = vadd.f32 %v816, %v1064
    %v1066 = vpop.f32.mrb[0].mxu0
    %1067 = vmatprep.mubr.f32.mxu0 0.0
    %1068 = vmatmul.mubr.f32.gmra.mrb[0].mxu0 %v872
    %v1069 = vpop.f32.mrb[0].mxu0
    %v1070 = vadd.f32 %v816, %v1069
    %v1071 = vpop.f32.mrb[0].mxu0
    %1072 = vmatprep.mubr.f32.mxu0 0.0
    %1073 = vmatmul.mubr.f32.gmra.mrb[0].mxu0 %v875
    %v1074 = vpop.f32.mrb[0].mxu0
    %v1075 = vadd.f32 %v816, %v1074
    %v1076 = vpop.f32.mrb[0].mxu0
    %1077 = vmatprep.mubr.f32.mxu0 0.0
    %1078 = vmatmul.mubr.f32.gmra.mrb[0].mxu0 %v878
    %v1079 = vpop.f32.mrb[0].mxu0
    %v1080 = vadd.f32 %v816, %v1079
    %v1081 = vpop.f32.mrb[0].mxu0
    %1082 = vmatprep.mubr.f32.mxu0 0.0
    %1083 = vmatmul.mubr.f32.gmra.mrb[0].mxu0 %v881
    %v1084 = vpop.f32.mrb[0].mxu0
    %v1085 = vadd.f32 %v816, %v1084
    %v1086 = vpop.f32.mrb[0].mxu0
    %1087 = vmatprep.mubr.f32.mxu0 0.0
    %1088 = vmatmul.mubr.f32.gmra.mrb[0].mxu0 %v884
    %v1089 = vpop.f32.mrb[0].mxu0
    %v1090 = vadd.f32 %v816, %v1089
    %v1091 = vpop.f32.mrb[0].mxu0
    %1092 = vmatprep.mubr.f32.mxu0 0.0
    %1093 = vmatmul.mubr.f32.gmra.mrb[0].mxu0 %v887
    %v1094 = vpop.f32.mrb[0].mxu0
    %v1095 = vadd.f32 %v816, %v1094
    %v1096 = vpop.f32.mrb[0].mxu0
    %1097 = vmatprep.mubr.f32.mxu0 0.0
    %1098 = vmatmul.mubr.f32.gmra.mrb[0].mxu0 %v890
    %v1099 = vpop.f32.mrb[0].mxu0
    %v1100 = vadd.f32 %v816, %v1099
    %v1101 = vpop.f32.mrb[0].mxu0
    %1102 = vmatprep.mubr.f32.mxu0 0.0
    %1103 = vmatmul.mubr.f32.gmra.mrb[0].mxu0 %v893
    %v1104 = vpop.f32.mrb[0].mxu0
    %v1105 = vadd.f32 %v816, %v1104
    %v1106 = vpop.f32.mrb[0].mxu0
    %1107 = vmatprep.mubr.f32.mxu0 0.0
    %1108 = vmatmul.mubr.f32.gmra.mrb[0].mxu0 %v896
    %v1109 = vpop.f32.mrb[0].mxu0
    %v1110 = vadd.f32 %v816, %v1109
    %v1111 = vpop.f32.mrb[0].mxu0
    %1112 = vmatprep.mubr.f32.mxu0 0.0
    %1113 = vmatmul.mubr.f32.gmra.mrb[0].mxu0 %v899
    %v1114 = vpop.f32.mrb[0].mxu0
    %v1115 = vadd.f32 %v816, %v1114
    %v1116 = vpop.f32.mrb[0].mxu0
    %1117 = vmatprep.mubr.f32.mxu0 0.0
    %1118 = vmatmul.mubr.f32.gmra.mrb[0].mxu0 %v902
    %v1119 = vpop.f32.mrb[0].mxu0
    %v1120 = vadd.f32 %v816, %v1119
    %v1121 = vpop.f32.mrb[0].mxu0
    %1122 = vmatprep.mubr.f32.mxu0 0.0
    %1123 = vmatmul.mubr.f32.gmra.mrb[0].mxu0 %v905
    %v1124 = vpop.f32.mrb[0].mxu0
    %v1125 = vadd.f32 %v816, %v1124
    %v1126 = vpop.f32.mrb[0].mxu0
    %1127 = vmatprep.mubr.f32.mxu0 0.0
    %1128 = vmatmul.mubr.f32.gmra.mrb[0].mxu0 %v908
    %v1129 = vpop.f32.mrb[0].mxu0
    %v1130 = vadd.f32 %v816, %v1129
    %v1131 = vpop.f32.mrb[0].mxu0
    %1132 = vmatprep.mubr.f32.mxu0 0.0
    %1133 = vmatmul.mubr.f32.gmra.mrb[0].mxu0 %v911
    %v1134 = vpop.f32.mrb[0].mxu0
    %v1135 = vadd.f32 %v816, %v1134
    %v1136 = vpop.f32.mrb[0].mxu0
    %1137 = vdwg.mxu0
    %v1138 = vmax.f32 %v980, 0.0
    %v1139 = vmax.f32 %v985, 0.0
    %v1140 = vmax.f32 %v990, 0.0
    %v1141 = vmax.f32 %v995, 0.0
    %v1142 = vmax.f32 %v1000, 0.0
    %v1143 = vmax.f32 %v1005, 0.0
    %v1144 = vmax.f32 %v1010, 0.0
    %v1145 = vmax.f32 %v1015, 0.0
    %v1146 = vmax.f32 %v1020, 0.0
    %v1147 = vmax.f32 %v1025, 0.0
    %v1148 = vmax.f32 %v1030, 0.0
    %v1149 = vmax.f32 %v1035, 0.0
    %v1150 = vmax.f32 %v1040, 0.0
    %v1151 = vmax.f32 %v1045, 0.0
    %v1152 = vmax.f32 %v1050, 0.0
    %v1153 = vmax.f32 %v1055, 0.0
    %v1154 = vmax.f32 %v1060, 0.0
    %v1155 = vmax.f32 %v1065, 0.0
    %v1156 = vmax.f32 %v1070, 0.0
    %v1157 = vmax.f32 %v1075, 0.0
    %v1158 = vmax.f32 %v1080, 0.0
    %v1159 = vmax.f32 %v1085, 0.0
    %v1160 = vmax.f32 %v1090, 0.0
    %v1161 = vmax.f32 %v1095, 0.0
    %v1162 = vmax.f32 %v1100, 0.0
    %v1163 = vmax.f32 %v1105, 0.0
    %v1164 = vmax.f32 %v1110, 0.0
    %v1165 = vmax.f32 %v1115, 0.0
    %v1166 = vmax.f32 %v1120, 0.0
    %v1167 = vmax.f32 %v1125, 0.0
    %v1168 = vmax.f32 %v1130, 0.0
    %v1169 = vmax.f32 %v1135, 0.0
    %v1170 = vld [vmem:[%s6] sm:$0xff]
    %v1171 = vld [vmem:[%s6 + $0x8] sm:$0xff]
    %v1172 = vld [vmem:[%s6 + $0x10] sm:$0xff]
    %v1173 = vld [vmem:[%s6 + $0x18] sm:$0xff]
    %v1174 = vld [vmem:[%s6 + $0x20] sm:$0xff]
    %v1175 = vld [vmem:[%s6 + $0x28] sm:$0xff]
    %v1176 = vld [vmem:[%s6 + $0x30] sm:$0xff]
    %v1177 = vld [vmem:[%s6 + $0x38] sm:$0xff]
    %v1178 = vld [vmem:[%s6 + $0x40] sm:$0xff]
    %v1179 = vld [vmem:[%s6 + $0x48] sm:$0xff]
    %v1180 = vld [vmem:[%s6 + $0x50] sm:$0xff]
    %v1181 = vld [vmem:[%s6 + $0x58] sm:$0xff]
    %v1182 = vld [vmem:[%s6 + $0x60] sm:$0xff]
    %v1183 = vld [vmem:[%s6 + $0x68] sm:$0xff]
    %v1184 = vld [vmem:[%s6 + $0x70] sm:$0xff]
    %v1185 = vld [vmem:[%s6 + $0x78] sm:$0xff]
    %v1186 = vld [vmem:[%s6 + $0x80] sm:$0xff]
    %v1187 = vld [vmem:[%s6 + $0x88] sm:$0xff]
    %v1188 = vld [vmem:[%s6 + $0x90] sm:$0xff]
    %v1189 = vld [vmem:[%s6 + $0x98] sm:$0xff]
    %v1190 = vld [vmem:[%s6 + $0xa0] sm:$0xff]
    %v1191 = vld [vmem:[%s6 + $0xa8] sm:$0xff]
    %v1192 = vld [vmem:[%s6 + $0xb0] sm:$0xff]
    %v1193 = vld [vmem:[%s6 + $0xb8] sm:$0xff]
    %s1194 = scalar_lea.vmem %s8, 3
    %v1195 = vld [vmem:[%s1194] ss:$8 sm:$0x3]
    %v1197 = vlaneseq
    %v1198 = vshrl.u32 %v1197, 7
    %v1199 = vsub.s32 0, %v1198
    %v1200 = vrot.slane %v1195, %v1199
    %v1201 = vlaneseq
    %v1202 = vshrl.u32 %v1201, 7
    %v1203 = vsub.s32 1, %v1202
    %v1204 = vrot.slane %v1195, %v1203
    %v1208 = vsel %vm450, %v1138, 0
    %v1211 = vsel %vm450, %v1139, 0
    %v1214 = vsel %vm450, %v1140, 0
    %v1217 = vsel %vm450, %v1141, 0
    %v1220 = vsel %vm450, %v1142, 0
    %v1223 = vsel %vm450, %v1143, 0
    %v1226 = vsel %vm450, %v1144, 0
    %v1229 = vsel %vm450, %v1145, 0
    %v1232 = vsel %vm450, %v1146, 0
    %v1235 = vsel %vm450, %v1147, 0
    %v1238 = vsel %vm450, %v1148, 0
    %v1241 = vsel %vm450, %v1149, 0
    %v1244 = vsel %vm450, %v1150, 0
    %v1247 = vsel %vm450, %v1151, 0
    %v1250 = vsel %vm450, %v1152, 0
    %v1253 = vsel %vm450, %v1153, 0
    %v1256 = vsel %vm450, %v1154, 0
    %v1259 = vsel %vm450, %v1155, 0
    %v1262 = vsel %vm450, %v1156, 0
    %v1265 = vsel %vm450, %v1157, 0
    %v1268 = vsel %vm450, %v1158, 0
    %v1271 = vsel %vm450, %v1159, 0
    %v1274 = vsel %vm450, %v1160, 0
    %v1277 = vsel %vm450, %v1161, 0
    %v1280 = vsel %vm450, %v1162, 0
    %v1283 = vsel %vm450, %v1163, 0
    %v1286 = vsel %vm450, %v1164, 0
    %v1289 = vsel %vm450, %v1165, 0
    %v1292 = vsel %vm450, %v1166, 0
    %v1295 = vsel %vm450, %v1167, 0
    %v1298 = vsel %vm450, %v1168, 0
    %v1301 = vsel %vm450, %v1169, 0
    %1303 = vmatprep.subr.mxu0 %v1171
    %1304 = vmatpush1.msra.mxu0 %v1170
    %1305 = vmatprep.subr.mxu0 %v1173
    %1306 = vmatpush1.msra.mxu0 %v1172
    %1307 = vmatprep.subr.mxu0 %v1175
    %1308 = vmatpush1.msra.mxu0 %v1174
    %1309 = vmatprep.subr.mxu0 %v1177
    %1310 = vmatpush1.msra.mxu0 %v1176
    %1311 = vmatprep.subr.mxu0 %v1179
    %1312 = vmatpush1.msra.mxu0 %v1178
    %1313 = vmatprep.subr.mxu0 %v1181
    %1314 = vmatpush1.msra.mxu0 %v1180
    %1315 = vmatprep.subr.mxu0 %v1183
    %1316 = vmatpush1.msra.mxu0 %v1182
    %1317 = vmatprep.subr.mxu0 %v1185
    %1318 = vmatpush1.msra.mxu0 %v1184
    %1319 = vmatprep.subr.mxu0 %v1187
    %1320 = vmatpush1.msra.mxu0 %v1186
    %1321 = vmatprep.subr.mxu0 %v1189
    %1322 = vmatpush1.msra.mxu0 %v1188
    %1323 = vmatprep.subr.mxu0 %v1191
    %1324 = vmatpush1.msra.mxu0 %v1190
    %1325 = vmatprep.subr.mxu0 %v1193
    %1326 = vmatpush1.msra.mxu0 %v1192
    %1327 = vmatprep.subr.mxu0 0.0
    %1328 = vmatpush1.msra.mxu0 0.0
    %1329 = vmatprep.subr.mxu0 0.0
    %1330 = vmatpush1.msra.mxu0 0.0
    %1331 = vmatprep.subr.mxu0 0.0
    %1332 = vmatpush1.msra.mxu0 0.0
    %1333 = vmatprep.subr.mxu0 0.0
    %1334 = vmatpush1.msra.mxu0 0.0
    %1335 = vmatprep.subr.mxu0 0.0
    %1336 = vmatpush1.msra.mxu0 0.0
    %1337 = vmatprep.subr.mxu0 0.0
    %1338 = vmatpush1.msra.mxu0 0.0
    %1339 = vmatprep.subr.mxu0 0.0
    %1340 = vmatpush1.msra.mxu0 0.0
    %1341 = vmatprep.subr.mxu0 0.0
    %1342 = vmatpush1.msra.mxu0 0.0
    %1343 = vmatprep.subr.mxu0 0.0
    %1344 = vmatpush1.msra.mxu0 0.0
    %1345 = vmatprep.subr.mxu0 0.0
    %1346 = vmatpush1.msra.mxu0 0.0
    %1347 = vmatprep.subr.mxu0 0.0
    %1348 = vmatpush1.msra.mxu0 0.0
    %1349 = vmatprep.subr.mxu0 0.0
    %1350 = vmatpush1.msra.mxu0 0.0
    %1351 = vmatprep.subr.mxu0 0.0
    %1352 = vmatpush1.msra.mxu0 0.0
    %1353 = vmatprep.subr.mxu0 0.0
    %1354 = vmatpush1.msra.mxu0 0.0
    %1355 = vmatprep.subr.mxu0 0.0
    %1356 = vmatpush1.msra.mxu0 0.0
    %1357 = vmatprep.subr.mxu0 0.0
    %1358 = vmatpush1.msra.mxu0 0.0
    %1359 = vmatprep.subr.mxu0 0.0
    %1360 = vmatpush1.msra.mxu0 0.0
    %1361 = vmatprep.subr.mxu0 0.0
    %1362 = vmatpush1.msra.mxu0 0.0
    %1363 = vmatprep.subr.mxu0 0.0
    %1364 = vmatpush1.msra.mxu0 0.0
    %1365 = vmatprep.subr.mxu0 0.0
    %1366 = vmatpush1.msra.mxu0 0.0
    %1367 = vmatprep.mubr.f32.mxu0 0.0
    %1368 = vmatmul.mubr.f32.gmra.mrb[0].mxu0 %v1208
    %v1369 = vpop.f32.mrb[0].mxu0
    %v1370 = vadd.f32 %v1200, %v1369
    %v1371 = vpop.f32.mrb[0].mxu0
    %v1372 = vadd.f32 %v1204, %v1371
    %1373 = vmatprep.mubr.f32.mxu0 0.0
    %1374 = vmatmul.mubr.f32.gmra.mrb[0].mxu0 %v1211
    %v1375 = vpop.f32.mrb[0].mxu0
    %v1376 = vadd.f32 %v1200, %v1375
    %v1377 = vpop.f32.mrb[0].mxu0
    %v1378 = vadd.f32 %v1204, %v1377
    %1379 = vmatprep.mubr.f32.mxu0 0.0
    %1380 = vmatmul.mubr.f32.gmra.mrb[0].mxu0 %v1214
    %v1381 = vpop.f32.mrb[0].mxu0
    %v1382 = vadd.f32 %v1200, %v1381
    %v1383 = vpop.f32.mrb[0].mxu0
    %v1384 = vadd.f32 %v1204, %v1383
    %1385 = vmatprep.mubr.f32.mxu0 0.0
    %1386 = vmatmul.mubr.f32.gmra.mrb[0].mxu0 %v1217
    %v1387 = vpop.f32.mrb[0].mxu0
    %v1388 = vadd.f32 %v1200, %v1387
    %v1389 = vpop.f32.mrb[0].mxu0
    %v1390 = vadd.f32 %v1204, %v1389
    %1391 = vmatprep.mubr.f32.mxu0 0.0
    %1392 = vmatmul.mubr.f32.gmra.mrb[0].mxu0 %v1220
    %v1393 = vpop.f32.mrb[0].mxu0
    %v1394 = vadd.f32 %v1200, %v1393
    %v1395 = vpop.f32.mrb[0].mxu0
    %v1396 = vadd.f32 %v1204, %v1395
    %1397 = vmatprep.mubr.f32.mxu0 0.0
    %1398 = vmatmul.mubr.f32.gmra.mrb[0].mxu0 %v1223
    %v1399 = vpop.f32.mrb[0].mxu0
    %v1400 = vadd.f32 %v1200, %v1399
    %v1401 = vpop.f32.mrb[0].mxu0
    %v1402 = vadd.f32 %v1204, %v1401
    %1403 = vmatprep.mubr.f32.mxu0 0.0
    %1404 = vmatmul.mubr.f32.gmra.mrb[0].mxu0 %v1226
    %v1405 = vpop.f32.mrb[0].mxu0
    %v1406 = vadd.f32 %v1200, %v1405
    %v1407 = vpop.f32.mrb[0].mxu0
    %v1408 = vadd.f32 %v1204, %v1407
    %1409 = vmatprep.mubr.f32.mxu0 0.0
    %1410 = vmatmul.mubr.f32.gmra.mrb[0].mxu0 %v1229
    %v1411 = vpop.f32.mrb[0].mxu0
    %v1412 = vadd.f32 %v1200, %v1411
    %v1413 = vpop.f32.mrb[0].mxu0
    %v1414 = vadd.f32 %v1204, %v1413
    %1415 = vmatprep.mubr.f32.mxu0 0.0
    %1416 = vmatmul.mubr.f32.gmra.mrb[0].mxu0 %v1232
    %v1417 = vpop.f32.mrb[0].mxu0
    %v1418 = vadd.f32 %v1200, %v1417
    %v1419 = vpop.f32.mrb[0].mxu0
    %v1420 = vadd.f32 %v1204, %v1419
    %1421 = vmatprep.mubr.f32.mxu0 0.0
    %1422 = vmatmul.mubr.f32.gmra.mrb[0].mxu0 %v1235
    %v1423 = vpop.f32.mrb[0].mxu0
    %v1424 = vadd.f32 %v1200, %v1423
    %v1425 = vpop.f32.mrb[0].mxu0
    %v1426 = vadd.f32 %v1204, %v1425
    %1427 = vmatprep.mubr.f32.mxu0 0.0
    %1428 = vmatmul.mubr.f32.gmra.mrb[0].mxu0 %v1238
    %v1429 = vpop.f32.mrb[0].mxu0
    %v1430 = vadd.f32 %v1200, %v1429
    %v1431 = vpop.f32.mrb[0].mxu0
    %v1432 = vadd.f32 %v1204, %v1431
    %1433 = vmatprep.mubr.f32.mxu0 0.0
    %1434 = vmatmul.mubr.f32.gmra.mrb[0].mxu0 %v1241
    %v1435 = vpop.f32.mrb[0].mxu0
    %v1436 = vadd.f32 %v1200, %v1435
    %v1437 = vpop.f32.mrb[0].mxu0
    %v1438 = vadd.f32 %v1204, %v1437
    %1439 = vmatprep.mubr.f32.mxu0 0.0
    %1440 = vmatmul.mubr.f32.gmra.mrb[0].mxu0 %v1244
    %v1441 = vpop.f32.mrb[0].mxu0
    %v1442 = vadd.f32 %v1200, %v1441
    %v1443 = vpop.f32.mrb[0].mxu0
    %v1444 = vadd.f32 %v1204, %v1443
    %1445 = vmatprep.mubr.f32.mxu0 0.0
    %1446 = vmatmul.mubr.f32.gmra.mrb[0].mxu0 %v1247
    %v1447 = vpop.f32.mrb[0].mxu0
    %v1448 = vadd.f32 %v1200, %v1447
    %v1449 = vpop.f32.mrb[0].mxu0
    %v1450 = vadd.f32 %v1204, %v1449
    %1451 = vmatprep.mubr.f32.mxu0 0.0
    %1452 = vmatmul.mubr.f32.gmra.mrb[0].mxu0 %v1250
    %v1453 = vpop.f32.mrb[0].mxu0
    %v1454 = vadd.f32 %v1200, %v1453
    %v1455 = vpop.f32.mrb[0].mxu0
    %v1456 = vadd.f32 %v1204, %v1455
    %1457 = vmatprep.mubr.f32.mxu0 0.0
    %1458 = vmatmul.mubr.f32.gmra.mrb[0].mxu0 %v1253
    %v1459 = vpop.f32.mrb[0].mxu0
    %v1460 = vadd.f32 %v1200, %v1459
    %v1461 = vpop.f32.mrb[0].mxu0
    %v1462 = vadd.f32 %v1204, %v1461
    %1463 = vmatprep.mubr.f32.mxu0 0.0
    %1464 = vmatmul.mubr.f32.gmra.mrb[0].mxu0 %v1256
    %v1465 = vpop.f32.mrb[0].mxu0
    %v1466 = vadd.f32 %v1200, %v1465
    %v1467 = vpop.f32.mrb[0].mxu0
    %v1468 = vadd.f32 %v1204, %v1467
    %1469 = vmatprep.mubr.f32.mxu0 0.0
    %1470 = vmatmul.mubr.f32.gmra.mrb[0].mxu0 %v1259
    %v1471 = vpop.f32.mrb[0].mxu0
    %v1472 = vadd.f32 %v1200, %v1471
    %v1473 = vpop.f32.mrb[0].mxu0
    %v1474 = vadd.f32 %v1204, %v1473
    %1475 = vmatprep.mubr.f32.mxu0 0.0
    %1476 = vmatmul.mubr.f32.gmra.mrb[0].mxu0 %v1262
    %v1477 = vpop.f32.mrb[0].mxu0
    %v1478 = vadd.f32 %v1200, %v1477
    %v1479 = vpop.f32.mrb[0].mxu0
    %v1480 = vadd.f32 %v1204, %v1479
    %1481 = vmatprep.mubr.f32.mxu0 0.0
    %1482 = vmatmul.mubr.f32.gmra.mrb[0].mxu0 %v1265
    %v1483 = vpop.f32.mrb[0].mxu0
    %v1484 = vadd.f32 %v1200, %v1483
    %v1485 = vpop.f32.mrb[0].mxu0
    %v1486 = vadd.f32 %v1204, %v1485
    %1487 = vmatprep.mubr.f32.mxu0 0.0
    %1488 = vmatmul.mubr.f32.gmra.mrb[0].mxu0 %v1268
    %v1489 = vpop.f32.mrb[0].mxu0
    %v1490 = vadd.f32 %v1200, %v1489
    %v1491 = vpop.f32.mrb[0].mxu0
    %v1492 = vadd.f32 %v1204, %v1491
    %1493 = vmatprep.mubr.f32.mxu0 0.0
    %1494 = vmatmul.mubr.f32.gmra.mrb[0].mxu0 %v1271
    %v1495 = vpop.f32.mrb[0].mxu0
    %v1496 = vadd.f32 %v1200, %v1495
    %v1497 = vpop.f32.mrb[0].mxu0
    %v1498 = vadd.f32 %v1204, %v1497
    %1499 = vmatprep.mubr.f32.mxu0 0.0
    %1500 = vmatmul.mubr.f32.gmra.mrb[0].mxu0 %v1274
    %v1501 = vpop.f32.mrb[0].mxu0
    %v1502 = vadd.f32 %v1200, %v1501
    %v1503 = vpop.f32.mrb[0].mxu0
    %v1504 = vadd.f32 %v1204, %v1503
    %1505 = vmatprep.mubr.f32.mxu0 0.0
    %1506 = vmatmul.mubr.f32.gmra.mrb[0].mxu0 %v1277
    %v1507 = vpop.f32.mrb[0].mxu0
    %v1508 = vadd.f32 %v1200, %v1507
    %v1509 = vpop.f32.mrb[0].mxu0
    %v1510 = vadd.f32 %v1204, %v1509
    %1511 = vmatprep.mubr.f32.mxu0 0.0
    %1512 = vmatmul.mubr.f32.gmra.mrb[0].mxu0 %v1280
    %v1513 = vpop.f32.mrb[0].mxu0
    %v1514 = vadd.f32 %v1200, %v1513
    %v1515 = vpop.f32.mrb[0].mxu0
    %v1516 = vadd.f32 %v1204, %v1515
    %1517 = vmatprep.mubr.f32.mxu0 0.0
    %1518 = vmatmul.mubr.f32.gmra.mrb[0].mxu0 %v1283
    %v1519 = vpop.f32.mrb[0].mxu0
    %v1520 = vadd.f32 %v1200, %v1519
    %v1521 = vpop.f32.mrb[0].mxu0
    %v1522 = vadd.f32 %v1204, %v1521
    %1523 = vmatprep.mubr.f32.mxu0 0.0
    %1524 = vmatmul.mubr.f32.gmra.mrb[0].mxu0 %v1286
    %v1525 = vpop.f32.mrb[0].mxu0
    %v1526 = vadd.f32 %v1200, %v1525
    %v1527 = vpop.f32.mrb[0].mxu0
    %v1528 = vadd.f32 %v1204, %v1527
    %1529 = vmatprep.mubr.f32.mxu0 0.0
    %1530 = vmatmul.mubr.f32.gmra.mrb[0].mxu0 %v1289
    %v1531 = vpop.f32.mrb[0].mxu0
    %v1532 = vadd.f32 %v1200, %v1531
    %v1533 = vpop.f32.mrb[0].mxu0
    %v1534 = vadd.f32 %v1204, %v1533
    %1535 = vmatprep.mubr.f32.mxu0 0.0
    %1536 = vmatmul.mubr.f32.gmra.mrb[0].mxu0 %v1292
    %v1537 = vpop.f32.mrb[0].mxu0
    %v1538 = vadd.f32 %v1200, %v1537
    %v1539 = vpop.f32.mrb[0].mxu0
    %v1540 = vadd.f32 %v1204, %v1539
    %1541 = vmatprep.mubr.f32.mxu0 0.0
    %1542 = vmatmul.mubr.f32.gmra.mrb[0].mxu0 %v1295
    %v1543 = vpop.f32.mrb[0].mxu0
    %v1544 = vadd.f32 %v1200, %v1543
    %v1545 = vpop.f32.mrb[0].mxu0
    %v1546 = vadd.f32 %v1204, %v1545
    %1547 = vmatprep.mubr.f32.mxu0 0.0
    %1548 = vmatmul.mubr.f32.gmra.mrb[0].mxu0 %v1298
    %v1549 = vpop.f32.mrb[0].mxu0
    %v1550 = vadd.f32 %v1200, %v1549
    %v1551 = vpop.f32.mrb[0].mxu0
    %v1552 = vadd.f32 %v1204, %v1551
    %1553 = vmatprep.mubr.f32.mxu0 0.0
    %1554 = vmatmul.mubr.f32.gmra.mrb[0].mxu0 %v1301
    %v1555 = vpop.f32.mrb[0].mxu0
    %v1556 = vadd.f32 %v1200, %v1555
    %v1557 = vpop.f32.mrb[0].mxu0
    %v1558 = vadd.f32 %v1204, %v1557
    %1559 = vdwg.mxu0
    %v1560 = vmax.f32 %v1370, 0.0
    %v1561 = vmax.f32 %v1372, 0.0
    %v1562 = vmax.f32 %v1376, 0.0
    %v1563 = vmax.f32 %v1378, 0.0
    %v1564 = vmax.f32 %v1382, 0.0
    %v1565 = vmax.f32 %v1384, 0.0
    %v1566 = vmax.f32 %v1388, 0.0
    %v1567 = vmax.f32 %v1390, 0.0
    %v1568 = vmax.f32 %v1394, 0.0
    %v1569 = vmax.f32 %v1396, 0.0
    %v1570 = vmax.f32 %v1400, 0.0
    %v1571 = vmax.f32 %v1402, 0.0
    %v1572 = vmax.f32 %v1406, 0.0
    %v1573 = vmax.f32 %v1408, 0.0
    %v1574 = vmax.f32 %v1412, 0.0
    %v1575 = vmax.f32 %v1414, 0.0
    %v1576 = vmax.f32 %v1418, 0.0
    %v1577 = vmax.f32 %v1420, 0.0
    %v1578 = vmax.f32 %v1424, 0.0
    %v1579 = vmax.f32 %v1426, 0.0
    %v1580 = vmax.f32 %v1430, 0.0
    %v1581 = vmax.f32 %v1432, 0.0
    %v1582 = vmax.f32 %v1436, 0.0
    %v1583 = vmax.f32 %v1438, 0.0
    %v1584 = vmax.f32 %v1442, 0.0
    %v1585 = vmax.f32 %v1444, 0.0
    %v1586 = vmax.f32 %v1448, 0.0
    %v1587 = vmax.f32 %v1450, 0.0
    %v1588 = vmax.f32 %v1454, 0.0
    %v1589 = vmax.f32 %v1456, 0.0
    %v1590 = vmax.f32 %v1460, 0.0
    %v1591 = vmax.f32 %v1462, 0.0
    %v1592 = vmax.f32 %v1466, 0.0
    %v1593 = vmax.f32 %v1468, 0.0
    %v1594 = vmax.f32 %v1472, 0.0
    %v1595 = vmax.f32 %v1474, 0.0
    %v1596 = vmax.f32 %v1478, 0.0
    %v1597 = vmax.f32 %v1480, 0.0
    %v1598 = vmax.f32 %v1484, 0.0
    %v1599 = vmax.f32 %v1486, 0.0
    %v1600 = vmax.f32 %v1490, 0.0
    %v1601 = vmax.f32 %v1492, 0.0
    %v1602 = vmax.f32 %v1496, 0.0
    %v1603 = vmax.f32 %v1498, 0.0
    %v1604 = vmax.f32 %v1502, 0.0
    %v1605 = vmax.f32 %v1504, 0.0
    %v1606 = vmax.f32 %v1508, 0.0
    %v1607 = vmax.f32 %v1510, 0.0
    %v1608 = vmax.f32 %v1514, 0.0
    %v1609 = vmax.f32 %v1516, 0.0
    %v1610 = vmax.f32 %v1520, 0.0
    %v1611 = vmax.f32 %v1522, 0.0
    %v1612 = vmax.f32 %v1526, 0.0
    %v1613 = vmax.f32 %v1528, 0.0
    %v1614 = vmax.f32 %v1532, 0.0
    %v1615 = vmax.f32 %v1534, 0.0
    %v1616 = vmax.f32 %v1538, 0.0
    %v1617 = vmax.f32 %v1540, 0.0
    %v1618 = vmax.f32 %v1544, 0.0
    %v1619 = vmax.f32 %v1546, 0.0
    %v1620 = vmax.f32 %v1550, 0.0
    %v1621 = vmax.f32 %v1552, 0.0
    %v1622 = vmax.f32 %v1556, 0.0
    %v1623 = vmax.f32 %v1558, 0.0
    %v1624 = vld [vmem:[%s7] sm:$0xff]
    %v1625 = vld [vmem:[%s7 + $0x8] sm:$0xff]
    %v1626 = vld [vmem:[%s7 + $0x10] sm:$0xff]
    %v1627 = vld [vmem:[%s7 + $0x18] sm:$0xff]
    %v1628 = vld [vmem:[%s7 + $0x20] sm:$0xff]
    %v1629 = vld [vmem:[%s7 + $0x28] sm:$0xff]
    %v1630 = vld [vmem:[%s7 + $0x30] sm:$0xff]
    %v1631 = vld [vmem:[%s7 + $0x38] sm:$0xff]
    %v1632 = vld [vmem:[%s7 + $0x40] sm:$0xff]
    %v1633 = vld [vmem:[%s7 + $0x48] sm:$0xff]
    %v1634 = vld [vmem:[%s7 + $0x50] sm:$0xff]
    %v1635 = vld [vmem:[%s7 + $0x58] sm:$0xff]
    %v1636 = vld [vmem:[%s7 + $0x60] sm:$0xff]
    %v1637 = vld [vmem:[%s7 + $0x68] sm:$0xff]
    %v1638 = vld [vmem:[%s7 + $0x70] sm:$0xff]
    %v1639 = vld [vmem:[%s7 + $0x78] sm:$0xff]
    %v1640 = vld [vmem:[%s7 + $0x80] sm:$0xff]
    %v1641 = vld [vmem:[%s7 + $0x88] sm:$0xff]
    %v1642 = vld [vmem:[%s7 + $0x90] sm:$0xff]
    %v1643 = vld [vmem:[%s7 + $0x98] sm:$0xff]
    %v1644 = vld [vmem:[%s7 + $0xa0] sm:$0xff]
    %v1645 = vld [vmem:[%s7 + $0xa8] sm:$0xff]
    %v1646 = vld [vmem:[%s7 + $0xb0] sm:$0xff]
    %v1647 = vld [vmem:[%s7 + $0xb8] sm:$0xff]
    %v1648 = vld [vmem:[%s7 + $0xc0] sm:$0xff]
    %v1649 = vld [vmem:[%s7 + $0xc8] sm:$0xff]
    %v1650 = vld [vmem:[%s7 + $0xd0] sm:$0xff]
    %v1651 = vld [vmem:[%s7 + $0xd8] sm:$0xff]
    %v1652 = vld [vmem:[%s7 + $0xe0] sm:$0xff]
    %v1653 = vld [vmem:[%s7 + $0xe8] sm:$0xff]
    %v1654 = vld [vmem:[%s7 + $0xf0] sm:$0xff]
    %v1655 = vld [vmem:[%s7 + $0xf8] sm:$0xff]
    %v1656 = vld [vmem:[%s7 + $0x100] sm:$0xff]
    %v1657 = vld [vmem:[%s7 + $0x108] sm:$0xff]
    %v1658 = vld [vmem:[%s7 + $0x110] sm:$0xff]
    %v1659 = vld [vmem:[%s7 + $0x118] sm:$0xff]
    %v1660 = vld [vmem:[%s7 + $0x120] sm:$0xff]
    %v1661 = vld [vmem:[%s7 + $0x128] sm:$0xff]
    %v1662 = vld [vmem:[%s7 + $0x130] sm:$0xff]
    %v1663 = vld [vmem:[%s7 + $0x138] sm:$0xff]
    %v1664 = vld [vmem:[%s7 + $0x140] sm:$0xff]
    %v1665 = vld [vmem:[%s7 + $0x148] sm:$0xff]
    %v1666 = vld [vmem:[%s7 + $0x150] sm:$0xff]
    %v1667 = vld [vmem:[%s7 + $0x158] sm:$0xff]
    %v1668 = vld [vmem:[%s7 + $0x160] sm:$0xff]
    %v1669 = vld [vmem:[%s7 + $0x168] sm:$0xff]
    %v1670 = vld [vmem:[%s7 + $0x170] sm:$0xff]
    %v1671 = vld [vmem:[%s7 + $0x178] sm:$0xff]
    %s1672 = scalar_lea.vmem %s8, 4
    %v1673 = vld [vmem:[%s1672] ss:$8 sm:$0x3]
    %v1675 = vlaneseq
    %v1676 = vshrl.u32 %v1675, 7
    %v1677 = vsub.s32 0, %v1676
    %v1678 = vrot.slane %v1673, %v1677
    %v1679 = vlaneseq
    %v1680 = vshrl.u32 %v1679, 7
    %v1681 = vsub.s32 1, %v1680
    %v1682 = vrot.slane %v1673, %v1681
    %vm1685 = vcmask 523264
    %v1687 = vsel %vm1685, %v1561, 0
    %v1690 = vsel %vm1685, %v1563, 0
    %v1693 = vsel %vm1685, %v1565, 0
    %v1696 = vsel %vm1685, %v1567, 0
    %v1699 = vsel %vm1685, %v1569, 0
    %v1702 = vsel %vm1685, %v1571, 0
    %v1705 = vsel %vm1685, %v1573, 0
    %v1708 = vsel %vm1685, %v1575, 0
    %v1711 = vsel %vm1685, %v1577, 0
    %v1714 = vsel %vm1685, %v1579, 0
    %v1717 = vsel %vm1685, %v1581, 0
    %v1720 = vsel %vm1685, %v1583, 0
    %v1723 = vsel %vm1685, %v1585, 0
    %v1726 = vsel %vm1685, %v1587, 0
    %v1729 = vsel %vm1685, %v1589, 0
    %v1732 = vsel %vm1685, %v1591, 0
    %v1735 = vsel %vm1685, %v1593, 0
    %v1738 = vsel %vm1685, %v1595, 0
    %v1741 = vsel %vm1685, %v1597, 0
    %v1744 = vsel %vm1685, %v1599, 0
    %v1747 = vsel %vm1685, %v1601, 0
    %v1750 = vsel %vm1685, %v1603, 0
    %v1753 = vsel %vm1685, %v1605, 0
    %v1756 = vsel %vm1685, %v1607, 0
    %v1759 = vsel %vm1685, %v1609, 0
    %v1762 = vsel %vm1685, %v1611, 0
    %v1765 = vsel %vm1685, %v1613, 0
    %v1768 = vsel %vm1685, %v1615, 0
    %v1771 = vsel %vm1685, %v1617, 0
    %v1774 = vsel %vm1685, %v1619, 0
    %v1777 = vsel %vm1685, %v1621, 0
    %v1780 = vsel %vm1685, %v1623, 0
    %1782 = vmatprep.subr.mxu0 %v1625
    %1783 = vmatpush1.msra.mxu0 %v1624
    %1784 = vmatprep.subr.mxu0 %v1627
    %1785 = vmatpush1.msra.mxu0 %v1626
    %1786 = vmatprep.subr.mxu0 %v1629
    %1787 = vmatpush1.msra.mxu0 %v1628
    %1788 = vmatprep.subr.mxu0 %v1631
    %1789 = vmatpush1.msra.mxu0 %v1630
    %1790 = vmatprep.subr.mxu0 %v1633
    %1791 = vmatpush1.msra.mxu0 %v1632
    %1792 = vmatprep.subr.mxu0 %v1635
    %1793 = vmatpush1.msra.mxu0 %v1634
    %1794 = vmatprep.subr.mxu0 %v1637
    %1795 = vmatpush1.msra.mxu0 %v1636
    %1796 = vmatprep.subr.mxu0 %v1639
    %1797 = vmatpush1.msra.mxu0 %v1638
    %1798 = vmatprep.subr.mxu0 %v1641
    %1799 = vmatpush1.msra.mxu0 %v1640
    %1800 = vmatprep.subr.mxu0 %v1643
    %1801 = vmatpush1.msra.mxu0 %v1642
    %1802 = vmatprep.subr.mxu0 %v1645
    %1803 = vmatpush1.msra.mxu0 %v1644
    %1804 = vmatprep.subr.mxu0 %v1647
    %1805 = vmatpush1.msra.mxu0 %v1646
    %1806 = vmatprep.subr.mxu0 %v1649
    %1807 = vmatpush1.msra.mxu0 %v1648
    %1808 = vmatprep.subr.mxu0 %v1651
    %1809 = vmatpush1.msra.mxu0 %v1650
    %1810 = vmatprep.subr.mxu0 %v1653
    %1811 = vmatpush1.msra.mxu0 %v1652
    %1812 = vmatprep.subr.mxu0 %v1655
    %1813 = vmatpush1.msra.mxu0 %v1654
    %1814 = vmatprep.subr.mxu0 %v1657
    %1815 = vmatpush1.msra.mxu0 %v1656
    %1816 = vmatprep.subr.mxu0 %v1659
    %1817 = vmatpush1.msra.mxu0 %v1658
    %1818 = vmatprep.subr.mxu0 %v1661
    %1819 = vmatpush1.msra.mxu0 %v1660
    %1820 = vmatprep.subr.mxu0 %v1663
    %1821 = vmatpush1.msra.mxu0 %v1662
    %1822 = vmatprep.subr.mxu0 %v1665
    %1823 = vmatpush1.msra.mxu0 %v1664
    %1824 = vmatprep.subr.mxu0 %v1667
    %1825 = vmatpush1.msra.mxu0 %v1666
    %1826 = vmatprep.subr.mxu0 %v1669
    %1827 = vmatpush1.msra.mxu0 %v1668
    %1828 = vmatprep.subr.mxu0 %v1671
    %1829 = vmatpush1.msra.mxu0 %v1670
    %1830 = vmatprep.subr.mxu0 0.0
    %1831 = vmatpush1.msra.mxu0 0.0
    %1832 = vmatprep.subr.mxu0 0.0
    %1833 = vmatpush1.msra.mxu0 0.0
    %1834 = vmatprep.subr.mxu0 0.0
    %1835 = vmatpush1.msra.mxu0 0.0
    %1836 = vmatprep.subr.mxu0 0.0
    %1837 = vmatpush1.msra.mxu0 0.0
    %1838 = vmatprep.subr.mxu0 0.0
    %1839 = vmatpush1.msra.mxu0 0.0
    %1840 = vmatprep.subr.mxu0 0.0
    %1841 = vmatpush1.msra.mxu0 0.0
    %1842 = vmatprep.subr.mxu0 0.0
    %1843 = vmatpush1.msra.mxu0 0.0
    %1844 = vmatprep.subr.mxu0 0.0
    %1845 = vmatpush1.msra.mxu0 0.0
    %1846 = vmatprep.mubr.f32.mxu0 %v1687
    %1847 = vmatmul.mubr.f32.gmra.mrb[0].mxu0 %v1560
    %v1848 = vpop.f32.mrb[0].mxu0
    %v1849 = vadd.f32 %v1678, %v1848
    %v1850 = vpop.f32.mrb[0].mxu0
    %v1851 = vadd.f32 %v1682, %v1850
    %1852 = vmatprep.mubr.f32.mxu0 %v1690
    %1853 = vmatmul.mubr.f32.gmra.mrb[0].mxu0 %v1562
    %v1854 = vpop.f32.mrb[0].mxu0
    %v1855 = vadd.f32 %v1678, %v1854
    %v1856 = vpop.f32.mrb[0].mxu0
    %v1857 = vadd.f32 %v1682, %v1856
    %1858 = vmatprep.mubr.f32.mxu0 %v1693
    %1859 = vmatmul.mubr.f32.gmra.mrb[0].mxu0 %v1564
    %v1860 = vpop.f32.mrb[0].mxu0
    %v1861 = vadd.f32 %v1678, %v1860
    %v1862 = vpop.f32.mrb[0].mxu0
    %v1863 = vadd.f32 %v1682, %v1862
    %1864 = vmatprep.mubr.f32.mxu0 %v1696
    %1865 = vmatmul.mubr.f32.gmra.mrb[0].mxu0 %v1566
    %v1866 = vpop.f32.mrb[0].mxu0
    %v1867 = vadd.f32 %v1678, %v1866
    %v1868 = vpop.f32.mrb[0].mxu0
    %v1869 = vadd.f32 %v1682, %v1868
    %1870 = vmatprep.mubr.f32.mxu0 %v1699
    %1871 = vmatmul.mubr.f32.gmra.mrb[0].mxu0 %v1568
    %v1872 = vpop.f32.mrb[0].mxu0
    %v1873 = vadd.f32 %v1678, %v1872
    %v1874 = vpop.f32.mrb[0].mxu0
    %v1875 = vadd.f32 %v1682, %v1874
    %1876 = vmatprep.mubr.f32.mxu0 %v1702
    %1877 = vmatmul.mubr.f32.gmra.mrb[0].mxu0 %v1570
    %v1878 = vpop.f32.mrb[0].mxu0
    %v1879 = vadd.f32 %v1678, %v1878
    %v1880 = vpop.f32.mrb[0].mxu0
    %v1881 = vadd.f32 %v1682, %v1880
    %1882 = vmatprep.mubr.f32.mxu0 %v1705
    %1883 = vmatmul.mubr.f32.gmra.mrb[0].mxu0 %v1572
    %v1884 = vpop.f32.mrb[0].mxu0
    %v1885 = vadd.f32 %v1678, %v1884
    %v1886 = vpop.f32.mrb[0].mxu0
    %v1887 = vadd.f32 %v1682, %v1886
    %1888 = vmatprep.mubr.f32.mxu0 %v1708
    %1889 = vmatmul.mubr.f32.gmra.mrb[0].mxu0 %v1574
    %v1890 = vpop.f32.mrb[0].mxu0
    %v1891 = vadd.f32 %v1678, %v1890
    %v1892 = vpop.f32.mrb[0].mxu0
    %v1893 = vadd.f32 %v1682, %v1892
    %1894 = vmatprep.mubr.f32.mxu0 %v1711
    %1895 = vmatmul.mubr.f32.gmra.mrb[0].mxu0 %v1576
    %v1896 = vpop.f32.mrb[0].mxu0
    %v1897 = vadd.f32 %v1678, %v1896
    %v1898 = vpop.f32.mrb[0].mxu0
    %v1899 = vadd.f32 %v1682, %v1898
    %1900 = vmatprep.mubr.f32.mxu0 %v1714
    %1901 = vmatmul.mubr.f32.gmra.mrb[0].mxu0 %v1578
    %v1902 = vpop.f32.mrb[0].mxu0
    %v1903 = vadd.f32 %v1678, %v1902
    %v1904 = vpop.f32.mrb[0].mxu0
    %v1905 = vadd.f32 %v1682, %v1904
    %1906 = vmatprep.mubr.f32.mxu0 %v1717
    %1907 = vmatmul.mubr.f32.gmra.mrb[0].mxu0 %v1580
    %v1908 = vpop.f32.mrb[0].mxu0
    %v1909 = vadd.f32 %v1678, %v1908
    %v1910 = vpop.f32.mrb[0].mxu0
    %v1911 = vadd.f32 %v1682, %v1910
    %1912 = vmatprep.mubr.f32.mxu0 %v1720
    %1913 = vmatmul.mubr.f32.gmra.mrb[0].mxu0 %v1582
    %v1914 = vpop.f32.mrb[0].mxu0
    %v1915 = vadd.f32 %v1678, %v1914
    %v1916 = vpop.f32.mrb[0].mxu0
    %v1917 = vadd.f32 %v1682, %v1916
    %1918 = vmatprep.mubr.f32.mxu0 %v1723
    %1919 = vmatmul.mubr.f32.gmra.mrb[0].mxu0 %v1584
    %v1920 = vpop.f32.mrb[0].mxu0
    %v1921 = vadd.f32 %v1678, %v1920
    %v1922 = vpop.f32.mrb[0].mxu0
    %v1923 = vadd.f32 %v1682, %v1922
    %1924 = vmatprep.mubr.f32.mxu0 %v1726
    %1925 = vmatmul.mubr.f32.gmra.mrb[0].mxu0 %v1586
    %v1926 = vpop.f32.mrb[0].mxu0
    %v1927 = vadd.f32 %v1678, %v1926
    %v1928 = vpop.f32.mrb[0].mxu0
    %v1929 = vadd.f32 %v1682, %v1928
    %1930 = vmatprep.mubr.f32.mxu0 %v1729
    %1931 = vmatmul.mubr.f32.gmra.mrb[0].mxu0 %v1588
    %v1932 = vpop.f32.mrb[0].mxu0
    %v1933 = vadd.f32 %v1678, %v1932
    %v1934 = vpop.f32.mrb[0].mxu0
    %v1935 = vadd.f32 %v1682, %v1934
    %1936 = vmatprep.mubr.f32.mxu0 %v1732
    %1937 = vmatmul.mubr.f32.gmra.mrb[0].mxu0 %v1590
    %v1938 = vpop.f32.mrb[0].mxu0
    %v1939 = vadd.f32 %v1678, %v1938
    %v1940 = vpop.f32.mrb[0].mxu0
    %v1941 = vadd.f32 %v1682, %v1940
    %1942 = vmatprep.mubr.f32.mxu0 %v1735
    %1943 = vmatmul.mubr.f32.gmra.mrb[0].mxu0 %v1592
    %v1944 = vpop.f32.mrb[0].mxu0
    %v1945 = vadd.f32 %v1678, %v1944
    %v1946 = vpop.f32.mrb[0].mxu0
    %v1947 = vadd.f32 %v1682, %v1946
    %1948 = vmatprep.mubr.f32.mxu0 %v1738
    %1949 = vmatmul.mubr.f32.gmra.mrb[0].mxu0 %v1594
    %v1950 = vpop.f32.mrb[0].mxu0
    %v1951 = vadd.f32 %v1678, %v1950
    %v1952 = vpop.f32.mrb[0].mxu0
    %v1953 = vadd.f32 %v1682, %v1952
    %1954 = vmatprep.mubr.f32.mxu0 %v1741
    %1955 = vmatmul.mubr.f32.gmra.mrb[0].mxu0 %v1596
    %v1956 = vpop.f32.mrb[0].mxu0
    %v1957 = vadd.f32 %v1678, %v1956
    %v1958 = vpop.f32.mrb[0].mxu0
    %v1959 = vadd.f32 %v1682, %v1958
    %1960 = vmatprep.mubr.f32.mxu0 %v1744
    %1961 = vmatmul.mubr.f32.gmra.mrb[0].mxu0 %v1598
    %v1962 = vpop.f32.mrb[0].mxu0
    %v1963 = vadd.f32 %v1678, %v1962
    %v1964 = vpop.f32.mrb[0].mxu0
    %v1965 = vadd.f32 %v1682, %v1964
    %1966 = vmatprep.mubr.f32.mxu0 %v1747
    %1967 = vmatmul.mubr.f32.gmra.mrb[0].mxu0 %v1600
    %v1968 = vpop.f32.mrb[0].mxu0
    %v1969 = vadd.f32 %v1678, %v1968
    %v1970 = vpop.f32.mrb[0].mxu0
    %v1971 = vadd.f32 %v1682, %v1970
    %1972 = vmatprep.mubr.f32.mxu0 %v1750
    %1973 = vmatmul.mubr.f32.gmra.mrb[0].mxu0 %v1602
    %v1974 = vpop.f32.mrb[0].mxu0
    %v1975 = vadd.f32 %v1678, %v1974
    %v1976 = vpop.f32.mrb[0].mxu0
    %v1977 = vadd.f32 %v1682, %v1976
    %1978 = vmatprep.mubr.f32.mxu0 %v1753
    %1979 = vmatmul.mubr.f32.gmra.mrb[0].mxu0 %v1604
    %v1980 = vpop.f32.mrb[0].mxu0
    %v1981 = vadd.f32 %v1678, %v1980
    %v1982 = vpop.f32.mrb[0].mxu0
    %v1983 = vadd.f32 %v1682, %v1982
    %1984 = vmatprep.mubr.f32.mxu0 %v1756
    %1985 = vmatmul.mubr.f32.gmra.mrb[0].mxu0 %v1606
    %v1986 = vpop.f32.mrb[0].mxu0
    %v1987 = vadd.f32 %v1678, %v1986
    %v1988 = vpop.f32.mrb[0].mxu0
    %v1989 = vadd.f32 %v1682, %v1988
    %1990 = vmatprep.mubr.f32.mxu0 %v1759
    %1991 = vmatmul.mubr.f32.gmra.mrb[0].mxu0 %v1608
    %v1992 = vpop.f32.mrb[0].mxu0
    %v1993 = vadd.f32 %v1678, %v1992
    %v1994 = vpop.f32.mrb[0].mxu0
    %v1995 = vadd.f32 %v1682, %v1994
    %1996 = vmatprep.mubr.f32.mxu0 %v1762
    %1997 = vmatmul.mubr.f32.gmra.mrb[0].mxu0 %v1610
    %v1998 = vpop.f32.mrb[0].mxu0
    %v1999 = vadd.f32 %v1678, %v1998
    %v2000 = vpop.f32.mrb[0].mxu0
    %v2001 = vadd.f32 %v1682, %v2000
    %2002 = vmatprep.mubr.f32.mxu0 %v1765
    %2003 = vmatmul.mubr.f32.gmra.mrb[0].mxu0 %v1612
    %v2004 = vpop.f32.mrb[0].mxu0
    %v2005 = vadd.f32 %v1678, %v2004
    %v2006 = vpop.f32.mrb[0].mxu0
    %v2007 = vadd.f32 %v1682, %v2006
    %2008 = vmatprep.mubr.f32.mxu0 %v1768
    %2009 = vmatmul.mubr.f32.gmra.mrb[0].mxu0 %v1614
    %v2010 = vpop.f32.mrb[0].mxu0
    %v2011 = vadd.f32 %v1678, %v2010
    %v2012 = vpop.f32.mrb[0].mxu0
    %v2013 = vadd.f32 %v1682, %v2012
    %2014 = vmatprep.mubr.f32.mxu0 %v1771
    %2015 = vmatmul.mubr.f32.gmra.mrb[0].mxu0 %v1616
    %v2016 = vpop.f32.mrb[0].mxu0
    %v2017 = vadd.f32 %v1678, %v2016
    %v2018 = vpop.f32.mrb[0].mxu0
    %v2019 = vadd.f32 %v1682, %v2018
    %2020 = vmatprep.mubr.f32.mxu0 %v1774
    %2021 = vmatmul.mubr.f32.gmra.mrb[0].mxu0 %v1618
    %v2022 = vpop.f32.mrb[0].mxu0
    %v2023 = vadd.f32 %v1678, %v2022
    %v2024 = vpop.f32.mrb[0].mxu0
    %v2025 = vadd.f32 %v1682, %v2024
    %2026 = vmatprep.mubr.f32.mxu0 %v1777
    %2027 = vmatmul.mubr.f32.gmra.mrb[0].mxu0 %v1620
    %v2028 = vpop.f32.mrb[0].mxu0
    %v2029 = vadd.f32 %v1678, %v2028
    %v2030 = vpop.f32.mrb[0].mxu0
    %v2031 = vadd.f32 %v1682, %v2030
    %2032 = vmatprep.mubr.f32.mxu0 %v1780
    %2033 = vmatmul.mubr.f32.gmra.mrb[0].mxu0 %v1622
    %v2034 = vpop.f32.mrb[0].mxu0
    %v2035 = vadd.f32 %v1678, %v2034
    %v2036 = vpop.f32.mrb[0].mxu0
    %v2037 = vadd.f32 %v1682, %v2036
    %2038 = vdwg.mxu0
    %v2039 = vmax.f32 %v1849, 0.0
    %v2040 = vmax.f32 %v1851, 0.0
    %v2041 = vmax.f32 %v1855, 0.0
    %v2042 = vmax.f32 %v1857, 0.0
    %v2043 = vmax.f32 %v1861, 0.0
    %v2044 = vmax.f32 %v1863, 0.0
    %v2045 = vmax.f32 %v1867, 0.0
    %v2046 = vmax.f32 %v1869, 0.0
    %v2047 = vmax.f32 %v1873, 0.0
    %v2048 = vmax.f32 %v1875, 0.0
    %v2049 = vmax.f32 %v1879, 0.0
    %v2050 = vmax.f32 %v1881, 0.0
    %v2051 = vmax.f32 %v1885, 0.0
    %v2052 = vmax.f32 %v1887, 0.0
    %v2053 = vmax.f32 %v1891, 0.0
    %v2054 = vmax.f32 %v1893, 0.0
    %v2055 = vmax.f32 %v1897, 0.0
    %v2056 = vmax.f32 %v1899, 0.0
    %v2057 = vmax.f32 %v1903, 0.0
    %v2058 = vmax.f32 %v1905, 0.0
    %v2059 = vmax.f32 %v1909, 0.0
    %v2060 = vmax.f32 %v1911, 0.0
    %v2061 = vmax.f32 %v1915, 0.0
    %v2062 = vmax.f32 %v1917, 0.0
    %v2063 = vmax.f32 %v1921, 0.0
    %v2064 = vmax.f32 %v1923, 0.0
    %v2065 = vmax.f32 %v1927, 0.0
    %v2066 = vmax.f32 %v1929, 0.0
    %v2067 = vmax.f32 %v1933, 0.0
    %v2068 = vmax.f32 %v1935, 0.0
    %v2069 = vmax.f32 %v1939, 0.0
    %v2070 = vmax.f32 %v1941, 0.0
    %v2071 = vmax.f32 %v1945, 0.0
    %v2072 = vmax.f32 %v1947, 0.0
    %v2073 = vmax.f32 %v1951, 0.0
    %v2074 = vmax.f32 %v1953, 0.0
    %v2075 = vmax.f32 %v1957, 0.0
    %v2076 = vmax.f32 %v1959, 0.0
    %v2077 = vmax.f32 %v1963, 0.0
    %v2078 = vmax.f32 %v1965, 0.0
    %v2079 = vmax.f32 %v1969, 0.0
    %v2080 = vmax.f32 %v1971, 0.0
    %v2081 = vmax.f32 %v1975, 0.0
    %v2082 = vmax.f32 %v1977, 0.0
    %v2083 = vmax.f32 %v1981, 0.0
    %v2084 = vmax.f32 %v1983, 0.0
    %v2085 = vmax.f32 %v1987, 0.0
    %v2086 = vmax.f32 %v1989, 0.0
    %v2087 = vmax.f32 %v1993, 0.0
    %v2088 = vmax.f32 %v1995, 0.0
    %v2089 = vmax.f32 %v1999, 0.0
    %v2090 = vmax.f32 %v2001, 0.0
    %v2091 = vmax.f32 %v2005, 0.0
    %v2092 = vmax.f32 %v2007, 0.0
    %v2093 = vmax.f32 %v2011, 0.0
    %v2094 = vmax.f32 %v2013, 0.0
    %v2095 = vmax.f32 %v2017, 0.0
    %v2096 = vmax.f32 %v2019, 0.0
    %v2097 = vmax.f32 %v2023, 0.0
    %v2098 = vmax.f32 %v2025, 0.0
    %v2099 = vmax.f32 %v2029, 0.0
    %v2100 = vmax.f32 %v2031, 0.0
    %v2101 = vmax.f32 %v2035, 0.0
    %v2102 = vmax.f32 %v2037, 0.0
    %v2103 = vld [vmem:[%s1] sm:$0xff]
    %v2104 = vld [vmem:[%s1 + $0x8] sm:$0xff]
    %v2105 = vld [vmem:[%s1 + $0x10] sm:$0xff]
    %v2106 = vld [vmem:[%s1 + $0x18] sm:$0xff]
    %2107 = vmatprep.subr.mxu0 %v2040
    %2108 = vmatpush1.msra.mxu0 %v2039
    %2109 = vmatprep.subr.mxu0 %v2042
    %2110 = vmatpush1.msra.mxu0 %v2041
    %2111 = vmatprep.subr.mxu0 %v2044
    %2112 = vmatpush1.msra.mxu0 %v2043
    %2113 = vmatprep.subr.mxu0 %v2046
    %2114 = vmatpush1.msra.mxu0 %v2045
    %2115 = vmatprep.subr.mxu0 %v2048
    %2116 = vmatpush1.msra.mxu0 %v2047
    %2117 = vmatprep.subr.mxu0 %v2050
    %2118 = vmatpush1.msra.mxu0 %v2049
    %2119 = vmatprep.subr.mxu0 %v2052
    %2120 = vmatpush1.msra.mxu0 %v2051
    %2121 = vmatprep.subr.mxu0 %v2054
    %2122 = vmatpush1.msra.mxu0 %v2053
    %2123 = vmatprep.subr.mxu0 %v2056
    %2124 = vmatpush1.msra.mxu0 %v2055
    %2125 = vmatprep.subr.mxu0 %v2058
    %2126 = vmatpush1.msra.mxu0 %v2057
    %2127 = vmatprep.subr.mxu0 %v2060
    %2128 = vmatpush1.msra.mxu0 %v2059
    %2129 = vmatprep.subr.mxu0 %v2062
    %2130 = vmatpush1.msra.mxu0 %v2061
    %2131 = vmatprep.subr.mxu0 %v2064
    %2132 = vmatpush1.msra.mxu0 %v2063
    %2133 = vmatprep.subr.mxu0 %v2066
    %2134 = vmatpush1.msra.mxu0 %v2065
    %2135 = vmatprep.subr.mxu0 %v2068
    %2136 = vmatpush1.msra.mxu0 %v2067
    %2137 = vmatprep.subr.mxu0 %v2070
    %2138 = vmatpush1.msra.mxu0 %v2069
    %2139 = vmatprep.subr.mxu0 %v2072
    %2140 = vmatpush1.msra.mxu0 %v2071
    %2141 = vmatprep.subr.mxu0 %v2074
    %2142 = vmatpush1.msra.mxu0 %v2073
    %2143 = vmatprep.subr.mxu0 %v2076
    %2144 = vmatpush1.msra.mxu0 %v2075
    %2145 = vmatprep.subr.mxu0 %v2078
    %2146 = vmatpush1.msra.mxu0 %v2077
    %2147 = vmatprep.subr.mxu0 %v2080
    %2148 = vmatpush1.msra.mxu0 %v2079
    %2149 = vmatprep.subr.mxu0 %v2082
    %2150 = vmatpush1.msra.mxu0 %v2081
    %2151 = vmatprep.subr.mxu0 %v2084
    %2152 = vmatpush1.msra.mxu0 %v2083
    %2153 = vmatprep.subr.mxu0 %v2086
    %2154 = vmatpush1.msra.mxu0 %v2085
    %2155 = vmatprep.subr.mxu0 %v2088
    %2156 = vmatpush1.msra.mxu0 %v2087
    %2157 = vmatprep.subr.mxu0 %v2090
    %2158 = vmatpush1.msra.mxu0 %v2089
    %2159 = vmatprep.subr.mxu0 %v2092
    %2160 = vmatpush1.msra.mxu0 %v2091
    %2161 = vmatprep.subr.mxu0 %v2094
    %2162 = vmatpush1.msra.mxu0 %v2093
    %2163 = vmatprep.subr.mxu0 %v2096
    %2164 = vmatpush1.msra.mxu0 %v2095
    %2165 = vmatprep.subr.mxu0 %v2098
    %2166 = vmatpush1.msra.mxu0 %v2097
    %2167 = vmatprep.subr.mxu0 %v2100
    %2168 = vmatpush1.msra.mxu0 %v2099
    %2169 = vmatprep.subr.mxu0 %v2102
    %2170 = vmatpush1.msra.mxu0 %v2101
    %2171 = vmatprep.mubr.f32.mxu0 %v2104
    %2172 = vmatmul.mubr.f32.gmra.mrb[0].mxu0 %v2103
    %v2173 = vpop.f32.mrb[0].mxu0
    %v2174 = vadd.f32 0.0, %v2173
    %v2175 = vpop.f32.mrb[0].mxu0
    %v2176 = vadd.f32 0.0, %v2175
    %2177 = vmatprep.mubr.f32.mxu0 %v2106
    %2178 = vmatmul.mubr.f32.gmra.mrb[0].mxu0 %v2105
    %v2179 = vpop.f32.mrb[0].mxu0
    %v2180 = vadd.f32 0.0, %v2179
    %v2181 = vpop.f32.mrb[0].mxu0
    %v2182 = vadd.f32 0.0, %v2181
    %2183 = vdwg.mxu0
    %v2184 = vlaneseq
    %v2185 = vshrl.u32 %v2184, 7
    %v2186 = vadd.s32 %v2185, 8
    %vm2187 = vcmp.lt.s32.totalorder %v2185, 0
    %v2188 = vsub.s32 0, %v2185
    %v2189 = vsel %vm2187, %v2188, %v2185
    %v2190 = vshrl.u32 %v2189, 3
    %v2191 = vand.u32 %v2189, 7
    %v2192 = vsub.s32 0, %v2191
    %v2193 = vsel %vm2187, %v2192, %v2191
    %vm2194 = vcmp.lt.s32.totalorder %v2186, 0
    %v2195 = vsub.s32 0, %v2186
    %v2196 = vsel %vm2194, %v2195, %v2186
    %v2197 = vshrl.u32 %v2196, 3
    %v2198 = vand.u32 %v2196, 7
    %v2199 = vsub.s32 0, %v2198
    %v2200 = vsel %vm2194, %v2199, %v2198
    %vm2201 = vcmp.ne.s32.totalorder %v2193, 0
    %vm2202 = vcmp.ne.s32.totalorder %v2200, 0
    %vm2203 = vcmp.lt.s32.totalorder %v2193, 0
    %vm2204 = vcmp.lt.s32.totalorder %v2200, 0
    %vm2205 = vmand %vm2203, %vm2201
    %vm2206 = vmand %vm2204, %vm2202
    %v2207 = vadd.s32 %v2193, 8
    %v2208 = vadd.s32 %v2200, 8
    %v2209 = vsel %vm2205, %v2207, %v2193
    %v2210 = vsel %vm2206, %v2208, %v2200
    %v2211 = vrot.slane %v2174, 6
    %v2212 = vrot.slane %v2176, 6
    %v2213 = vrot.slane %v2180, 6
    %v2214 = vrot.slane %v2182, 6
    %vm2215 = vcmp.lt.s32.totalorder %v2185, 2
    %v2216 = vsel %vm2215, %v2211, %v2213
    %v2217 = vsel %vm2215, %v2212, %v2214
    %v2218 = vsel %vm2215, %v2213, %v2211
    %v2219 = vsel %vm2215, %v2214, %v2212
    %vm2220 = vcmp.ge.s32.totalorder %v2209, 2
    %vm2221 = vcmp.ge.s32.totalorder %v2210, 2
    %v2222 = vsel %vm2220, 1, 0
    %v2223 = vsel %vm2221, 1, 0
    %vm2224 = vcmp.eq.s32.totalorder %v2222, 1
    %vm2225 = vcmp.eq.s32.totalorder %v2223, 1
    %v2226 = vsel %vm2224, %v2218, 0.0
    %v2227 = vsel %vm2224, %v2219, 0.0
    %v2228 = vsel %vm2225, %v2216, 0.0
    %v2229 = vsel %vm2225, %v2217, 0.0
    %v2230 = vrot.slane %v2174, 7
    %v2231 = vrot.slane %v2176, 7
    %v2232 = vrot.slane %v2180, 7
    %v2233 = vrot.slane %v2182, 7
    %vm2234 = vcmp.lt.s32.totalorder %v2185, 1
    %v2235 = vsel %vm2234, %v2230, %v2232
    %v2236 = vsel %vm2234, %v2231, %v2233
    %v2237 = vsel %vm2234, %v2232, %v2230
    %v2238 = vsel %vm2234, %v2233, %v2231
    %vm2239 = vcmp.ge.s32.totalorder %v2209, 1
    %vm2240 = vcmp.ge.s32.totalorder %v2210, 1
    %v2241 = vsel %vm2239, 1, 0
    %v2242 = vsel %vm2240, 1, 0
    %vm2243 = vcmp.eq.s32.totalorder %v2241, 1
    %vm2244 = vcmp.eq.s32.totalorder %v2242, 1
    %v2245 = vsel %vm2243, %v2237, 0.0
    %v2246 = vsel %vm2243, %v2238, 0.0
    %v2247 = vsel %vm2244, %v2235, 0.0
    %v2248 = vsel %vm2244, %v2236, 0.0
    %2253 = vrot.lane.b32.xlu0 %v2245, 64
    %v2254 = vpop.permute.xlu0 %2253
    %2255 = vrot.lane.b32.xlu0 %v2246, 64
    %v2256 = vpop.permute.xlu0 %2255
    %2257 = vrot.lane.b32.xlu0 %v2247, 64
    %v2258 = vpop.permute.xlu0 %2257
    %2259 = vrot.lane.b32.xlu0 %v2248, 64
    %v2260 = vpop.permute.xlu0 %2259
    %v2261 = vsel %vm1685, %v2254, %v2256
    %v2262 = vsel %vm1685, %v2258, %v2260
    %v2267 = vsel %vm1685, %v2227, %v2254
    %v2268 = vsel %vm1685, %v2229, %v2258
    %v2269 = vld [vmem:[%s9] sm:$0xff]
    %v2270 = vld [vmem:[%s9 + $0x8] sm:$0xff]
    %v2271 = vld [vmem:[%s9 + $0x10] sm:$0xff]
    %v2272 = vld [vmem:[%s9 + $0x18] sm:$0xff]
    %v2273 = vld [vmem:[%s9 + $0x20] sm:$0xff]
    %v2274 = vld [vmem:[%s9 + $0x28] sm:$0xff]
    %v2275 = vld [vmem:[%s9 + $0x30] sm:$0xff]
    %v2276 = vld [vmem:[%s9 + $0x38] sm:$0xff]
    %v2277 = vld [vmem:[%s9 + $0x40] sm:$0xff]
    %v2278 = vld [vmem:[%s9 + $0x48] sm:$0xff]
    %v2279 = vld [vmem:[%s9 + $0x50] sm:$0xff]
    %v2280 = vld [vmem:[%s9 + $0x58] sm:$0xff]
    %v2281 = vld [vmem:[%s9 + $0x60] sm:$0xff]
    %v2282 = vld [vmem:[%s9 + $0x68] sm:$0xff]
    %v2283 = vld [vmem:[%s9 + $0x70] sm:$0xff]
    %v2284 = vld [vmem:[%s9 + $0x78] sm:$0xff]
    %v2285 = vld [vmem:[%s9 + $0x80] sm:$0xff]
    %v2286 = vld [vmem:[%s9 + $0x88] sm:$0xff]
    %v2287 = vld [vmem:[%s9 + $0x90] sm:$0xff]
    %v2288 = vld [vmem:[%s9 + $0x98] sm:$0xff]
    %v2289 = vld [vmem:[%s9 + $0xa0] sm:$0xff]
    %v2290 = vld [vmem:[%s9 + $0xa8] sm:$0xff]
    %v2291 = vld [vmem:[%s9 + $0xb0] sm:$0xff]
    %v2292 = vld [vmem:[%s9 + $0xb8] sm:$0xff]
    %v2293 = vld [vmem:[%s9 + $0xc0] sm:$0xff]
    %v2294 = vld [vmem:[%s9 + $0xc8] sm:$0xff]
    %v2295 = vld [vmem:[%s9 + $0xd0] sm:$0xff]
    %v2296 = vld [vmem:[%s9 + $0xd8] sm:$0xff]
    %v2297 = vld [vmem:[%s9 + $0xe0] sm:$0xff]
    %v2298 = vld [vmem:[%s9 + $0xe8] sm:$0xff]
    %v2299 = vld [vmem:[%s9 + $0xf0] sm:$0xff]
    %v2300 = vld [vmem:[%s9 + $0xf8] sm:$0xff]
    %v2301 = vld [vmem:[%s9 + $0x100] sm:$0xff]
    %v2302 = vld [vmem:[%s9 + $0x108] sm:$0xff]
    %v2303 = vld [vmem:[%s9 + $0x110] sm:$0xff]
    %v2304 = vld [vmem:[%s9 + $0x118] sm:$0xff]
    %v2305 = vld [vmem:[%s9 + $0x120] sm:$0xff]
    %v2306 = vld [vmem:[%s9 + $0x128] sm:$0xff]
    %v2307 = vld [vmem:[%s9 + $0x130] sm:$0xff]
    %v2308 = vld [vmem:[%s9 + $0x138] sm:$0xff]
    %v2309 = vld [vmem:[%s9 + $0x140] sm:$0xff]
    %v2310 = vld [vmem:[%s9 + $0x148] sm:$0xff]
    %v2311 = vld [vmem:[%s9 + $0x150] sm:$0xff]
    %v2312 = vld [vmem:[%s9 + $0x158] sm:$0xff]
    %v2313 = vld [vmem:[%s9 + $0x160] sm:$0xff]
    %v2314 = vld [vmem:[%s9 + $0x168] sm:$0xff]
    %v2315 = vld [vmem:[%s9 + $0x170] sm:$0xff]
    %v2316 = vld [vmem:[%s9 + $0x178] sm:$0xff]
    %v2317 = vld [vmem:[%s9 + $0x180] sm:$0xff]
    %v2318 = vld [vmem:[%s9 + $0x188] sm:$0xff]
    %v2319 = vld [vmem:[%s9 + $0x190] sm:$0xff]
    %v2320 = vld [vmem:[%s9 + $0x198] sm:$0xff]
    %v2321 = vld [vmem:[%s9 + $0x1a0] sm:$0xff]
    %v2322 = vld [vmem:[%s9 + $0x1a8] sm:$0xff]
    %v2323 = vld [vmem:[%s9 + $0x1b0] sm:$0xff]
    %v2324 = vld [vmem:[%s9 + $0x1b8] sm:$0xff]
    %v2325 = vld [vmem:[%s9 + $0x1c0] sm:$0xff]
    %v2326 = vld [vmem:[%s9 + $0x1c8] sm:$0xff]
    %v2327 = vld [vmem:[%s9 + $0x1d0] sm:$0xff]
    %v2328 = vld [vmem:[%s9 + $0x1d8] sm:$0xff]
    %v2329 = vld [vmem:[%s9 + $0x1e0] sm:$0xff]
    %v2330 = vld [vmem:[%s9 + $0x1e8] sm:$0xff]
    %v2331 = vld [vmem:[%s9 + $0x1f0] sm:$0xff]
    %v2332 = vld [vmem:[%s9 + $0x1f8] sm:$0xff]
    %v2333 = vld [vmem:[%s9 + $0x200] sm:$0xff]
    %v2334 = vld [vmem:[%s9 + $0x208] sm:$0xff]
    %v2335 = vld [vmem:[%s9 + $0x210] sm:$0xff]
    %v2336 = vld [vmem:[%s9 + $0x218] sm:$0xff]
    %v2337 = vld [vmem:[%s9 + $0x220] sm:$0xff]
    %v2338 = vld [vmem:[%s9 + $0x228] sm:$0xff]
    %v2339 = vld [vmem:[%s9 + $0x230] sm:$0xff]
    %v2340 = vld [vmem:[%s9 + $0x238] sm:$0xff]
    %v2342 = vsel %vm1685, %v2176, 0
    %v2345 = vsel %vm1685, %v2182, 0
    %2347 = vmatprep.subr.mxu0 0.0
    %2348 = vmatpush1.msra.mxu0 %v2269
    %2349 = vmatprep.subr.mxu0 0.0
    %2350 = vmatpush1.msra.mxu0 %v2270
    %2351 = vmatprep.subr.mxu0 0.0
    %2352 = vmatpush1.msra.mxu0 %v2271
    %2353 = vmatprep.subr.mxu0 0.0
    %2354 = vmatpush1.msra.mxu0 %v2272
    %2355 = vmatprep.subr.mxu0 0.0
    %2356 = vmatpush1.msra.mxu0 %v2273
    %2357 = vmatprep.subr.mxu0 0.0
    %2358 = vmatpush1.msra.mxu0 %v2274
    %2359 = vmatprep.subr.mxu0 0.0
    %2360 = vmatpush1.msra.mxu0 %v2275
    %2361 = vmatprep.subr.mxu0 0.0
    %2362 = vmatpush1.msra.mxu0 %v2276
    %2363 = vmatprep.subr.mxu0 0.0
    %2364 = vmatpush1.msra.mxu0 %v2277
    %2365 = vmatprep.subr.mxu0 0.0
    %2366 = vmatpush1.msra.mxu0 %v2278
    %2367 = vmatprep.subr.mxu0 0.0
    %2368 = vmatpush1.msra.mxu0 %v2279
    %2369 = vmatprep.subr.mxu0 0.0
    %2370 = vmatpush1.msra.mxu0 %v2280
    %2371 = vmatprep.subr.mxu0 0.0
    %2372 = vmatpush1.msra.mxu0 %v2281
    %2373 = vmatprep.subr.mxu0 0.0
    %2374 = vmatpush1.msra.mxu0 %v2282
    %2375 = vmatprep.subr.mxu0 0.0
    %2376 = vmatpush1.msra.mxu0 %v2283
    %2377 = vmatprep.subr.mxu0 0.0
    %2378 = vmatpush1.msra.mxu0 %v2284
    %2379 = vmatprep.subr.mxu0 0.0
    %2380 = vmatpush1.msra.mxu0 %v2285
    %2381 = vmatprep.subr.mxu0 0.0
    %2382 = vmatpush1.msra.mxu0 %v2286
    %2383 = vmatprep.subr.mxu0 0.0
    %2384 = vmatpush1.msra.mxu0 %v2287
    %2385 = vmatprep.subr.mxu0 0.0
    %2386 = vmatpush1.msra.mxu0 %v2288
    %2387 = vmatprep.subr.mxu0 0.0
    %2388 = vmatpush1.msra.mxu0 %v2289
    %2389 = vmatprep.subr.mxu0 0.0
    %2390 = vmatpush1.msra.mxu0 %v2290
    %2391 = vmatprep.subr.mxu0 0.0
    %2392 = vmatpush1.msra.mxu0 %v2291
    %2393 = vmatprep.subr.mxu0 0.0
    %2394 = vmatpush1.msra.mxu0 %v2292
    %2395 = vmatprep.subr.mxu0 0.0
    %2396 = vmatpush1.msra.mxu0 %v2293
    %2397 = vmatprep.subr.mxu0 0.0
    %2398 = vmatpush1.msra.mxu0 %v2294
    %2399 = vmatprep.subr.mxu0 0.0
    %2400 = vmatpush1.msra.mxu0 %v2295
    %2401 = vmatprep.subr.mxu0 0.0
    %2402 = vmatpush1.msra.mxu0 %v2296
    %2403 = vmatprep.subr.mxu0 0.0
    %2404 = vmatpush1.msra.mxu0 %v2297
    %2405 = vmatprep.subr.mxu0 0.0
    %2406 = vmatpush1.msra.mxu0 %v2298
    %2407 = vmatprep.subr.mxu0 0.0
    %2408 = vmatpush1.msra.mxu0 %v2299
    %2409 = vmatprep.subr.mxu0 0.0
    %2410 = vmatpush1.msra.mxu0 %v2300
    %2411 = vmatprep.mubr.f32.mxu0 %v2267
    %2412 = vmatmul.mubr.f32.gmra.mrb[0].mxu0 %v2226
    %v2413 = vpop.f32.mrb[0].mxu0
    %v2414 = vadd.f32 0.0, %v2413
    %v2415 = vpop.f32.mrb[0].mxu0
    %2416 = vmatprep.mubr.f32.mxu0 %v2268
    %2417 = vmatmul.mubr.f32.gmra.mrb[0].mxu0 %v2228
    %v2418 = vpop.f32.mrb[0].mxu0
    %v2419 = vadd.f32 0.0, %v2418
    %v2420 = vpop.f32.mrb[0].mxu0
    %2421 = vdwg.mxu0
    %2422 = vmatprep.subr.mxu0 0.0
    %2423 = vmatpush1.msra.mxu0 %v2301
    %2424 = vmatprep.subr.mxu0 0.0
    %2425 = vmatpush1.msra.mxu0 %v2302
    %2426 = vmatprep.subr.mxu0 0.0
    %2427 = vmatpush1.msra.mxu0 %v2303
    %2428 = vmatprep.subr.mxu0 0.0
    %2429 = vmatpush1.msra.mxu0 %v2304
    %2430 = vmatprep.subr.mxu0 0.0
    %2431 = vmatpush1.msra.mxu0 %v2305
    %2432 = vmatprep.subr.mxu0 0.0
    %2433 = vmatpush1.msra.mxu0 %v2306
    %2434 = vmatprep.subr.mxu0 0.0
    %2435 = vmatpush1.msra.mxu0 %v2307
    %2436 = vmatprep.subr.mxu0 0.0
    %2437 = vmatpush1.msra.mxu0 %v2308
    %2438 = vmatprep.subr.mxu0 0.0
    %2439 = vmatpush1.msra.mxu0 %v2309
    %2440 = vmatprep.subr.mxu0 0.0
    %2441 = vmatpush1.msra.mxu0 %v2310
    %2442 = vmatprep.subr.mxu0 0.0
    %2443 = vmatpush1.msra.mxu0 %v2311
    %2444 = vmatprep.subr.mxu0 0.0
    %2445 = vmatpush1.msra.mxu0 %v2312
    %2446 = vmatprep.subr.mxu0 0.0
    %2447 = vmatpush1.msra.mxu0 %v2313
    %2448 = vmatprep.subr.mxu0 0.0
    %2449 = vmatpush1.msra.mxu0 %v2314
    %2450 = vmatprep.subr.mxu0 0.0
    %2451 = vmatpush1.msra.mxu0 %v2315
    %2452 = vmatprep.subr.mxu0 0.0
    %2453 = vmatpush1.msra.mxu0 %v2316
    %2454 = vmatprep.subr.mxu0 0.0
    %2455 = vmatpush1.msra.mxu0 %v2317
    %2456 = vmatprep.subr.mxu0 0.0
    %2457 = vmatpush1.msra.mxu0 %v2318
    %2458 = vmatprep.subr.mxu0 0.0
    %2459 = vmatpush1.msra.mxu0 %v2319
    %2460 = vmatprep.subr.mxu0 0.0
    %2461 = vmatpush1.msra.mxu0 %v2320
    %2462 = vmatprep.subr.mxu0 0.0
    %2463 = vmatpush1.msra.mxu0 %v2321
    %2464 = vmatprep.subr.mxu0 0.0
    %2465 = vmatpush1.msra.mxu0 %v2322
    %2466 = vmatprep.subr.mxu0 0.0
    %2467 = vmatpush1.msra.mxu0 %v2323
    %2468 = vmatprep.subr.mxu0 0.0
    %2469 = vmatpush1.msra.mxu0 %v2324
    %2470 = vmatprep.subr.mxu0 0.0
    %2471 = vmatpush1.msra.mxu0 %v2325
    %2472 = vmatprep.subr.mxu0 0.0
    %2473 = vmatpush1.msra.mxu0 %v2326
    %2474 = vmatprep.subr.mxu0 0.0
    %2475 = vmatpush1.msra.mxu0 %v2327
    %2476 = vmatprep.subr.mxu0 0.0
    %2477 = vmatpush1.msra.mxu0 %v2328
    %2478 = vmatprep.subr.mxu0 0.0
    %2479 = vmatpush1.msra.mxu0 %v2329
    %2480 = vmatprep.subr.mxu0 0.0
    %2481 = vmatpush1.msra.mxu0 %v2330
    %2482 = vmatprep.subr.mxu0 0.0
    %2483 = vmatpush1.msra.mxu0 %v2331
    %2484 = vmatprep.subr.mxu0 0.0
    %2485 = vmatpush1.msra.mxu0 %v2332
    %2486 = vmatprep.mubr.f32.mxu0 %v2174
    %2487 = vmatmul.mubr.f32.gmra.mrb[0].mxu0 %v2261
    %v2488 = vpop.f32.mrb[0].mxu0
    %v2489 = vadd.f32 %v2414, %v2488
    %v2490 = vpop.f32.mrb[0].mxu0
    %2491 = vmatprep.mubr.f32.mxu0 %v2180
    %2492 = vmatmul.mubr.f32.gmra.mrb[0].mxu0 %v2262
    %v2493 = vpop.f32.mrb[0].mxu0
    %v2494 = vadd.f32 %v2419, %v2493
    %v2495 = vpop.f32.mrb[0].mxu0
    %2496 = vdwg.mxu0
    %2497 = vmatprep.subr.mxu0 0.0
    %2498 = vmatpush1.msra.mxu0 %v2333
    %2499 = vmatprep.subr.mxu0 0.0
    %2500 = vmatpush1.msra.mxu0 %v2334
    %2501 = vmatprep.subr.mxu0 0.0
    %2502 = vmatpush1.msra.mxu0 %v2335
    %2503 = vmatprep.subr.mxu0 0.0
    %2504 = vmatpush1.msra.mxu0 %v2336
    %2505 = vmatprep.subr.mxu0 0.0
    %2506 = vmatpush1.msra.mxu0 %v2337
    %2507 = vmatprep.subr.mxu0 0.0
    %2508 = vmatpush1.msra.mxu0 %v2338
    %2509 = vmatprep.subr.mxu0 0.0
    %2510 = vmatpush1.msra.mxu0 %v2339
    %2511 = vmatprep.subr.mxu0 0.0
    %2512 = vmatpush1.msra.mxu0 %v2340
    %2513 = vmatprep.subr.mxu0 0.0
    %2514 = vmatpush1.msra.mxu0 0.0
    %2515 = vmatprep.subr.mxu0 0.0
    %2516 = vmatpush1.msra.mxu0 0.0
    %2517 = vmatprep.subr.mxu0 0.0
    %2518 = vmatpush1.msra.mxu0 0.0
    %2519 = vmatprep.subr.mxu0 0.0
    %2520 = vmatpush1.msra.mxu0 0.0
    %2521 = vmatprep.subr.mxu0 0.0
    %2522 = vmatpush1.msra.mxu0 0.0
    %2523 = vmatprep.subr.mxu0 0.0
    %2524 = vmatpush1.msra.mxu0 0.0
    %2525 = vmatprep.subr.mxu0 0.0
    %2526 = vmatpush1.msra.mxu0 0.0
    %2527 = vmatprep.subr.mxu0 0.0
    %2528 = vmatpush1.msra.mxu0 0.0
    %2529 = vmatprep.subr.mxu0 0.0
    %2530 = vmatpush1.msra.mxu0 0.0
    %2531 = vmatprep.subr.mxu0 0.0
    %2532 = vmatpush1.msra.mxu0 0.0
    %2533 = vmatprep.subr.mxu0 0.0
    %2534 = vmatpush1.msra.mxu0 0.0
    %2535 = vmatprep.subr.mxu0 0.0
    %2536 = vmatpush1.msra.mxu0 0.0
    %2537 = vmatprep.subr.mxu0 0.0
    %2538 = vmatpush1.msra.mxu0 0.0
    %2539 = vmatprep.subr.mxu0 0.0
    %2540 = vmatpush1.msra.mxu0 0.0
    %2541 = vmatprep.subr.mxu0 0.0
    %2542 = vmatpush1.msra.mxu0 0.0
    %2543 = vmatprep.subr.mxu0 0.0
    %2544 = vmatpush1.msra.mxu0 0.0
    %2545 = vmatprep.subr.mxu0 0.0
    %2546 = vmatpush1.msra.mxu0 0.0
    %2547 = vmatprep.subr.mxu0 0.0
    %2548 = vmatpush1.msra.mxu0 0.0
    %2549 = vmatprep.subr.mxu0 0.0
    %2550 = vmatpush1.msra.mxu0 0.0
    %2551 = vmatprep.subr.mxu0 0.0
    %2552 = vmatpush1.msra.mxu0 0.0
    %2553 = vmatprep.subr.mxu0 0.0
    %2554 = vmatpush1.msra.mxu0 0.0
    %2555 = vmatprep.subr.mxu0 0.0
    %2556 = vmatpush1.msra.mxu0 0.0
    %2557 = vmatprep.subr.mxu0 0.0
    %2558 = vmatpush1.msra.mxu0 0.0
    %2559 = vmatprep.subr.mxu0 0.0
    %2560 = vmatpush1.msra.mxu0 0.0
    %2561 = vmatprep.mubr.f32.mxu0 0.0
    %2562 = vmatmul.mubr.f32.gmra.mrb[0].mxu0 %v2342
    %v2563 = vpop.f32.mrb[0].mxu0
    %v2564 = vadd.f32 %v2489, %v2563
    %v2565 = vpop.f32.mrb[0].mxu0
    %2566 = vmatprep.mubr.f32.mxu0 0.0
    %2567 = vmatmul.mubr.f32.gmra.mrb[0].mxu0 %v2345
    %v2568 = vpop.f32.mrb[0].mxu0
    %v2569 = vadd.f32 %v2494, %v2568
    %v2570 = vpop.f32.mrb[0].mxu0
    %2571 = vdwg.mxu0
    %v2572 = vrot.slane %v2564, 4
    %v2573 = vrot.slane %v2569, 4
    %vm2574 = vcmp.lt.s32.totalorder %v2185, 4
    %v2575 = vsel %vm2574, %v2572, %v2573
    %v2576 = vsel %vm2574, %v2573, %v2572
    %vm2577 = vcmp.ge.s32.totalorder %v2209, 4
    %vm2578 = vcmp.ge.s32.totalorder %v2210, 4
    %v2579 = vsel %vm2577, 1, 0
    %v2580 = vsel %vm2578, 1, 0
    %vm2581 = vcmp.eq.s32.totalorder %v2579, 1
    %vm2582 = vcmp.eq.s32.totalorder %v2580, 1
    %v2583 = vsel %vm2581, %v2576, 0.0
    %v2584 = vsel %vm2582, %v2575, 0.0
    %v2585 = vrot.slane %v2564, 6
    %v2586 = vrot.slane %v2569, 6
    %v2587 = vsel %vm2215, %v2585, %v2586
    %v2588 = vsel %vm2215, %v2586, %v2585
    %v2589 = vsel %vm2224, %v2588, 0.0
    %v2590 = vsel %vm2225, %v2587, 0.0
    %2593 = vrot.lane.b32.xlu0 %v2589, 32
    %v2594 = vpop.permute.xlu0 %2593
    %2595 = vrot.lane.b32.xlu0 %v2590, 32
    %v2596 = vpop.permute.xlu0 %2595
    %2601 = vrot.lane.b32.xlu0 %v2564, 64
    %v2602 = vpop.permute.xlu0 %2601
    %2603 = vrot.lane.b32.xlu0 %v2569, 64
    %v2604 = vpop.permute.xlu0 %2603
    %vm2607 = vcmask 261120
    %v2608 = vsel %vm2607, %v2583, %v2594
    %v2609 = vsel %vm2607, %v2584, %v2596
    %v2610 = vsel %vm1685, %v2608, %v2602
    %v2611 = vsel %vm1685, %v2609, %v2604
    %v2612 = vld [vmem:[%s10] sm:$0xff]
    %v2613 = vld [vmem:[%s10 + $0x8] sm:$0xff]
    %v2614 = vld [vmem:[%s10 + $0x10] sm:$0xff]
    %v2615 = vld [vmem:[%s10 + $0x18] sm:$0xff]
    %v2616 = vld [vmem:[%s10 + $0x20] sm:$0xff]
    %v2617 = vld [vmem:[%s10 + $0x28] sm:$0xff]
    %v2618 = vld [vmem:[%s10 + $0x30] sm:$0xff]
    %v2619 = vld [vmem:[%s10 + $0x38] sm:$0xff]
    %v2620 = vld [vmem:[%s10 + $0x40] sm:$0xff]
    %v2621 = vld [vmem:[%s10 + $0x48] sm:$0xff]
    %v2622 = vld [vmem:[%s10 + $0x50] sm:$0xff]
    %v2623 = vld [vmem:[%s10 + $0x58] sm:$0xff]
    %v2625 = vsel %vm450, %v2610, 0
    %v2628 = vsel %vm450, %v2611, 0
    %2630 = vmatprep.subr.mxu0 0.0
    %2631 = vmatpush1.msra.mxu0 %v2612
    %2632 = vmatprep.subr.mxu0 0.0
    %2633 = vmatpush1.msra.mxu0 %v2613
    %2634 = vmatprep.subr.mxu0 0.0
    %2635 = vmatpush1.msra.mxu0 %v2614
    %2636 = vmatprep.subr.mxu0 0.0
    %2637 = vmatpush1.msra.mxu0 %v2615
    %2638 = vmatprep.subr.mxu0 0.0
    %2639 = vmatpush1.msra.mxu0 %v2616
    %2640 = vmatprep.subr.mxu0 0.0
    %2641 = vmatpush1.msra.mxu0 %v2617
    %2642 = vmatprep.subr.mxu0 0.0
    %2643 = vmatpush1.msra.mxu0 %v2618
    %2644 = vmatprep.subr.mxu0 0.0
    %2645 = vmatpush1.msra.mxu0 %v2619
    %2646 = vmatprep.subr.mxu0 0.0
    %2647 = vmatpush1.msra.mxu0 %v2620
    %2648 = vmatprep.subr.mxu0 0.0
    %2649 = vmatpush1.msra.mxu0 %v2621
    %2650 = vmatprep.subr.mxu0 0.0
    %2651 = vmatpush1.msra.mxu0 %v2622
    %2652 = vmatprep.subr.mxu0 0.0
    %2653 = vmatpush1.msra.mxu0 %v2623
    %2654 = vmatprep.subr.mxu0 0.0
    %2655 = vmatpush1.msra.mxu0 0.0
    %2656 = vmatprep.subr.mxu0 0.0
    %2657 = vmatpush1.msra.mxu0 0.0
    %2658 = vmatprep.subr.mxu0 0.0
    %2659 = vmatpush1.msra.mxu0 0.0
    %2660 = vmatprep.subr.mxu0 0.0
    %2661 = vmatpush1.msra.mxu0 0.0
    %2662 = vmatprep.subr.mxu0 0.0
    %2663 = vmatpush1.msra.mxu0 0.0
    %2664 = vmatprep.subr.mxu0 0.0
    %2665 = vmatpush1.msra.mxu0 0.0
    %2666 = vmatprep.subr.mxu0 0.0
    %2667 = vmatpush1.msra.mxu0 0.0
    %2668 = vmatprep.subr.mxu0 0.0
    %2669 = vmatpush1.msra.mxu0 0.0
    %2670 = vmatprep.subr.mxu0 0.0
    %2671 = vmatpush1.msra.mxu0 0.0
    %2672 = vmatprep.subr.mxu0 0.0
    %2673 = vmatpush1.msra.mxu0 0.0
    %2674 = vmatprep.subr.mxu0 0.0
    %2675 = vmatpush1.msra.mxu0 0.0
    %2676 = vmatprep.subr.mxu0 0.0
    %2677 = vmatpush1.msra.mxu0 0.0
    %2678 = vmatprep.subr.mxu0 0.0
    %2679 = vmatpush1.msra.mxu0 0.0
    %2680 = vmatprep.subr.mxu0 0.0
    %2681 = vmatpush1.msra.mxu0 0.0
    %2682 = vmatprep.subr.mxu0 0.0
    %2683 = vmatpush1.msra.mxu0 0.0
    %2684 = vmatprep.subr.mxu0 0.0
    %2685 = vmatpush1.msra.mxu0 0.0
    %2686 = vmatprep.subr.mxu0 0.0
    %2687 = vmatpush1.msra.mxu0 0.0
    %2688 = vmatprep.subr.mxu0 0.0
    %2689 = vmatpush1.msra.mxu0 0.0
    %2690 = vmatprep.subr.mxu0 0.0
    %2691 = vmatpush1.msra.mxu0 0.0
    %2692 = vmatprep.subr.mxu0 0.0
    %2693 = vmatpush1.msra.mxu0 0.0
    %2694 = vmatprep.mubr.f32.mxu0 0.0
    %2695 = vmatmul.mubr.f32.gmra.mrb[0].mxu0 %v2625
    %v2696 = vpop.f32.mrb[0].mxu0
    %v2697 = vadd.f32 0.0, %v2696
    %v2698 = vpop.f32.mrb[0].mxu0
    %2699 = vmatprep.mubr.f32.mxu0 0.0
    %2700 = vmatmul.mubr.f32.gmra.mrb[0].mxu0 %v2628
    %v2701 = vpop.f32.mrb[0].mxu0
    %v2702 = vadd.f32 0.0, %v2701
    %v2703 = vpop.f32.mrb[0].mxu0
    %2704 = vdwg.mxu0
    %v2705 = vrot.slane %v2697, 4
    %v2706 = vrot.slane %v2702, 4
    %v2707 = vsel %vm2574, %v2705, %v2706
    %v2708 = vsel %vm2574, %v2706, %v2705
    %v2709 = vsel %vm2581, %v2708, 0.0
    %v2710 = vsel %vm2582, %v2707, 0.0
    %v2711 = vrot.slane %v2697, 6
    %v2712 = vrot.slane %v2702, 6
    %v2713 = vsel %vm2215, %v2711, %v2712
    %v2714 = vsel %vm2215, %v2712, %v2711
    %v2715 = vsel %vm2224, %v2714, 0.0
    %v2716 = vsel %vm2225, %v2713, 0.0
    %2719 = vrot.lane.b32.xlu0 %v2715, 64
    %v2720 = vpop.permute.xlu0 %2719
    %2721 = vrot.lane.b32.xlu0 %v2716, 64
    %v2722 = vpop.permute.xlu0 %2721
    %v2725 = vsel %vm1685, %v2709, %v2720
    %v2726 = vsel %vm1685, %v2710, %v2722
    %v2727 = vld [vmem:[%s11] sm:$0xff]
    %v2728 = vld [vmem:[%s11 + $0x8] sm:$0xff]
    %v2729 = vld [vmem:[%s11 + $0x10] sm:$0xff]
    %v2730 = vld [vmem:[%s11 + $0x18] sm:$0xff]
    %v2731 = vld [vmem:[%s11 + $0x20] sm:$0xff]
    %v2732 = vld [vmem:[%s11 + $0x28] sm:$0xff]
    %v2733 = vld [vmem:[%s11 + $0x30] sm:$0xff]
    %v2734 = vld [vmem:[%s11 + $0x38] sm:$0xff]
    %v2735 = vld [vmem:[%s11 + $0x40] sm:$0xff]
    %v2736 = vld [vmem:[%s11 + $0x48] sm:$0xff]
    %v2737 = vld [vmem:[%s11 + $0x50] sm:$0xff]
    %v2738 = vld [vmem:[%s11 + $0x58] sm:$0xff]
    %v2739 = vld [vmem:[%s11 + $0x60] sm:$0xff]
    %v2740 = vld [vmem:[%s11 + $0x68] sm:$0xff]
    %v2741 = vld [vmem:[%s11 + $0x70] sm:$0xff]
    %v2742 = vld [vmem:[%s11 + $0x78] sm:$0xff]
    %v2743 = vld [vmem:[%s11 + $0x80] sm:$0xff]
    %v2744 = vld [vmem:[%s11 + $0x88] sm:$0xff]
    %v2745 = vld [vmem:[%s11 + $0x90] sm:$0xff]
    %v2746 = vld [vmem:[%s11 + $0x98] sm:$0xff]
    %v2747 = vld [vmem:[%s11 + $0xa0] sm:$0xff]
    %v2748 = vld [vmem:[%s11 + $0xa8] sm:$0xff]
    %v2749 = vld [vmem:[%s11 + $0xb0] sm:$0xff]
    %v2750 = vld [vmem:[%s11 + $0xb8] sm:$0xff]
    %v2752 = vsel %vm1685, %v2697, 0
    %v2755 = vsel %vm1685, %v2702, 0
    %2757 = vmatprep.subr.mxu0 0.0
    %2758 = vmatpush1.msra.mxu0 %v2727
    %2759 = vmatprep.subr.mxu0 0.0
    %2760 = vmatpush1.msra.mxu0 %v2728
    %2761 = vmatprep.subr.mxu0 0.0
    %2762 = vmatpush1.msra.mxu0 %v2729
    %2763 = vmatprep.subr.mxu0 0.0
    %2764 = vmatpush1.msra.mxu0 %v2730
    %2765 = vmatprep.subr.mxu0 0.0
    %2766 = vmatpush1.msra.mxu0 %v2731
    %2767 = vmatprep.subr.mxu0 0.0
    %2768 = vmatpush1.msra.mxu0 %v2732
    %2769 = vmatprep.subr.mxu0 0.0
    %2770 = vmatpush1.msra.mxu0 %v2733
    %2771 = vmatprep.subr.mxu0 0.0
    %2772 = vmatpush1.msra.mxu0 %v2734
    %2773 = vmatprep.subr.mxu0 0.0
    %2774 = vmatpush1.msra.mxu0 %v2735
    %2775 = vmatprep.subr.mxu0 0.0
    %2776 = vmatpush1.msra.mxu0 %v2736
    %2777 = vmatprep.subr.mxu0 0.0
    %2778 = vmatpush1.msra.mxu0 %v2737
    %2779 = vmatprep.subr.mxu0 0.0
    %2780 = vmatpush1.msra.mxu0 %v2738
    %2781 = vmatprep.subr.mxu0 0.0
    %2782 = vmatpush1.msra.mxu0 %v2739
    %2783 = vmatprep.subr.mxu0 0.0
    %2784 = vmatpush1.msra.mxu0 %v2740
    %2785 = vmatprep.subr.mxu0 0.0
    %2786 = vmatpush1.msra.mxu0 %v2741
    %2787 = vmatprep.subr.mxu0 0.0
    %2788 = vmatpush1.msra.mxu0 %v2742
    %2789 = vmatprep.subr.mxu0 0.0
    %2790 = vmatpush1.msra.mxu0 %v2743
    %2791 = vmatprep.subr.mxu0 0.0
    %2792 = vmatpush1.msra.mxu0 %v2744
    %2793 = vmatprep.subr.mxu0 0.0
    %2794 = vmatpush1.msra.mxu0 %v2745
    %2795 = vmatprep.subr.mxu0 0.0
    %2796 = vmatpush1.msra.mxu0 %v2746
    %2797 = vmatprep.subr.mxu0 0.0
    %2798 = vmatpush1.msra.mxu0 %v2747
    %2799 = vmatprep.subr.mxu0 0.0
    %2800 = vmatpush1.msra.mxu0 %v2748
    %2801 = vmatprep.subr.mxu0 0.0
    %2802 = vmatpush1.msra.mxu0 %v2749
    %2803 = vmatprep.subr.mxu0 0.0
    %2804 = vmatpush1.msra.mxu0 %v2750
    %2805 = vmatprep.subr.mxu0 0.0
    %2806 = vmatpush1.msra.mxu0 0.0
    %2807 = vmatprep.subr.mxu0 0.0
    %2808 = vmatpush1.msra.mxu0 0.0
    %2809 = vmatprep.subr.mxu0 0.0
    %2810 = vmatpush1.msra.mxu0 0.0
    %2811 = vmatprep.subr.mxu0 0.0
    %2812 = vmatpush1.msra.mxu0 0.0
    %2813 = vmatprep.subr.mxu0 0.0
    %2814 = vmatpush1.msra.mxu0 0.0
    %2815 = vmatprep.subr.mxu0 0.0
    %2816 = vmatpush1.msra.mxu0 0.0
    %2817 = vmatprep.subr.mxu0 0.0
    %2818 = vmatpush1.msra.mxu0 0.0
    %2819 = vmatprep.subr.mxu0 0.0
    %2820 = vmatpush1.msra.mxu0 0.0
    %2821 = vmatprep.mubr.f32.mxu0 %v2752
    %2822 = vmatmul.mubr.f32.gmra.mrb[0].mxu0 %v2725
    %v2823 = vpop.f32.mrb[0].mxu0
    %v2824 = vadd.f32 0.0, %v2823
    %v2825 = vpop.f32.mrb[0].mxu0
    %2826 = vmatprep.mubr.f32.mxu0 %v2755
    %2827 = vmatmul.mubr.f32.gmra.mrb[0].mxu0 %v2726
    %v2828 = vpop.f32.mrb[0].mxu0
    %v2829 = vadd.f32 0.0, %v2828
    %v2830 = vpop.f32.mrb[0].mxu0
    %2831 = vdwg.mxu0
    %v2832 = vrot.slane %v2824, 7
    %v2833 = vrot.slane %v2829, 7
    %v2834 = vsel %vm2234, %v2832, %v2833
    %v2835 = vsel %vm2234, %v2833, %v2832
    %v2836 = vsel %vm2243, %v2835, 0.0
    %v2837 = vsel %vm2244, %v2834, 0.0
    %v2838 = vrot.slane %v2824, 1
    %v2839 = vrot.slane %v2829, 1
    %vm2840 = vcmp.lt.s32.totalorder %v2185, 7
    %v2841 = vsel %vm2840, %v2838, %v2839
    %v2842 = vsel %vm2840, %v2839, %v2838
    %vm2843 = vcmp.lt.s32.totalorder %v2209, 7
    %vm2844 = vcmp.lt.s32.totalorder %v2210, 7
    %v2845 = vsel %vm2843, 1, 0
    %v2846 = vsel %vm2844, 1, 0
    %vm2847 = vcmp.eq.s32.totalorder %v2845, 1
    %vm2848 = vcmp.eq.s32.totalorder %v2846, 1
    %v2849 = vsel %vm2847, %v2841, 0.0
    %v2850 = vsel %vm2848, %v2842, 0.0
    %v2851 = vld [vmem:[%s12] sm:$0xff]
    %v2852 = vld [vmem:[%s12 + $0x8] sm:$0xff]
    %v2853 = vld [vmem:[%s12 + $0x10] sm:$0xff]
    %v2854 = vld [vmem:[%s12 + $0x18] sm:$0xff]
    %v2855 = vld [vmem:[%s12 + $0x20] sm:$0xff]
    %v2856 = vld [vmem:[%s12 + $0x28] sm:$0xff]
    %v2857 = vld [vmem:[%s12 + $0x30] sm:$0xff]
    %v2858 = vld [vmem:[%s12 + $0x38] sm:$0xff]
    %v2859 = vld [vmem:[%s12 + $0x40] sm:$0xff]
    %v2860 = vld [vmem:[%s12 + $0x48] sm:$0xff]
    %v2861 = vld [vmem:[%s12 + $0x50] sm:$0xff]
    %v2862 = vld [vmem:[%s12 + $0x58] sm:$0xff]
    %v2863 = vld [vmem:[%s12 + $0x60] sm:$0xff]
    %v2864 = vld [vmem:[%s12 + $0x68] sm:$0xff]
    %v2865 = vld [vmem:[%s12 + $0x70] sm:$0xff]
    %v2866 = vld [vmem:[%s12 + $0x78] sm:$0xff]
    %v2867 = vld [vmem:[%s12 + $0x80] sm:$0xff]
    %v2868 = vld [vmem:[%s12 + $0x88] sm:$0xff]
    %v2869 = vld [vmem:[%s12 + $0x90] sm:$0xff]
    %v2870 = vld [vmem:[%s12 + $0x98] sm:$0xff]
    %v2871 = vld [vmem:[%s12 + $0xa0] sm:$0xff]
    %v2872 = vld [vmem:[%s12 + $0xa8] sm:$0xff]
    %v2873 = vld [vmem:[%s12 + $0xb0] sm:$0xff]
    %v2874 = vld [vmem:[%s12 + $0xb8] sm:$0xff]
    %v2875 = vld [vmem:[%s12 + $0xc0] sm:$0xff]
    %v2876 = vld [vmem:[%s12 + $0xc8] sm:$0xff]
    %v2877 = vld [vmem:[%s12 + $0xd0] sm:$0xff]
    %v2878 = vld [vmem:[%s12 + $0xd8] sm:$0xff]
    %v2879 = vld [vmem:[%s12 + $0xe0] sm:$0xff]
    %v2880 = vld [vmem:[%s12 + $0xe8] sm:$0xff]
    %v2881 = vld [vmem:[%s12 + $0xf0] sm:$0xff]
    %v2882 = vld [vmem:[%s12 + $0xf8] sm:$0xff]
    %v2883 = vld [vmem:[%s12 + $0x100] sm:$0xff]
    %v2884 = vld [vmem:[%s12 + $0x108] sm:$0xff]
    %v2885 = vld [vmem:[%s12 + $0x110] sm:$0xff]
    %v2886 = vld [vmem:[%s12 + $0x118] sm:$0xff]
    %v2887 = vld [vmem:[%s12 + $0x120] sm:$0xff]
    %v2888 = vld [vmem:[%s12 + $0x128] sm:$0xff]
    %v2889 = vld [vmem:[%s12 + $0x130] sm:$0xff]
    %v2890 = vld [vmem:[%s12 + $0x138] sm:$0xff]
    %v2891 = vld [vmem:[%s12 + $0x140] sm:$0xff]
    %v2892 = vld [vmem:[%s12 + $0x148] sm:$0xff]
    %v2893 = vld [vmem:[%s12 + $0x150] sm:$0xff]
    %v2894 = vld [vmem:[%s12 + $0x158] sm:$0xff]
    %v2895 = vld [vmem:[%s12 + $0x160] sm:$0xff]
    %v2896 = vld [vmem:[%s12 + $0x168] sm:$0xff]
    %v2897 = vld [vmem:[%s12 + $0x170] sm:$0xff]
    %v2898 = vld [vmem:[%s12 + $0x178] sm:$0xff]
    %2899 = vmatprep.subr.mxu0 0.0
    %2900 = vmatpush1.msra.mxu0 %v2851
    %2901 = vmatprep.subr.mxu0 0.0
    %2902 = vmatpush1.msra.mxu0 %v2852
    %2903 = vmatprep.subr.mxu0 0.0
    %2904 = vmatpush1.msra.mxu0 %v2853
    %2905 = vmatprep.subr.mxu0 0.0
    %2906 = vmatpush1.msra.mxu0 %v2854
    %2907 = vmatprep.subr.mxu0 0.0
    %2908 = vmatpush1.msra.mxu0 %v2855
    %2909 = vmatprep.subr.mxu0 0.0
    %2910 = vmatpush1.msra.mxu0 %v2856
    %2911 = vmatprep.subr.mxu0 0.0
    %2912 = vmatpush1.msra.mxu0 %v2857
    %2913 = vmatprep.subr.mxu0 0.0
    %2914 = vmatpush1.msra.mxu0 %v2858
    %2915 = vmatprep.subr.mxu0 0.0
    %2916 = vmatpush1.msra.mxu0 %v2859
    %2917 = vmatprep.subr.mxu0 0.0
    %2918 = vmatpush1.msra.mxu0 %v2860
    %2919 = vmatprep.subr.mxu0 0.0
    %2920 = vmatpush1.msra.mxu0 %v2861
    %2921 = vmatprep.subr.mxu0 0.0
    %2922 = vmatpush1.msra.mxu0 %v2862
    %2923 = vmatprep.subr.mxu0 0.0
    %2924 = vmatpush1.msra.mxu0 %v2863
    %2925 = vmatprep.subr.mxu0 0.0
    %2926 = vmatpush1.msra.mxu0 %v2864
    %2927 = vmatprep.subr.mxu0 0.0
    %2928 = vmatpush1.msra.mxu0 %v2865
    %2929 = vmatprep.subr.mxu0 0.0
    %2930 = vmatpush1.msra.mxu0 %v2866
    %2931 = vmatprep.subr.mxu0 0.0
    %2932 = vmatpush1.msra.mxu0 %v2867
    %2933 = vmatprep.subr.mxu0 0.0
    %2934 = vmatpush1.msra.mxu0 %v2868
    %2935 = vmatprep.subr.mxu0 0.0
    %2936 = vmatpush1.msra.mxu0 %v2869
    %2937 = vmatprep.subr.mxu0 0.0
    %2938 = vmatpush1.msra.mxu0 %v2870
    %2939 = vmatprep.subr.mxu0 0.0
    %2940 = vmatpush1.msra.mxu0 %v2871
    %2941 = vmatprep.subr.mxu0 0.0
    %2942 = vmatpush1.msra.mxu0 %v2872
    %2943 = vmatprep.subr.mxu0 0.0
    %2944 = vmatpush1.msra.mxu0 %v2873
    %2945 = vmatprep.subr.mxu0 0.0
    %2946 = vmatpush1.msra.mxu0 %v2874
    %2947 = vmatprep.subr.mxu0 0.0
    %2948 = vmatpush1.msra.mxu0 %v2875
    %2949 = vmatprep.subr.mxu0 0.0
    %2950 = vmatpush1.msra.mxu0 %v2876
    %2951 = vmatprep.subr.mxu0 0.0
    %2952 = vmatpush1.msra.mxu0 %v2877
    %2953 = vmatprep.subr.mxu0 0.0
    %2954 = vmatpush1.msra.mxu0 %v2878
    %2955 = vmatprep.subr.mxu0 0.0
    %2956 = vmatpush1.msra.mxu0 %v2879
    %2957 = vmatprep.subr.mxu0 0.0
    %2958 = vmatpush1.msra.mxu0 %v2880
    %2959 = vmatprep.subr.mxu0 0.0
    %2960 = vmatpush1.msra.mxu0 %v2881
    %2961 = vmatprep.subr.mxu0 0.0
    %2962 = vmatpush1.msra.mxu0 %v2882
    %2963 = vmatprep.mubr.f32.mxu0 %v2824
    %2964 = vmatmul.mubr.f32.gmra.mrb[0].mxu0 %v2836
    %v2965 = vpop.f32.mrb[0].mxu0
    %v2966 = vadd.f32 0.0, %v2965
    %v2967 = vpop.f32.mrb[0].mxu0
    %2968 = vmatprep.mubr.f32.mxu0 %v2829
    %2969 = vmatmul.mubr.f32.gmra.mrb[0].mxu0 %v2837
    %v2970 = vpop.f32.mrb[0].mxu0
    %v2971 = vadd.f32 0.0, %v2970
    %v2972 = vpop.f32.mrb[0].mxu0
    %2973 = vdwg.mxu0
    %2974 = vmatprep.subr.mxu0 0.0
    %2975 = vmatpush1.msra.mxu0 %v2883
    %2976 = vmatprep.subr.mxu0 0.0
    %2977 = vmatpush1.msra.mxu0 %v2884
    %2978 = vmatprep.subr.mxu0 0.0
    %2979 = vmatpush1.msra.mxu0 %v2885
    %2980 = vmatprep.subr.mxu0 0.0
    %2981 = vmatpush1.msra.mxu0 %v2886
    %2982 = vmatprep.subr.mxu0 0.0
    %2983 = vmatpush1.msra.mxu0 %v2887
    %2984 = vmatprep.subr.mxu0 0.0
    %2985 = vmatpush1.msra.mxu0 %v2888
    %2986 = vmatprep.subr.mxu0 0.0
    %2987 = vmatpush1.msra.mxu0 %v2889
    %2988 = vmatprep.subr.mxu0 0.0
    %2989 = vmatpush1.msra.mxu0 %v2890
    %2990 = vmatprep.subr.mxu0 0.0
    %2991 = vmatpush1.msra.mxu0 %v2891
    %2992 = vmatprep.subr.mxu0 0.0
    %2993 = vmatpush1.msra.mxu0 %v2892
    %2994 = vmatprep.subr.mxu0 0.0
    %2995 = vmatpush1.msra.mxu0 %v2893
    %2996 = vmatprep.subr.mxu0 0.0
    %2997 = vmatpush1.msra.mxu0 %v2894
    %2998 = vmatprep.subr.mxu0 0.0
    %2999 = vmatpush1.msra.mxu0 %v2895
    %3000 = vmatprep.subr.mxu0 0.0
    %3001 = vmatpush1.msra.mxu0 %v2896
    %3002 = vmatprep.subr.mxu0 0.0
    %3003 = vmatpush1.msra.mxu0 %v2897
    %3004 = vmatprep.subr.mxu0 0.0
    %3005 = vmatpush1.msra.mxu0 %v2898
    %3006 = vmatprep.subr.mxu0 0.0
    %3007 = vmatpush1.msra.mxu0 0.0
    %3008 = vmatprep.subr.mxu0 0.0
    %3009 = vmatpush1.msra.mxu0 0.0
    %3010 = vmatprep.subr.mxu0 0.0
    %3011 = vmatpush1.msra.mxu0 0.0
    %3012 = vmatprep.subr.mxu0 0.0
    %3013 = vmatpush1.msra.mxu0 0.0
    %3014 = vmatprep.subr.mxu0 0.0
    %3015 = vmatpush1.msra.mxu0 0.0
    %3016 = vmatprep.subr.mxu0 0.0
    %3017 = vmatpush1.msra.mxu0 0.0
    %3018 = vmatprep.subr.mxu0 0.0
    %3019 = vmatpush1.msra.mxu0 0.0
    %3020 = vmatprep.subr.mxu0 0.0
    %3021 = vmatpush1.msra.mxu0 0.0
    %3022 = vmatprep.subr.mxu0 0.0
    %3023 = vmatpush1.msra.mxu0 0.0
    %3024 = vmatprep.subr.mxu0 0.0
    %3025 = vmatpush1.msra.mxu0 0.0
    %3026 = vmatprep.subr.mxu0 0.0
    %3027 = vmatpush1.msra.mxu0 0.0
    %3028 = vmatprep.subr.mxu0 0.0
    %3029 = vmatpush1.msra.mxu0 0.0
    %3030 = vmatprep.subr.mxu0 0.0
    %3031 = vmatpush1.msra.mxu0 0.0
    %3032 = vmatprep.subr.mxu0 0.0
    %3033 = vmatpush1.msra.mxu0 0.0
    %3034 = vmatprep.subr.mxu0 0.0
    %3035 = vmatpush1.msra.mxu0 0.0
    %3036 = vmatprep.subr.mxu0 0.0
    %3037 = vmatpush1.msra.mxu0 0.0
    %3038 = vmatprep.mubr.f32.mxu0 0.0
    %3039 = vmatmul.mubr.f32.gmra.mrb[0].mxu0 %v2849
    %v3040 = vpop.f32.mrb[0].mxu0
    %v3041 = vadd.f32 %v2966, %v3040
    %v3042 = vpop.f32.mrb[0].mxu0
    %3043 = vmatprep.mubr.f32.mxu0 0.0
    %3044 = vmatmul.mubr.f32.gmra.mrb[0].mxu0 %v2850
    %v3045 = vpop.f32.mrb[0].mxu0
    %v3046 = vadd.f32 %v2971, %v3045
    %v3047 = vpop.f32.mrb[0].mxu0
    %3048 = vdwg.mxu0
    %v3049 = vld [vmem:[%s2] sm:$0x3]
    %vm3050 = vcmask 130048
    %v3052 = vsel %vm3050, %v3049, 0
    %3054 = vmatprep.subr.mxu0 0.0
    %3055 = vmatpush1.msra.mxu0 %v3041
    %3056 = vmatprep.subr.mxu0 0.0
    %3057 = vmatpush1.msra.mxu0 %v3046
    %3058 = vmatprep.subr.mxu0 0.0
    %3059 = vmatpush1.msra.mxu0 0.0
    %3060 = vmatprep.subr.mxu0 0.0
    %3061 = vmatpush1.msra.mxu0 0.0
    %3062 = vmatprep.subr.mxu0 0.0
    %3063 = vmatpush1.msra.mxu0 0.0
    %3064 = vmatprep.subr.mxu0 0.0
    %3065 = vmatpush1.msra.mxu0 0.0
    %3066 = vmatprep.subr.mxu0 0.0
    %3067 = vmatpush1.msra.mxu0 0.0
    %3068 = vmatprep.subr.mxu0 0.0
    %3069 = vmatpush1.msra.mxu0 0.0
    %3070 = vmatprep.subr.mxu0 0.0
    %3071 = vmatpush1.msra.mxu0 0.0
    %3072 = vmatprep.subr.mxu0 0.0
    %3073 = vmatpush1.msra.mxu0 0.0
    %3074 = vmatprep.subr.mxu0 0.0
    %3075 = vmatpush1.msra.mxu0 0.0
    %3076 = vmatprep.subr.mxu0 0.0
    %3077 = vmatpush1.msra.mxu0 0.0
    %3078 = vmatprep.subr.mxu0 0.0
    %3079 = vmatpush1.msra.mxu0 0.0
    %3080 = vmatprep.subr.mxu0 0.0
    %3081 = vmatpush1.msra.mxu0 0.0
    %3082 = vmatprep.subr.mxu0 0.0
    %3083 = vmatpush1.msra.mxu0 0.0
    %3084 = vmatprep.subr.mxu0 0.0
    %3085 = vmatpush1.msra.mxu0 0.0
    %3086 = vmatprep.subr.mxu0 0.0
    %3087 = vmatpush1.msra.mxu0 0.0
    %3088 = vmatprep.subr.mxu0 0.0
    %3089 = vmatpush1.msra.mxu0 0.0
    %3090 = vmatprep.subr.mxu0 0.0
    %3091 = vmatpush1.msra.mxu0 0.0
    %3092 = vmatprep.subr.mxu0 0.0
    %3093 = vmatpush1.msra.mxu0 0.0
    %3094 = vmatprep.subr.mxu0 0.0
    %3095 = vmatpush1.msra.mxu0 0.0
    %3096 = vmatprep.subr.mxu0 0.0
    %3097 = vmatpush1.msra.mxu0 0.0
    %3098 = vmatprep.subr.mxu0 0.0
    %3099 = vmatpush1.msra.mxu0 0.0
    %3100 = vmatprep.subr.mxu0 0.0
    %3101 = vmatpush1.msra.mxu0 0.0
    %3102 = vmatprep.subr.mxu0 0.0
    %3103 = vmatpush1.msra.mxu0 0.0
    %3104 = vmatprep.subr.mxu0 0.0
    %3105 = vmatpush1.msra.mxu0 0.0
    %3106 = vmatprep.subr.mxu0 0.0
    %3107 = vmatpush1.msra.mxu0 0.0
    %3108 = vmatprep.subr.mxu0 0.0
    %3109 = vmatpush1.msra.mxu0 0.0
    %3110 = vmatprep.subr.mxu0 0.0
    %3111 = vmatpush1.msra.mxu0 0.0
    %3112 = vmatprep.subr.mxu0 0.0
    %3113 = vmatpush1.msra.mxu0 0.0
    %3114 = vmatprep.subr.mxu0 0.0
    %3115 = vmatpush1.msra.mxu0 0.0
    %3116 = vmatprep.subr.mxu0 0.0
    %3117 = vmatpush1.msra.mxu0 0.0
    %3118 = vmatprep.mubr.f32.mxu0 0.0
    %3119 = vmatmul.mubr.f32.gmra.mrb[0].mxu0 %v3052
    %v3120 = vpop.f32.mrb[0].mxu0
    %v3121 = vadd.f32 0.0, %v3120
    %v3122 = vpop.f32.mrb[0].mxu0
    %3123 = vdwg.mxu0
    %vm3124 = vcmask 74752
    %3125 = vst.msk [vmem:[#allocation2] sm:$0x3] %vm3124, %v3121
    // Predicated region
    $region54: #{tpu_custom_call.1} parent=1 // pred_check
      _
    $region55: #{tpu_custom_call.1} parent=1 // pred_check_branch
      %3127 = sbr.rel (0) target = $region57
    $region56: #{tpu_custom_call.1} parent=1 // pred_region
      %s3129 = ssub.s32 32, 32
      %3130 = vsyncadd [#allocation3], %s3129
      %s3132 = sshll.u32 [#allocation2], 4
      %s3133 = int_to_ptr.vmem [resolvable:$true] %s3132
      %3135 = dma.vmem_to_hbm [thread:$0]  %s3133, 32, %s13, [#allocation3]
    $region57: #{tpu_custom_call.1} parent=1 // pred_fallthru
      _
    // Predicated region
    $region58: #{tpu_custom_call.1} parent=1 // pred_check
      _
    $region59: #{tpu_custom_call.1} parent=1 // pred_check_branch
      %3137 = sbr.rel (0) target = $region61
    $region60: #{tpu_custom_call.1} parent=1 // pred_region
      %3138 = dma.done [#allocation3], 32
    $region61: #{tpu_custom_call.1} parent=1 // pred_fallthru
      _
    %3139 = vsyncpa [#allocation3], 1

</llo_original>
